<compile_context>
chip_gen: v7x
topology: tpu7x:2x2x1
jax: 0.10.0
libtpu: 0.0.40
codegen_flags: <defaults>
</compile_context>

<pallas_src>
import math
import functools

import jax
import jax.numpy as jnp
from jax import lax
from jax.experimental import pallas as pl
from jax.experimental.pallas import tpu as pltpu


_VMEM_LIMIT = 32 * 1024 * 1024  # fits the default scoped budget on v5e/v6e/v7x


# -----------------------------------------------------------------------------
# Positional encoding (matches the PyTorch helper: first half sin, second cos).
# -----------------------------------------------------------------------------
def positional_encoding(dm, max_len):
    position = jnp.arange(max_len, dtype=jnp.float32)[None, :]          # (1, max_len)
    div_term = jnp.exp(jnp.arange(0, dm, 2, dtype=jnp.float32)
                       * (-math.log(10000.0) / dm))                     # (dm//2,)
    ang = jnp.einsum('bl,d->bld', position, div_term)                   # (1, max_len, dm//2)
    return jnp.concatenate([jnp.sin(ang), jnp.cos(ang)], axis=-1)       # (1, max_len, dm)


def _rep_spec(shape):
    """BlockSpec for a weight replicated across all grid axes."""
    n = len(shape)
    return pl.BlockSpec(shape, lambda *_, n=n: (0,) * n)


def _seq_tile(L):
    """Sequence tile: 128-row blocks when L allows it, else the full sequence."""
    return 128 if L % 128 == 0 else L


# -----------------------------------------------------------------------------
# Kernel 1: token embedding (Linear) + positional encoding add.
# -----------------------------------------------------------------------------
def _embed_kernel(x_ref, w_ref, b_ref, pe_ref, o_ref):
    y = jnp.dot(x_ref[0], w_ref[...], preferred_element_type=jnp.float32)
    o_ref[0] = y + b_ref[...] + pe_ref[...]


def embed(x, w_t, b, pe_slice):
    B, L, V = x.shape
    D = w_t.shape[1]
    tl = _seq_tile(L)
    return pl.pallas_call(
        _embed_kernel,
        out_shape=jax.ShapeDtypeStruct((B, L, D), jnp.float32),
        grid=(B, L // tl),
        in_specs=[
            pl.BlockSpec((1, tl, V), lambda b, l: (b, l, 0)),
            _rep_spec((V, D)),
            _rep_spec((1, D)),
            pl.BlockSpec((tl, D), lambda b, l: (l, 0)),
        ],
        out_specs=pl.BlockSpec((1, tl, D), lambda b, l: (b, l, 0)),
        compiler_params=pltpu.CompilerParams(
            dimension_semantics=("parallel", "parallel"),
            vmem_limit_bytes=_VMEM_LIMIT),
    )(x, w_t, b, pe_slice)


# -----------------------------------------------------------------------------
# Kernel 2: one GPT block (causal MHA + add&LN + FF(ReLU) + add&LN), per batch.
# -----------------------------------------------------------------------------
def _block_kernel(x_ref, wq_ref, bq_ref, wk_ref, bk_ref, wv_ref, bv_ref,
                  wo_ref, bo_ref, g1_ref, be1_ref, w1_ref, b1_ref,
                  w2_ref, b2_ref, g2_ref, be2_ref, o_ref):
    x = x_ref[0]                                                        # (L, D)
    L, D = x.shape
    H = wo_ref.shape[0] // D
    kd = D // H

    # Full-width projections: MXU N-dim = D (lane dense).  1/sqrt(kd) is
    # pre-folded into wq/bq at repack time.
    qf = jnp.dot(x, wq_ref[...], preferred_element_type=jnp.float32) + bq_ref[...]
    kf = jnp.dot(x, wk_ref[...], preferred_element_type=jnp.float32) + bk_ref[...]
    v = jnp.dot(x, wv_ref[...], preferred_element_type=jnp.float32) + bv_ref[...]

    # Causal mask, hoisted out of the head loop; applied with a single where.
    row = lax.broadcasted_iota(jnp.int32, (L, L), 0)
    col = lax.broadcasted_iota(jnp.int32, (L, L), 1)
    causal = col <= row
    dn = (((1,), (1,)), ((), ()))                                       # q @ k^T

    heads = []
    for h in range(H):                                                  # static unroll
        qh = qf[:, h * kd:(h + 1) * kd]
        kh = kf[:, h * kd:(h + 1) * kd]
        s = lax.dot_general(qh, kh, dn, preferred_element_type=jnp.float32)
        s = jnp.where(causal, s, -1e30)
        s = s - jnp.max(s, axis=-1, keepdims=True)
        p = jnp.exp(s)
        p = p * pl.reciprocal(jnp.sum(p, axis=-1, keepdims=True), approx=True)
        heads.append(jnp.dot(p, v, preferred_element_type=jnp.float32))  # (L, D)

    # concat + W_o: one large-K contraction (== torch reshape(B,L,H*V) @ W_o^T)
    vals = jnp.concatenate(heads, axis=-1)                              # (L, H*D)
    attn_out = jnp.dot(vals, wo_ref[...],
                       preferred_element_type=jnp.float32) + bo_ref[...]

    # residual + LayerNorm 1 (PyTorch: biased variance, eps=1e-5)
    x1 = x + attn_out
    mu1 = jnp.mean(x1, axis=-1, keepdims=True)
    var1 = jnp.mean((x1 - mu1) * (x1 - mu1), axis=-1, keepdims=True)
    xn = (x1 - mu1) * lax.rsqrt(var1 + 1e-5) * g1_ref[...] + be1_ref[...]

    # feed-forward
    hdn = jnp.dot(xn, w1_ref[...], preferred_element_type=jnp.float32) + b1_ref[...]
    hdn = jnp.maximum(hdn, 0.0)
    ff = jnp.dot(hdn, w2_ref[...], preferred_element_type=jnp.float32) + b2_ref[...]

    # residual + LayerNorm 2
    x2 = xn + ff
    mu2 = jnp.mean(x2, axis=-1, keepdims=True)
    var2 = jnp.mean((x2 - mu2) * (x2 - mu2), axis=-1, keepdims=True)
    o_ref[0] = (x2 - mu2) * lax.rsqrt(var2 + 1e-5) * g2_ref[...] + be2_ref[...]


_BLOCK_PARAM_ORDER = ('wq', 'bq', 'wk', 'bk', 'wv', 'bv', 'wo', 'bo',
                      'g1', 'be1', 'w1', 'b1', 'w2', 'b2', 'g2', 'be2')


def gpt_block(x, p):
    B, L, D = x.shape
    args = [x]
    specs = [pl.BlockSpec((1, L, D), lambda b: (b, 0, 0))]
    for name in _BLOCK_PARAM_ORDER:
        a = p[name]
        args.append(a)
        specs.append(_rep_spec(a.shape))
    return pl.pallas_call(
        _block_kernel,
        out_shape=jax.ShapeDtypeStruct((B, L, D), jnp.float32),
        grid=(B,),
        in_specs=specs,
        out_specs=pl.BlockSpec((1, L, D), lambda b: (b, 0, 0)),
        compiler_params=pltpu.CompilerParams(
            dimension_semantics=("parallel",),
            vmem_limit_bytes=_VMEM_LIMIT),
    )(*args)


# -----------------------------------------------------------------------------
# Kernel 3: output Linear + softmax over tokens.
# -----------------------------------------------------------------------------
def _head_kernel(x_ref, w_ref, b_ref, o_ref):
    y = jnp.dot(x_ref[0], w_ref[...], preferred_element_type=jnp.float32) + b_ref[...]
    y = y - jnp.max(y, axis=-1, keepdims=True)
    e = jnp.exp(y)
    o_ref[0] = e * pl.reciprocal(jnp.sum(e, axis=-1, keepdims=True), approx=True)


def head(x, w_t, b):
    B, L, D = x.shape
    V = w_t.shape[1]
    tl = _seq_tile(L)
    return pl.pallas_call(
        _head_kernel,
        out_shape=jax.ShapeDtypeStruct((B, L, V), jnp.float32),
        grid=(B, L // tl),
        in_specs=[
            pl.BlockSpec((1, tl, D), lambda b, l: (b, l, 0)),
            _rep_spec((D, V)),
            _rep_spec((1, V)),
        ],
        out_specs=pl.BlockSpec((1, tl, V), lambda b, l: (b, l, 0)),
        compiler_params=pltpu.CompilerParams(
            dimension_semantics=("parallel", "parallel"),
            vmem_limit_bytes=_VMEM_LIMIT),
    )(x, w_t, b)


# -----------------------------------------------------------------------------
# Parameter init (PyTorch nn.Linear-style uniform, deterministic) + repack.
# -----------------------------------------------------------------------------
def init_params(key, n_tokens, dmodel, n_layers, num_heads=8):
    D, H = dmodel, num_heads
    kd = D // H
    scale = 1.0 / math.sqrt(kd)

    def lin(k, out_dim, in_dim):
        kw, kb = jax.random.split(k)
        bound = 1.0 / math.sqrt(in_dim)
        w = jax.random.uniform(kw, (out_dim, in_dim), jnp.float32, -bound, bound)
        b = jax.random.uniform(kb, (out_dim,), jnp.float32, -bound, bound)
        return w, b

    keys = jax.random.split(key, n_layers + 2)
    emb_w, emb_b = lin(keys[0], D, n_tokens)
    out_w, out_b = lin(keys[1], n_tokens, D)

    raw_layers, kern_layers = [], []
    for i in range(n_layers):
        lk = jax.random.split(keys[2 + i], 6)
        wq, bq = lin(lk[0], kd * H, D)
        wk, bk = lin(lk[1], kd * H, D)
        wv, bv = lin(lk[2], D, D)
        wo, bo = lin(lk[3], D, D * H)
        w1, b1 = lin(lk[4], 4 * D, D)
        w2, b2 = lin(lk[5], D, 4 * D)
        g1, be1 = jnp.ones((D,), jnp.float32), jnp.zeros((D,), jnp.float32)
        g2, be2 = jnp.ones((D,), jnp.float32), jnp.zeros((D,), jnp.float32)

        raw_layers.append(dict(wq=wq, bq=bq, wk=wk, bk=bk, wv=wv, bv=bv,
                               wo=wo, bo=bo, w1=w1, b1=b1, w2=w2, b2=b2,
                               g1=g1, be1=be1, g2=g2, be2=be2))
        # Repack:
        #  * wq/wk kept lane-dense (D, H*kd) with columns permuted so head h
        #    owns the contiguous slice [h*kd:(h+1)*kd] (torch reshapes the
        #    projection as (..., kd, H): flat column j -> key j//H, head j%H).
        #  * 1/sqrt(kd) folded into wq/bq (one-time, zero runtime cost).
        #  * wo as (H*D, D): matches concat-by-head order of the head outputs.
        kern_layers.append(dict(
            wq=jnp.transpose(wq.reshape(kd, H, D), (2, 1, 0)).reshape(D, H * kd) * scale,
            bq=bq.reshape(kd, H).T.reshape(1, H * kd) * scale,
            wk=jnp.transpose(wk.reshape(kd, H, D), (2, 1, 0)).reshape(D, H * kd),
            bk=bk.reshape(kd, H).T.reshape(1, H * kd),
            wv=wv.T, bv=bv[None],
            wo=wo.T, bo=bo[None],
            g1=g1[None], be1=be1[None],
            w1=w1.T, b1=b1[None],
            w2=w2.T, b2=b2[None],
            g2=g2[None], be2=be2[None]))

    raw = dict(emb_w=emb_w, emb_b=emb_b, out_w=out_w, out_b=out_b, layers=raw_layers)
    kern = dict(emb_w=emb_w.T, emb_b=emb_b[None],
                out_w=out_w.T, out_b=out_b[None], layers=kern_layers)
    return raw, kern


# -----------------------------------------------------------------------------
# Full forward (Pallas) and pure-JAX reference (mirrors the PyTorch code).
# -----------------------------------------------------------------------------
@jax.jit
def gpt_forward(x, kern, pe_slice):
    h = embed(x, kern['emb_w'], kern['emb_b'], pe_slice)
    for lp in kern['layers']:
        h = gpt_block(h, lp)
    return head(h, kern['out_w'], kern['out_b'])


def _ref_ln(x, g, b):
    mu = x.mean(-1, keepdims=True)
    var = ((x - mu) ** 2).mean(-1, keepdims=True)
    return (x - mu) / jnp.sqrt(var + 1e-5) * g + b


def ref_forward(x, raw, pe, num_heads=8):
    B, L, _ = x.shape
    h = x @ raw['emb_w'].T + raw['emb_b'] + pe[:, :L]
    D = h.shape[-1]
    kd = D // num_heads
    mask = jnp.where(jnp.triu(jnp.ones((L, L), bool), k=1), -jnp.inf, 0.0)
    for lr in raw['layers']:
        q = (h @ lr['wq'].T + lr['bq']).reshape(B, L, kd, num_heads)
        k = (h @ lr['wk'].T + lr['bk']).reshape(B, L, kd, num_heads)
        v = h @ lr['wv'].T + lr['bv']
        scores = jnp.einsum('blkh,bmkh->bhlm', q, k) + mask
        attn = jax.nn.softmax(scores / math.sqrt(kd), axis=-1)
        vals = jnp.einsum('bhlm,bmv->blhv', attn, v).reshape(B, L, -1)
        a = vals @ lr['wo'].T + lr['bo']
        h = _ref_ln(h + a, lr['g1'], lr['be1'])
        ff = jnp.maximum(h @ lr['w1'].T + lr['b1'], 0.0) @ lr['w2'].T + lr['b2']
        h = _ref_ln(h + ff, lr['g2'], lr['be2'])
    logits = h @ raw['out_w'].T + raw['out_b']
    return jax.nn.softmax(logits, axis=-1)


if __name__ == "__main__":
    n_tokens, dmodel, n_layers, max_len = 16, 64, 2, 32
    B, L = 2, 8

    key = jax.random.PRNGKey(0)
    kx, kp = jax.random.split(key)
    x = jax.random.normal(kx, (B, L, n_tokens), jnp.float32)

    raw, kern = init_params(kp, n_tokens, dmodel, n_layers)
    pe = positional_encoding(dmodel, max_len)                           # (1, max_len, D)

    out = gpt_forward(x, kern, pe[0, :L])
    out = jax.block_until_ready(out)

    ref = ref_forward(x, raw, pe)
    assert out.shape == (B, L, n_tokens)
    assert jnp.allclose(out, ref, atol=3e-3, rtol=3e-3), \
        float(jnp.max(jnp.abs(out - ref)))

    print("KERNEL_OK")
</pallas_src>

<mosaic_0001>
module attributes {stable_mosaic.version = 11 : i64} {
  func.func @_embed_kernel(%arg0: i32, %arg1: i32, %arg2: memref<1x8x16xf32, #tpu.memory_space<vmem>>, %arg3: memref<16x64xf32, #tpu.memory_space<vmem>>, %arg4: memref<1x64xf32, #tpu.memory_space<vmem>>, %arg5: memref<8x64xf32, #tpu.memory_space<vmem>>, %arg6: memref<1x8x64xf32, #tpu.memory_space<vmem>>) attributes {dimension_semantics = [#tpu.dimension_semantics<parallel>, #tpu.dimension_semantics<parallel>], iteration_bounds = array<i64: 2, 1>, scalar_prefetch = 0 : i64, scratch_operands = 0 : i64, tpu.core_type = #tpu.core_type<tc>, window_params = [{transform_indices = @transform_0, window_bounds = array<i64: 1, 8, 16>}, {pipeline_mode = #tpu.pipeline_mode<synchronous>, transform_indices = @transform_1, window_bounds = array<i64: 16, 64>}, {pipeline_mode = #tpu.pipeline_mode<synchronous>, transform_indices = @transform_2, window_bounds = array<i64: 1, 64>}, {transform_indices = @transform_3, window_bounds = array<i64: 8, 64>}, {transform_indices = @transform_4, window_bounds = array<i64: 1, 8, 64>}]} {
    %c0 = arith.constant 0 : index
    %c0_0 = arith.constant 0 : index
    %c0_1 = arith.constant 0 : index
    %0 = vector.load %arg2[%c0, %c0_0, %c0_1] : memref<1x8x16xf32, #tpu.memory_space<vmem>>, vector<1x8x16xf32>
    %1 = vector.shape_cast %0 : vector<1x8x16xf32> to vector<8x16xf32>
    %c0_2 = arith.constant 0 : index
    %c0_3 = arith.constant 0 : index
    %2 = vector.load %arg3[%c0_2, %c0_3] : memref<16x64xf32, #tpu.memory_space<vmem>>, vector<16x64xf32>
    %cst = arith.constant dense<0.000000e+00> : vector<8x64xf32>
    %3 = tpu.matmul %1, %2, %cst {dimension_numbers = #tpu.dot_dimension_numbers<[1], [0], [0], [1], [0, 0, 1, 1], [], []>} : vector<8x16xf32>, vector<16x64xf32>, vector<8x64xf32> -> vector<8x64xf32>
    %c0_4 = arith.constant 0 : index
    %c0_5 = arith.constant 0 : index
    %4 = vector.load %arg4[%c0_4, %c0_5] : memref<1x64xf32, #tpu.memory_space<vmem>>, vector<1x64xf32>
    %5 = vector.broadcast %4 : vector<1x64xf32> to vector<8x64xf32>
    %6 = arith.addf %3, %5 : vector<8x64xf32>
    %c0_6 = arith.constant 0 : index
    %c0_7 = arith.constant 0 : index
    %7 = vector.load %arg5[%c0_6, %c0_7] : memref<8x64xf32, #tpu.memory_space<vmem>>, vector<8x64xf32>
    %8 = arith.addf %6, %7 : vector<8x64xf32>
    %c0_8 = arith.constant 0 : index
    %c0_9 = arith.constant 0 : index
    %c0_10 = arith.constant 0 : index
    %9 = vector.load %arg6[%c0_8, %c0_9, %c0_10] : memref<1x8x64xf32, #tpu.memory_space<vmem>>, vector<1x8x64xf32>
    %10 = vector.shape_cast %9 : vector<1x8x64xf32> to vector<8x64xf32>
    %11 = vector.shape_cast %8 : vector<8x64xf32> to vector<1x8x64xf32>
    tpu.vector_store %arg6[%c0_8, %c0_9, %c0_10], %11 {strides = array<i32>} : memref<1x8x64xf32, #tpu.memory_space<vmem>>, vector<1x8x64xf32>,
    return
  }
  func.func @transform_0(%arg0: i32, %arg1: i32) -> (i32, i32, i32) {
    %c0_i32 = arith.constant 0 : i32
    %c0_i32_0 = arith.constant 0 : i32
    return %arg0, %arg1, %c0_i32 : i32, i32, i32
  }
  func.func @transform_1(%arg0: i32, %arg1: i32) -> (i32, i32) {
    %c0_i32 = arith.constant 0 : i32
    %c0_i32_0 = arith.constant 0 : i32
    %c0_i32_1 = arith.constant 0 : i32
    return %c0_i32, %c0_i32_0 : i32, i32
  }
  func.func @transform_2(%arg0: i32, %arg1: i32) -> (i32, i32) {
    %c0_i32 = arith.constant 0 : i32
    %c0_i32_0 = arith.constant 0 : i32
    %c0_i32_1 = arith.constant 0 : i32
    return %c0_i32, %c0_i32_0 : i32, i32
  }
  func.func @transform_3(%arg0: i32, %arg1: i32) -> (i32, i32) {
    %c0_i32 = arith.constant 0 : i32
    %c0_i32_0 = arith.constant 0 : i32
    return %arg1, %c0_i32 : i32, i32
  }
  func.func @transform_4(%arg0: i32, %arg1: i32) -> (i32, i32, i32) {
    %c0_i32 = arith.constant 0 : i32
    %c0_i32_0 = arith.constant 0 : i32
    return %arg0, %arg1, %c0_i32 : i32, i32, i32
  }
}

module attributes {stable_mosaic.version = 11 : i64} {
  func.func @_block_kernel(%arg0: i32, %arg1: memref<1x8x64xf32, #tpu.memory_space<vmem>>, %arg2: memref<64x64xf32, #tpu.memory_space<vmem>>, %arg3: memref<1x64xf32, #tpu.memory_space<vmem>>, %arg4: memref<64x64xf32, #tpu.memory_space<vmem>>, %arg5: memref<1x64xf32, #tpu.memory_space<vmem>>, %arg6: memref<64x64xf32, #tpu.memory_space<vmem>>, %arg7: memref<1x64xf32, #tpu.memory_space<vmem>>, %arg8: memref<512x64xf32, #tpu.memory_space<vmem>>, %arg9: memref<1x64xf32, #tpu.memory_space<vmem>>, %arg10: memref<1x64xf32, #tpu.memory_space<vmem>>, %arg11: memref<1x64xf32, #tpu.memory_space<vmem>>, %arg12: memref<64x256xf32, #tpu.memory_space<vmem>>, %arg13: memref<1x256xf32, #tpu.memory_space<vmem>>, %arg14: memref<256x64xf32, #tpu.memory_space<vmem>>, %arg15: memref<1x64xf32, #tpu.memory_space<vmem>>, %arg16: memref<1x64xf32, #tpu.memory_space<vmem>>, %arg17: memref<1x64xf32, #tpu.memory_space<vmem>>, %arg18: memref<1x8x64xf32, #tpu.memory_space<vmem>>) attributes {dimension_semantics = [#tpu.dimension_semantics<parallel>], iteration_bounds = array<i64: 2>, scalar_prefetch = 0 : i64, scratch_operands = 0 : i64, tpu.core_type = #tpu.core_type<tc>, window_params = [{transform_indices = @transform_0, window_bounds = array<i64: 1, 8, 64>}, {pipeline_mode = #tpu.pipeline_mode<synchronous>, transform_indices = @transform_1, window_bounds = array<i64: 64, 64>}, {pipeline_mode = #tpu.pipeline_mode<synchronous>, transform_indices = @transform_2, window_bounds = array<i64: 1, 64>}, {pipeline_mode = #tpu.pipeline_mode<synchronous>, transform_indices = @transform_3, window_bounds = array<i64: 64, 64>}, {pipeline_mode = #tpu.pipeline_mode<synchronous>, transform_indices = @transform_4, window_bounds = array<i64: 1, 64>}, {pipeline_mode = #tpu.pipeline_mode<synchronous>, transform_indices = @transform_5, window_bounds = array<i64: 64, 64>}, {pipeline_mode = #tpu.pipeline_mode<synchronous>, transform_indices = @transform_6, window_bounds = array<i64: 1, 64>}, {pipeline_mode = #tpu.pipeline_mode<synchronous>, transform_indices = @transform_7, window_bounds = array<i64: 512, 64>}, {pipeline_mode = #tpu.pipeline_mode<synchronous>, transform_indices = @transform_8, window_bounds = array<i64: 1, 64>}, {pipeline_mode = #tpu.pipeline_mode<synchronous>, transform_indices = @transform_9, window_bounds = array<i64: 1, 64>}, {pipeline_mode = #tpu.pipeline_mode<synchronous>, transform_indices = @transform_10, window_bounds = array<i64: 1, 64>}, {pipeline_mode = #tpu.pipeline_mode<synchronous>, transform_indices = @transform_11, window_bounds = array<i64: 64, 256>}, {pipeline_mode = #tpu.pipeline_mode<synchronous>, transform_indices = @transform_12, window_bounds = array<i64: 1, 256>}, {pipeline_mode = #tpu.pipeline_mode<synchronous>, transform_indices = @transform_13, window_bounds = array<i64: 256, 64>}, {pipeline_mode = #tpu.pipeline_mode<synchronous>, transform_indices = @transform_14, window_bounds = array<i64: 1, 64>}, {pipeline_mode = #tpu.pipeline_mode<synchronous>, transform_indices = @transform_15, window_bounds = array<i64: 1, 64>}, {pipeline_mode = #tpu.pipeline_mode<synchronous>, transform_indices = @transform_16, window_bounds = array<i64: 1, 64>}, {transform_indices = @transform_17, window_bounds = array<i64: 1, 8, 64>}]} {
    %c0 = arith.constant 0 : index
    %c0_0 = arith.constant 0 : index
    %c0_1 = arith.constant 0 : index
    %0 = vector.load %arg1[%c0, %c0_0, %c0_1] : memref<1x8x64xf32, #tpu.memory_space<vmem>>, vector<1x8x64xf32>
    %1 = vector.shape_cast %0 : vector<1x8x64xf32> to vector<8x64xf32>
    %c0_2 = arith.constant 0 : index
    %c0_3 = arith.constant 0 : index
    %2 = vector.load %arg2[%c0_2, %c0_3] : memref<64x64xf32, #tpu.memory_space<vmem>>, vector<64x64xf32>
    %cst = arith.constant dense<0.000000e+00> : vector<8x64xf32>
    %3 = tpu.matmul %1, %2, %cst {dimension_numbers = #tpu.dot_dimension_numbers<[1], [0], [0], [1], [0, 0, 1, 1], [], []>} : vector<8x64xf32>, vector<64x64xf32>, vector<8x64xf32> -> vector<8x64xf32>
    %c0_4 = arith.constant 0 : index
    %c0_5 = arith.constant 0 : index
    %4 = vector.load %arg3[%c0_4, %c0_5] : memref<1x64xf32, #tpu.memory_space<vmem>>, vector<1x64xf32>
    %5 = vector.broadcast %4 : vector<1x64xf32> to vector<8x64xf32>
    %6 = arith.addf %3, %5 : vector<8x64xf32>
    %c0_6 = arith.constant 0 : index
    %c0_7 = arith.constant 0 : index
    %7 = vector.load %arg4[%c0_6, %c0_7] : memref<64x64xf32, #tpu.memory_space<vmem>>, vector<64x64xf32>
    %cst_8 = arith.constant dense<0.000000e+00> : vector<8x64xf32>
    %8 = tpu.matmul %1, %7, %cst_8 {dimension_numbers = #tpu.dot_dimension_numbers<[1], [0], [0], [1], [0, 0, 1, 1], [], []>} : vector<8x64xf32>, vector<64x64xf32>, vector<8x64xf32> -> vector<8x64xf32>
    %c0_9 = arith.constant 0 : index
    %c0_10 = arith.constant 0 : index
    %9 = vector.load %arg5[%c0_9, %c0_10] : memref<1x64xf32, #tpu.memory_space<vmem>>, vector<1x64xf32>
    %10 = vector.broadcast %9 : vector<1x64xf32> to vector<8x64xf32>
    %11 = arith.addf %8, %10 : vector<8x64xf32>
    %c0_11 = arith.constant 0 : index
    %c0_12 = arith.constant 0 : index
    %12 = vector.load %arg6[%c0_11, %c0_12] : memref<64x64xf32, #tpu.memory_space<vmem>>, vector<64x64xf32>
    %cst_13 = arith.constant dense<0.000000e+00> : vector<8x64xf32>
    %13 = tpu.matmul %1, %12, %cst_13 {dimension_numbers = #tpu.dot_dimension_numbers<[1], [0], [0], [1], [0, 0, 1, 1], [], []>} : vector<8x64xf32>, vector<64x64xf32>, vector<8x64xf32> -> vector<8x64xf32>
    %c0_14 = arith.constant 0 : index
    %c0_15 = arith.constant 0 : index
    %14 = vector.load %arg7[%c0_14, %c0_15] : memref<1x64xf32, #tpu.memory_space<vmem>>, vector<1x64xf32>
    %15 = vector.broadcast %14 : vector<1x64xf32> to vector<8x64xf32>
    %16 = arith.addf %13, %15 : vector<8x64xf32>
    %17 = tpu.iota {dimensions = array<i32: 0>} : vector<8x8xi32>
    %18 = tpu.iota {dimensions = array<i32: 1>} : vector<8x8xi32>
    %19 = arith.cmpi sle, %18, %17 : vector<8x8xi32>
    %20 = vector.extract_strided_slice %6 {offsets = [0, 0], sizes = [8, 8], strides = [1, 1]} : vector<8x64xf32> to vector<8x8xf32>
    %21 = vector.extract_strided_slice %11 {offsets = [0, 0], sizes = [8, 8], strides = [1, 1]} : vector<8x64xf32> to vector<8x8xf32>
    %cst_16 = arith.constant dense<0.000000e+00> : vector<8x8xf32>
    %22 = tpu.matmul %20, %21, %cst_16 {dimension_numbers = #tpu.dot_dimension_numbers<[1], [1], [0], [0], [0, 0, 1, 0], [], []>} : vector<8x8xf32>, vector<8x8xf32>, vector<8x8xf32> -> vector<8x8xf32>
    %cst_17 = arith.constant -1.000000e+30 : f32
    %23 = vector.broadcast %cst_17 : f32 to vector<8x8xf32>
    %24 = arith.select %19, %22, %23 : vector<8x8xi1>, vector<8x8xf32>
    %cst_18 = arith.constant dense<0xFF800000> : vector<8xf32>
    %25 = vector.multi_reduction <maximumf>, %24, %cst_18 [1] : vector<8x8xf32> to vector<8xf32>
    %26 = vector.shape_cast %25 : vector<8xf32> to vector<8x1xf32>
    %27 = vector.broadcast %26 : vector<8x1xf32> to vector<8x8xf32>
    %28 = arith.subf %24, %27 : vector<8x8xf32>
    %29 = math.exp %28 : vector<8x8xf32>
    %cst_19 = arith.constant dense<0.000000e+00> : vector<8xf32>
    %30 = vector.multi_reduction <add>, %29, %cst_19 [1] : vector<8x8xf32> to vector<8xf32>
    %31 = vector.shape_cast %30 : vector<8xf32> to vector<8x1xf32>
    %32 = tpu.reciprocal %31 {approx = true} : vector<8x1xf32> -> vector<8x1xf32>
    %33 = vector.broadcast %32 : vector<8x1xf32> to vector<8x8xf32>
    %34 = arith.mulf %29, %33 : vector<8x8xf32>
    %cst_20 = arith.constant dense<0.000000e+00> : vector<8x64xf32>
    %35 = tpu.matmul %34, %16, %cst_20 {dimension_numbers = #tpu.dot_dimension_numbers<[1], [0], [0], [1], [0, 0, 1, 1], [], []>} : vector<8x8xf32>, vector<8x64xf32>, vector<8x64xf32> -> vector<8x64xf32>
    %36 = vector.extract_strided_slice %6 {offsets = [0, 8], sizes = [8, 8], strides = [1, 1]} : vector<8x64xf32> to vector<8x8xf32>
    %37 = vector.extract_strided_slice %11 {offsets = [0, 8], sizes = [8, 8], strides = [1, 1]} : vector<8x64xf32> to vector<8x8xf32>
    %cst_21 = arith.constant dense<0.000000e+00> : vector<8x8xf32>
    %38 = tpu.matmul %36, %37, %cst_21 {dimension_numbers = #tpu.dot_dimension_numbers<[1], [1], [0], [0], [0, 0, 1, 0], [], []>} : vector<8x8xf32>, vector<8x8xf32>, vector<8x8xf32> -> vector<8x8xf32>
    %cst_22 = arith.constant -1.000000e+30 : f32
    %39 = vector.broadcast %cst_22 : f32 to vector<8x8xf32>
    %40 = arith.select %19, %38, %39 : vector<8x8xi1>, vector<8x8xf32>
    %cst_23 = arith.constant dense<0xFF800000> : vector<8xf32>
    %41 = vector.multi_reduction <maximumf>, %40, %cst_23 [1] : vector<8x8xf32> to vector<8xf32>
    %42 = vector.shape_cast %41 : vector<8xf32> to vector<8x1xf32>
    %43 = vector.broadcast %42 : vector<8x1xf32> to vector<8x8xf32>
    %44 = arith.subf %40, %43 : vector<8x8xf32>
    %45 = math.exp %44 : vector<8x8xf32>
    %cst_24 = arith.constant dense<0.000000e+00> : vector<8xf32>
    %46 = vector.multi_reduction <add>, %45, %cst_24 [1] : vector<8x8xf32> to vector<8xf32>
    %47 = vector.shape_cast %46 : vector<8xf32> to vector<8x1xf32>
    %48 = tpu.reciprocal %47 {approx = true} : vector<8x1xf32> -> vector<8x1xf32>
    %49 = vector.broadcast %48 : vector<8x1xf32> to vector<8x8xf32>
    %50 = arith.mulf %45, %49 : vector<8x8xf32>
    %cst_25 = arith.constant dense<0.000000e+00> : vector<8x64xf32>
    %51 = tpu.matmul %50, %16, %cst_25 {dimension_numbers = #tpu.dot_dimension_numbers<[1], [0], [0], [1], [0, 0, 1, 1], [], []>} : vector<8x8xf32>, vector<8x64xf32>, vector<8x64xf32> -> vector<8x64xf32>
    %52 = vector.extract_strided_slice %6 {offsets = [0, 16], sizes = [8, 8], strides = [1, 1]} : vector<8x64xf32> to vector<8x8xf32>
    %53 = vector.extract_strided_slice %11 {offsets = [0, 16], sizes = [8, 8], strides = [1, 1]} : vector<8x64xf32> to vector<8x8xf32>
    %cst_26 = arith.constant dense<0.000000e+00> : vector<8x8xf32>
    %54 = tpu.matmul %52, %53, %cst_26 {dimension_numbers = #tpu.dot_dimension_numbers<[1], [1], [0], [0], [0, 0, 1, 0], [], []>} : vector<8x8xf32>, vector<8x8xf32>, vector<8x8xf32> -> vector<8x8xf32>
    %cst_27 = arith.constant -1.000000e+30 : f32
    %55 = vector.broadcast %cst_27 : f32 to vector<8x8xf32>
    %56 = arith.select %19, %54, %55 : vector<8x8xi1>, vector<8x8xf32>
    %cst_28 = arith.constant dense<0xFF800000> : vector<8xf32>
    %57 = vector.multi_reduction <maximumf>, %56, %cst_28 [1] : vector<8x8xf32> to vector<8xf32>
    %58 = vector.shape_cast %57 : vector<8xf32> to vector<8x1xf32>
    %59 = vector.broadcast %58 : vector<8x1xf32> to vector<8x8xf32>
    %60 = arith.subf %56, %59 : vector<8x8xf32>
    %61 = math.exp %60 : vector<8x8xf32>
    %cst_29 = arith.constant dense<0.000000e+00> : vector<8xf32>
    %62 = vector.multi_reduction <add>, %61, %cst_29 [1] : vector<8x8xf32> to vector<8xf32>
    %63 = vector.shape_cast %62 : vector<8xf32> to vector<8x1xf32>
    %64 = tpu.reciprocal %63 {approx = true} : vector<8x1xf32> -> vector<8x1xf32>
    %65 = vector.broadcast %64 : vector<8x1xf32> to vector<8x8xf32>
    %66 = arith.mulf %61, %65 : vector<8x8xf32>
    %cst_30 = arith.constant dense<0.000000e+00> : vector<8x64xf32>
    %67 = tpu.matmul %66, %16, %cst_30 {dimension_numbers = #tpu.dot_dimension_numbers<[1], [0], [0], [1], [0, 0, 1, 1], [], []>} : vector<8x8xf32>, vector<8x64xf32>, vector<8x64xf32> -> vector<8x64xf32>
    %68 = vector.extract_strided_slice %6 {offsets = [0, 24], sizes = [8, 8], strides = [1, 1]} : vector<8x64xf32> to vector<8x8xf32>
    %69 = vector.extract_strided_slice %11 {offsets = [0, 24], sizes = [8, 8], strides = [1, 1]} : vector<8x64xf32> to vector<8x8xf32>
    %cst_31 = arith.constant dense<0.000000e+00> : vector<8x8xf32>
    %70 = tpu.matmul %68, %69, %cst_31 {dimension_numbers = #tpu.dot_dimension_numbers<[1], [1], [0], [0], [0, 0, 1, 0], [], []>} : vector<8x8xf32>, vector<8x8xf32>, vector<8x8xf32> -> vector<8x8xf32>
    %cst_32 = arith.constant -1.000000e+30 : f32
    %71 = vector.broadcast %cst_32 : f32 to vector<8x8xf32>
    %72 = arith.select %19, %70, %71 : vector<8x8xi1>, vector<8x8xf32>
    %cst_33 = arith.constant dense<0xFF800000> : vector<8xf32>
    %73 = vector.multi_reduction <maximumf>, %72, %cst_33 [1] : vector<8x8xf32> to vector<8xf32>
    %74 = vector.shape_cast %73 : vector<8xf32> to vector<8x1xf32>
    %75 = vector.broadcast %74 : vector<8x1xf32> to vector<8x8xf32>
    %76 = arith.subf %72, %75 : vector<8x8xf32>
    %77 = math.exp %76 : vector<8x8xf32>
    %cst_34 = arith.constant dense<0.000000e+00> : vector<8xf32>
    %78 = vector.multi_reduction <add>, %77, %cst_34 [1] : vector<8x8xf32> to vector<8xf32>
    %79 = vector.shape_cast %78 : vector<8xf32> to vector<8x1xf32>
    %80 = tpu.reciprocal %79 {approx = true} : vector<8x1xf32> -> vector<8x1xf32>
    %81 = vector.broadcast %80 : vector<8x1xf32> to vector<8x8xf32>
    %82 = arith.mulf %77, %81 : vector<8x8xf32>
    %cst_35 = arith.constant dense<0.000000e+00> : vector<8x64xf32>
    %83 = tpu.matmul %82, %16, %cst_35 {dimension_numbers = #tpu.dot_dimension_numbers<[1], [0], [0], [1], [0, 0, 1, 1], [], []>} : vector<8x8xf32>, vector<8x64xf32>, vector<8x64xf32> -> vector<8x64xf32>
    %84 = vector.extract_strided_slice %6 {offsets = [0, 32], sizes = [8, 8], strides = [1, 1]} : vector<8x64xf32> to vector<8x8xf32>
    %85 = vector.extract_strided_slice %11 {offsets = [0, 32], sizes = [8, 8], strides = [1, 1]} : vector<8x64xf32> to vector<8x8xf32>
    %cst_36 = arith.constant dense<0.000000e+00> : vector<8x8xf32>
    %86 = tpu.matmul %84, %85, %cst_36 {dimension_numbers = #tpu.dot_dimension_numbers<[1], [1], [0], [0], [0, 0, 1, 0], [], []>} : vector<8x8xf32>, vector<8x8xf32>, vector<8x8xf32> -> vector<8x8xf32>
    %cst_37 = arith.constant -1.000000e+30 : f32
    %87 = vector.broadcast %cst_37 : f32 to vector<8x8xf32>
    %88 = arith.select %19, %86, %87 : vector<8x8xi1>, vector<8x8xf32>
    %cst_38 = arith.constant dense<0xFF800000> : vector<8xf32>
    %89 = vector.multi_reduction <maximumf>, %88, %cst_38 [1] : vector<8x8xf32> to vector<8xf32>
    %90 = vector.shape_cast %89 : vector<8xf32> to vector<8x1xf32>
    %91 = vector.broadcast %90 : vector<8x1xf32> to vector<8x8xf32>
    %92 = arith.subf %88, %91 : vector<8x8xf32>
    %93 = math.exp %92 : vector<8x8xf32>
    %cst_39 = arith.constant dense<0.000000e+00> : vector<8xf32>
    %94 = vector.multi_reduction <add>, %93, %cst_39 [1] : vector<8x8xf32> to vector<8xf32>
    %95 = vector.shape_cast %94 : vector<8xf32> to vector<8x1xf32>
    %96 = tpu.reciprocal %95 {approx = true} : vector<8x1xf32> -> vector<8x1xf32>
    %97 = vector.broadcast %96 : vector<8x1xf32> to vector<8x8xf32>
    %98 = arith.mulf %93, %97 : vector<8x8xf32>
    %cst_40 = arith.constant dense<0.000000e+00> : vector<8x64xf32>
    %99 = tpu.matmul %98, %16, %cst_40 {dimension_numbers = #tpu.dot_dimension_numbers<[1], [0], [0], [1], [0, 0, 1, 1], [], []>} : vector<8x8xf32>, vector<8x64xf32>, vector<8x64xf32> -> vector<8x64xf32>
    %100 = vector.extract_strided_slice %6 {offsets = [0, 40], sizes = [8, 8], strides = [1, 1]} : vector<8x64xf32> to vector<8x8xf32>
    %101 = vector.extract_strided_slice %11 {offsets = [0, 40], sizes = [8, 8], strides = [1, 1]} : vector<8x64xf32> to vector<8x8xf32>
    %cst_41 = arith.constant dense<0.000000e+00> : vector<8x8xf32>
    %102 = tpu.matmul %100, %101, %cst_41 {dimension_numbers = #tpu.dot_dimension_numbers<[1], [1], [0], [0], [0, 0, 1, 0], [], []>} : vector<8x8xf32>, vector<8x8xf32>, vector<8x8xf32> -> vector<8x8xf32>
    %cst_42 = arith.constant -1.000000e+30 : f32
    %103 = vector.broadcast %cst_42 : f32 to vector<8x8xf32>
    %104 = arith.select %19, %102, %103 : vector<8x8xi1>, vector<8x8xf32>
    %cst_43 = arith.constant dense<0xFF800000> : vector<8xf32>
    %105 = vector.multi_reduction <maximumf>, %104, %cst_43 [1] : vector<8x8xf32> to vector<8xf32>
    %106 = vector.shape_cast %105 : vector<8xf32> to vector<8x1xf32>
    %107 = vector.broadcast %106 : vector<8x1xf32> to vector<8x8xf32>
    %108 = arith.subf %104, %107 : vector<8x8xf32>
    %109 = math.exp %108 : vector<8x8xf32>
    %cst_44 = arith.constant dense<0.000000e+00> : vector<8xf32>
    %110 = vector.multi_reduction <add>, %109, %cst_44 [1] : vector<8x8xf32> to vector<8xf32>
    %111 = vector.shape_cast %110 : vector<8xf32> to vector<8x1xf32>
    %112 = tpu.reciprocal %111 {approx = true} : vector<8x1xf32> -> vector<8x1xf32>
    %113 = vector.broadcast %112 : vector<8x1xf32> to vector<8x8xf32>
    %114 = arith.mulf %109, %113 : vector<8x8xf32>
    %cst_45 = arith.constant dense<0.000000e+00> : vector<8x64xf32>
    %115 = tpu.matmul %114, %16, %cst_45 {dimension_numbers = #tpu.dot_dimension_numbers<[1], [0], [0], [1], [0, 0, 1, 1], [], []>} : vector<8x8xf32>, vector<8x64xf32>, vector<8x64xf32> -> vector<8x64xf32>
    %116 = vector.extract_strided_slice %6 {offsets = [0, 48], sizes = [8, 8], strides = [1, 1]} : vector<8x64xf32> to vector<8x8xf32>
    %117 = vector.extract_strided_slice %11 {offsets = [0, 48], sizes = [8, 8], strides = [1, 1]} : vector<8x64xf32> to vector<8x8xf32>
    %cst_46 = arith.constant dense<0.000000e+00> : vector<8x8xf32>
    %118 = tpu.matmul %116, %117, %cst_46 {dimension_numbers = #tpu.dot_dimension_numbers<[1], [1], [0], [0], [0, 0, 1, 0], [], []>} : vector<8x8xf32>, vector<8x8xf32>, vector<8x8xf32> -> vector<8x8xf32>
    %cst_47 = arith.constant -1.000000e+30 : f32
    %119 = vector.broadcast %cst_47 : f32 to vector<8x8xf32>
    %120 = arith.select %19, %118, %119 : vector<8x8xi1>, vector<8x8xf32>
    %cst_48 = arith.constant dense<0xFF800000> : vector<8xf32>
    %121 = vector.multi_reduction <maximumf>, %120, %cst_48 [1] : vector<8x8xf32> to vector<8xf32>
    %122 = vector.shape_cast %121 : vector<8xf32> to vector<8x1xf32>
    %123 = vector.broadcast %122 : vector<8x1xf32> to vector<8x8xf32>
    %124 = arith.subf %120, %123 : vector<8x8xf32>
    %125 = math.exp %124 : vector<8x8xf32>
    %cst_49 = arith.constant dense<0.000000e+00> : vector<8xf32>
    %126 = vector.multi_reduction <add>, %125, %cst_49 [1] : vector<8x8xf32> to vector<8xf32>
    %127 = vector.shape_cast %126 : vector<8xf32> to vector<8x1xf32>
    %128 = tpu.reciprocal %127 {approx = true} : vector<8x1xf32> -> vector<8x1xf32>
    %129 = vector.broadcast %128 : vector<8x1xf32> to vector<8x8xf32>
    %130 = arith.mulf %125, %129 : vector<8x8xf32>
    %cst_50 = arith.constant dense<0.000000e+00> : vector<8x64xf32>
    %131 = tpu.matmul %130, %16, %cst_50 {dimension_numbers = #tpu.dot_dimension_numbers<[1], [0], [0], [1], [0, 0, 1, 1], [], []>} : vector<8x8xf32>, vector<8x64xf32>, vector<8x64xf32> -> vector<8x64xf32>
    %132 = vector.extract_strided_slice %6 {offsets = [0, 56], sizes = [8, 8], strides = [1, 1]} : vector<8x64xf32> to vector<8x8xf32>
    %133 = vector.extract_strided_slice %11 {offsets = [0, 56], sizes = [8, 8], strides = [1, 1]} : vector<8x64xf32> to vector<8x8xf32>
    %cst_51 = arith.constant dense<0.000000e+00> : vector<8x8xf32>
    %134 = tpu.matmul %132, %133, %cst_51 {dimension_numbers = #tpu.dot_dimension_numbers<[1], [1], [0], [0], [0, 0, 1, 0], [], []>} : vector<8x8xf32>, vector<8x8xf32>, vector<8x8xf32> -> vector<8x8xf32>
    %cst_52 = arith.constant -1.000000e+30 : f32
    %135 = vector.broadcast %cst_52 : f32 to vector<8x8xf32>
    %136 = arith.select %19, %134, %135 : vector<8x8xi1>, vector<8x8xf32>
    %cst_53 = arith.constant dense<0xFF800000> : vector<8xf32>
    %137 = vector.multi_reduction <maximumf>, %136, %cst_53 [1] : vector<8x8xf32> to vector<8xf32>
    %138 = vector.shape_cast %137 : vector<8xf32> to vector<8x1xf32>
    %139 = vector.broadcast %138 : vector<8x1xf32> to vector<8x8xf32>
    %140 = arith.subf %136, %139 : vector<8x8xf32>
    %141 = math.exp %140 : vector<8x8xf32>
    %cst_54 = arith.constant dense<0.000000e+00> : vector<8xf32>
    %142 = vector.multi_reduction <add>, %141, %cst_54 [1] : vector<8x8xf32> to vector<8xf32>
    %143 = vector.shape_cast %142 : vector<8xf32> to vector<8x1xf32>
    %144 = tpu.reciprocal %143 {approx = true} : vector<8x1xf32> -> vector<8x1xf32>
    %145 = vector.broadcast %144 : vector<8x1xf32> to vector<8x8xf32>
    %146 = arith.mulf %141, %145 : vector<8x8xf32>
    %cst_55 = arith.constant dense<0.000000e+00> : vector<8x64xf32>
    %147 = tpu.matmul %146, %16, %cst_55 {dimension_numbers = #tpu.dot_dimension_numbers<[1], [0], [0], [1], [0, 0, 1, 1], [], []>} : vector<8x8xf32>, vector<8x64xf32>, vector<8x64xf32> -> vector<8x64xf32>
    %148 = tpu.concatenate %35, %51, %67, %83, %99, %115, %131, %147 in 1 : vector<8x64xf32>, vector<8x64xf32>, vector<8x64xf32>, vector<8x64xf32>, vector<8x64xf32>, vector<8x64xf32>, vector<8x64xf32>, vector<8x64xf32> -> vector<8x512xf32>
    %c0_56 = arith.constant 0 : index
    %c0_57 = arith.constant 0 : index
    %149 = vector.load %arg8[%c0_56, %c0_57] : memref<512x64xf32, #tpu.memory_space<vmem>>, vector<512x64xf32>
    %cst_58 = arith.constant dense<0.000000e+00> : vector<8x64xf32>
    %150 = tpu.matmul %148, %149, %cst_58 {dimension_numbers = #tpu.dot_dimension_numbers<[1], [0], [0], [1], [0, 0, 1, 1], [], []>} : vector<8x512xf32>, vector<512x64xf32>, vector<8x64xf32> -> vector<8x64xf32>
    %c0_59 = arith.constant 0 : index
    %c0_60 = arith.constant 0 : index
    %151 = vector.load %arg9[%c0_59, %c0_60] : memref<1x64xf32, #tpu.memory_space<vmem>>, vector<1x64xf32>
    %152 = vector.broadcast %151 : vector<1x64xf32> to vector<8x64xf32>
    %153 = arith.addf %150, %152 : vector<8x64xf32>
    %154 = arith.addf %1, %153 : vector<8x64xf32>
    %cst_61 = arith.constant dense<0.000000e+00> : vector<8xf32>
    %155 = vector.multi_reduction <add>, %154, %cst_61 [1] : vector<8x64xf32> to vector<8xf32>
    %156 = vector.shape_cast %155 : vector<8xf32> to vector<8x1xf32>
    %cst_62 = arith.constant 6.400000e+01 : f32
    %157 = vector.broadcast %cst_62 : f32 to vector<8x1xf32>
    %158 = arith.divf %156, %157 : vector<8x1xf32>
    %159 = vector.broadcast %158 : vector<8x1xf32> to vector<8x64xf32>
    %160 = arith.subf %154, %159 : vector<8x64xf32>
    %161 = vector.broadcast %158 : vector<8x1xf32> to vector<8x64xf32>
    %162 = arith.subf %154, %161 : vector<8x64xf32>
    %163 = arith.mulf %160, %162 : vector<8x64xf32>
    %cst_63 = arith.constant dense<0.000000e+00> : vector<8xf32>
    %164 = vector.multi_reduction <add>, %163, %cst_63 [1] : vector<8x64xf32> to vector<8xf32>
    %165 = vector.shape_cast %164 : vector<8xf32> to vector<8x1xf32>
    %cst_64 = arith.constant 6.400000e+01 : f32
    %166 = vector.broadcast %cst_64 : f32 to vector<8x1xf32>
    %167 = arith.divf %165, %166 : vector<8x1xf32>
    %168 = vector.broadcast %158 : vector<8x1xf32> to vector<8x64xf32>
    %169 = arith.subf %154, %168 : vector<8x64xf32>
    %cst_65 = arith.constant 9.99999974E-6 : f32
    %170 = vector.broadcast %cst_65 : f32 to vector<8x1xf32>
    %171 = arith.addf %167, %170 : vector<8x1xf32>
    %172 = math.rsqrt %171 : vector<8x1xf32>
    %173 = vector.broadcast %172 : vector<8x1xf32> to vector<8x64xf32>
    %174 = arith.mulf %169, %173 : vector<8x64xf32>
    %c0_66 = arith.constant 0 : index
    %c0_67 = arith.constant 0 : index
    %175 = vector.load %arg10[%c0_66, %c0_67] : memref<1x64xf32, #tpu.memory_space<vmem>>, vector<1x64xf32>
    %176 = vector.broadcast %175 : vector<1x64xf32> to vector<8x64xf32>
    %177 = arith.mulf %174, %176 : vector<8x64xf32>
    %c0_68 = arith.constant 0 : index
    %c0_69 = arith.constant 0 : index
    %178 = vector.load %arg11[%c0_68, %c0_69] : memref<1x64xf32, #tpu.memory_space<vmem>>, vector<1x64xf32>
    %179 = vector.broadcast %178 : vector<1x64xf32> to vector<8x64xf32>
    %180 = arith.addf %177, %179 : vector<8x64xf32>
    %c0_70 = arith.constant 0 : index
    %c0_71 = arith.constant 0 : index
    %181 = vector.load %arg12[%c0_70, %c0_71] : memref<64x256xf32, #tpu.memory_space<vmem>>, vector<64x256xf32>
    %cst_72 = arith.constant dense<0.000000e+00> : vector<8x256xf32>
    %182 = tpu.matmul %180, %181, %cst_72 {dimension_numbers = #tpu.dot_dimension_numbers<[1], [0], [0], [1], [0, 0, 1, 1], [], []>} : vector<8x64xf32>, vector<64x256xf32>, vector<8x256xf32> -> vector<8x256xf32>
    %c0_73 = arith.constant 0 : index
    %c0_74 = arith.constant 0 : index
    %183 = vector.load %arg13[%c0_73, %c0_74] : memref<1x256xf32, #tpu.memory_space<vmem>>, vector<1x256xf32>
    %184 = vector.broadcast %183 : vector<1x256xf32> to vector<8x256xf32>
    %185 = arith.addf %182, %184 : vector<8x256xf32>
    %cst_75 = arith.constant 0.000000e+00 : f32
    %186 = vector.broadcast %cst_75 : f32 to vector<8x256xf32>
    %187 = arith.maximumf %185, %186 : vector<8x256xf32>
    %c0_76 = arith.constant 0 : index
    %c0_77 = arith.constant 0 : index
    %188 = vector.load %arg14[%c0_76, %c0_77] : memref<256x64xf32, #tpu.memory_space<vmem>>, vector<256x64xf32>
    %cst_78 = arith.constant dense<0.000000e+00> : vector<8x64xf32>
    %189 = tpu.matmul %187, %188, %cst_78 {dimension_numbers = #tpu.dot_dimension_numbers<[1], [0], [0], [1], [0, 0, 1, 1], [], []>} : vector<8x256xf32>, vector<256x64xf32>, vector<8x64xf32> -> vector<8x64xf32>
    %c0_79 = arith.constant 0 : index
    %c0_80 = arith.constant 0 : index
    %190 = vector.load %arg15[%c0_79, %c0_80] : memref<1x64xf32, #tpu.memory_space<vmem>>, vector<1x64xf32>
    %191 = vector.broadcast %190 : vector<1x64xf32> to vector<8x64xf32>
    %192 = arith.addf %189, %191 : vector<8x64xf32>
    %193 = arith.addf %180, %192 : vector<8x64xf32>
    %cst_81 = arith.constant dense<0.000000e+00> : vector<8xf32>
    %194 = vector.multi_reduction <add>, %193, %cst_81 [1] : vector<8x64xf32> to vector<8xf32>
    %195 = vector.shape_cast %194 : vector<8xf32> to vector<8x1xf32>
    %cst_82 = arith.constant 6.400000e+01 : f32
    %196 = vector.broadcast %cst_82 : f32 to vector<8x1xf32>
    %197 = arith.divf %195, %196 : vector<8x1xf32>
    %198 = vector.broadcast %197 : vector<8x1xf32> to vector<8x64xf32>
    %199 = arith.subf %193, %198 : vector<8x64xf32>
    %200 = vector.broadcast %197 : vector<8x1xf32> to vector<8x64xf32>
    %201 = arith.subf %193, %200 : vector<8x64xf32>
    %202 = arith.mulf %199, %201 : vector<8x64xf32>
    %cst_83 = arith.constant dense<0.000000e+00> : vector<8xf32>
    %203 = vector.multi_reduction <add>, %202, %cst_83 [1] : vector<8x64xf32> to vector<8xf32>
    %204 = vector.shape_cast %203 : vector<8xf32> to vector<8x1xf32>
    %cst_84 = arith.constant 6.400000e+01 : f32
    %205 = vector.broadcast %cst_84 : f32 to vector<8x1xf32>
    %206 = arith.divf %204, %205 : vector<8x1xf32>
    %207 = vector.broadcast %197 : vector<8x1xf32> to vector<8x64xf32>
    %208 = arith.subf %193, %207 : vector<8x64xf32>
    %cst_85 = arith.constant 9.99999974E-6 : f32
    %209 = vector.broadcast %cst_85 : f32 to vector<8x1xf32>
    %210 = arith.addf %206, %209 : vector<8x1xf32>
    %211 = math.rsqrt %210 : vector<8x1xf32>
    %212 = vector.broadcast %211 : vector<8x1xf32> to vector<8x64xf32>
    %213 = arith.mulf %208, %212 : vector<8x64xf32>
    %c0_86 = arith.constant 0 : index
    %c0_87 = arith.constant 0 : index
    %214 = vector.load %arg16[%c0_86, %c0_87] : memref<1x64xf32, #tpu.memory_space<vmem>>, vector<1x64xf32>
    %215 = vector.broadcast %214 : vector<1x64xf32> to vector<8x64xf32>
    %216 = arith.mulf %213, %215 : vector<8x64xf32>
    %c0_88 = arith.constant 0 : index
    %c0_89 = arith.constant 0 : index
    %217 = vector.load %arg17[%c0_88, %c0_89] : memref<1x64xf32, #tpu.memory_space<vmem>>, vector<1x64xf32>
    %218 = vector.broadcast %217 : vector<1x64xf32> to vector<8x64xf32>
    %219 = arith.addf %216, %218 : vector<8x64xf32>
    %c0_90 = arith.constant 0 : index
    %c0_91 = arith.constant 0 : index
    %c0_92 = arith.constant 0 : index
    %220 = vector.load %arg18[%c0_90, %c0_91, %c0_92] : memref<1x8x64xf32, #tpu.memory_space<vmem>>, vector<1x8x64xf32>
    %221 = vector.shape_cast %220 : vector<1x8x64xf32> to vector<8x64xf32>
    %222 = vector.shape_cast %219 : vector<8x64xf32> to vector<1x8x64xf32>
    tpu.vector_store %arg18[%c0_90, %c0_91, %c0_92], %222 {strides = array<i32>} : memref<1x8x64xf32, #tpu.memory_space<vmem>>, vector<1x8x64xf32>,
    return
  }
  func.func @transform_0(%arg0: i32) -> (i32, i32, i32) {
    %c0_i32 = arith.constant 0 : i32
    %c0_i32_0 = arith.constant 0 : i32
    %c0_i32_1 = arith.constant 0 : i32
    return %arg0, %c0_i32, %c0_i32_0 : i32, i32, i32
  }
  func.func @transform_1(%arg0: i32) -> (i32, i32) {
    %c0_i32 = arith.constant 0 : i32
    %c0_i32_0 = arith.constant 0 : i32
    %c0_i32_1 = arith.constant 0 : i32
    return %c0_i32, %c0_i32_0 : i32, i32
  }
  func.func @transform_2(%arg0: i32) -> (i32, i32) {
    %c0_i32 = arith.constant 0 : i32
    %c0_i32_0 = arith.constant 0 : i32
    %c0_i32_1 = arith.constant 0 : i32
    return %c0_i32, %c0_i32_0 : i32, i32
  }
  func.func @transform_3(%arg0: i32) -> (i32, i32) {
    %c0_i32 = arith.constant 0 : i32
    %c0_i32_0 = arith.constant 0 : i32
    %c0_i32_1 = arith.constant 0 : i32
    return %c0_i32, %c0_i32_0 : i32, i32
  }
  func.func @transform_4(%arg0: i32) -> (i32, i32) {
    %c0_i32 = arith.constant 0 : i32
    %c0_i32_0 = arith.constant 0 : i32
    %c0_i32_1 = arith.constant 0 : i32
    return %c0_i32, %c0_i32_0 : i32, i32
  }
  func.func @transform_5(%arg0: i32) -> (i32, i32) {
    %c0_i32 = arith.constant 0 : i32
    %c0_i32_0 = arith.constant 0 : i32
    %c0_i32_1 = arith.constant 0 : i32
    return %c0_i32, %c0_i32_0 : i32, i32
  }
  func.func @transform_6(%arg0: i32) -> (i32, i32) {
    %c0_i32 = arith.constant 0 : i32
    %c0_i32_0 = arith.constant 0 : i32
    %c0_i32_1 = arith.constant 0 : i32
    return %c0_i32, %c0_i32_0 : i32, i32
  }
  func.func @transform_7(%arg0: i32) -> (i32, i32) {
    %c0_i32 = arith.constant 0 : i32
    %c0_i32_0 = arith.constant 0 : i32
    %c0_i32_1 = arith.constant 0 : i32
    return %c0_i32, %c0_i32_0 : i32, i32
  }
  func.func @transform_8(%arg0: i32) -> (i32, i32) {
    %c0_i32 = arith.constant 0 : i32
    %c0_i32_0 = arith.constant 0 : i32
    %c0_i32_1 = arith.constant 0 : i32
    return %c0_i32, %c0_i32_0 : i32, i32
  }
  func.func @transform_9(%arg0: i32) -> (i32, i32) {
    %c0_i32 = arith.constant 0 : i32
    %c0_i32_0 = arith.constant 0 : i32
    %c0_i32_1 = arith.constant 0 : i32
    return %c0_i32, %c0_i32_0 : i32, i32
  }
  func.func @transform_10(%arg0: i32) -> (i32, i32) {
    %c0_i32 = arith.constant 0 : i32
    %c0_i32_0 = arith.constant 0 : i32
    %c0_i32_1 = arith.constant 0 : i32
    return %c0_i32, %c0_i32_0 : i32, i32
  }
  func.func @transform_11(%arg0: i32) -> (i32, i32) {
    %c0_i32 = arith.constant 0 : i32
    %c0_i32_0 = arith.constant 0 : i32
    %c0_i32_1 = arith.constant 0 : i32
    return %c0_i32, %c0_i32_0 : i32, i32
  }
  func.func @transform_12(%arg0: i32) -> (i32, i32) {
    %c0_i32 = arith.constant 0 : i32
    %c0_i32_0 = arith.constant 0 : i32
    %c0_i32_1 = arith.constant 0 : i32
    return %c0_i32, %c0_i32_0 : i32, i32
  }
  func.func @transform_13(%arg0: i32) -> (i32, i32) {
    %c0_i32 = arith.constant 0 : i32
    %c0_i32_0 = arith.constant 0 : i32
    %c0_i32_1 = arith.constant 0 : i32
    return %c0_i32, %c0_i32_0 : i32, i32
  }
  func.func @transform_14(%arg0: i32) -> (i32, i32) {
    %c0_i32 = arith.constant 0 : i32
    %c0_i32_0 = arith.constant 0 : i32
    %c0_i32_1 = arith.constant 0 : i32
    return %c0_i32, %c0_i32_0 : i32, i32
  }
  func.func @transform_15(%arg0: i32) -> (i32, i32) {
    %c0_i32 = arith.constant 0 : i32
    %c0_i32_0 = arith.constant 0 : i32
    %c0_i32_1 = arith.constant 0 : i32
    return %c0_i32, %c0_i32_0 : i32, i32
  }
  func.func @transform_16(%arg0: i32) -> (i32, i32) {
    %c0_i32 = arith.constant 0 : i32
    %c0_i32_0 = arith.constant 0 : i32
    %c0_i32_1 = arith.constant 0 : i32
    return %c0_i32, %c0_i32_0 : i32, i32
  }
  func.func @transform_17(%arg0: i32) -> (i32, i32, i32) {
    %c0_i32 = arith.constant 0 : i32
    %c0_i32_0 = arith.constant 0 : i32
    %c0_i32_1 = arith.constant 0 : i32
    return %arg0, %c0_i32, %c0_i32_0 : i32, i32, i32
  }
}

module attributes {stable_mosaic.version = 11 : i64} {
  func.func @_head_kernel(%arg0: i32, %arg1: i32, %arg2: memref<1x8x64xf32, #tpu.memory_space<vmem>>, %arg3: memref<64x16xf32, #tpu.memory_space<vmem>>, %arg4: memref<1x16xf32, #tpu.memory_space<vmem>>, %arg5: memref<1x8x16xf32, #tpu.memory_space<vmem>>) attributes {dimension_semantics = [#tpu.dimension_semantics<parallel>, #tpu.dimension_semantics<parallel>], iteration_bounds = array<i64: 2, 1>, scalar_prefetch = 0 : i64, scratch_operands = 0 : i64, tpu.core_type = #tpu.core_type<tc>, window_params = [{transform_indices = @transform_0, window_bounds = array<i64: 1, 8, 64>}, {pipeline_mode = #tpu.pipeline_mode<synchronous>, transform_indices = @transform_1, window_bounds = array<i64: 64, 16>}, {pipeline_mode = #tpu.pipeline_mode<synchronous>, transform_indices = @transform_2, window_bounds = array<i64: 1, 16>}, {transform_indices = @transform_3, window_bounds = array<i64: 1, 8, 16>}]} {
    %c0 = arith.constant 0 : index
    %c0_0 = arith.constant 0 : index
    %c0_1 = arith.constant 0 : index
    %0 = vector.load %arg2[%c0, %c0_0, %c0_1] : memref<1x8x64xf32, #tpu.memory_space<vmem>>, vector<1x8x64xf32>
    %1 = vector.shape_cast %0 : vector<1x8x64xf32> to vector<8x64xf32>
    %c0_2 = arith.constant 0 : index
    %c0_3 = arith.constant 0 : index
    %2 = vector.load %arg3[%c0_2, %c0_3] : memref<64x16xf32, #tpu.memory_space<vmem>>, vector<64x16xf32>
    %cst = arith.constant dense<0.000000e+00> : vector<8x16xf32>
    %3 = tpu.matmul %1, %2, %cst {dimension_numbers = #tpu.dot_dimension_numbers<[1], [0], [0], [1], [0, 0, 1, 1], [], []>} : vector<8x64xf32>, vector<64x16xf32>, vector<8x16xf32> -> vector<8x16xf32>
    %c0_4 = arith.constant 0 : index
    %c0_5 = arith.constant 0 : index
    %4 = vector.load %arg4[%c0_4, %c0_5] : memref<1x16xf32, #tpu.memory_space<vmem>>, vector<1x16xf32>
    %5 = vector.broadcast %4 : vector<1x16xf32> to vector<8x16xf32>
    %6 = arith.addf %3, %5 : vector<8x16xf32>
    %cst_6 = arith.constant dense<0xFF800000> : vector<8xf32>
    %7 = vector.multi_reduction <maximumf>, %6, %cst_6 [1] : vector<8x16xf32> to vector<8xf32>
    %8 = vector.shape_cast %7 : vector<8xf32> to vector<8x1xf32>
    %9 = vector.broadcast %8 : vector<8x1xf32> to vector<8x16xf32>
    %10 = arith.subf %6, %9 : vector<8x16xf32>
    %11 = math.exp %10 : vector<8x16xf32>
    %cst_7 = arith.constant dense<0.000000e+00> : vector<8xf32>
    %12 = vector.multi_reduction <add>, %11, %cst_7 [1] : vector<8x16xf32> to vector<8xf32>
    %13 = vector.shape_cast %12 : vector<8xf32> to vector<8x1xf32>
    %14 = tpu.reciprocal %13 {approx = true} : vector<8x1xf32> -> vector<8x1xf32>
    %15 = vector.broadcast %14 : vector<8x1xf32> to vector<8x16xf32>
    %16 = arith.mulf %11, %15 : vector<8x16xf32>
    %c0_8 = arith.constant 0 : index
    %c0_9 = arith.constant 0 : index
    %c0_10 = arith.constant 0 : index
    %17 = vector.load %arg5[%c0_8, %c0_9, %c0_10] : memref<1x8x16xf32, #tpu.memory_space<vmem>>, vector<1x8x16xf32>
    %18 = vector.shape_cast %17 : vector<1x8x16xf32> to vector<8x16xf32>
    %19 = vector.shape_cast %16 : vector<8x16xf32> to vector<1x8x16xf32>
    tpu.vector_store %arg5[%c0_8, %c0_9, %c0_10], %19 {strides = array<i32>} : memref<1x8x16xf32, #tpu.memory_space<vmem>>, vector<1x8x16xf32>,
    return
  }
  func.func @transform_0(%arg0: i32, %arg1: i32) -> (i32, i32, i32) {
    %c0_i32 = arith.constant 0 : i32
    %c0_i32_0 = arith.constant 0 : i32
    return %arg0, %arg1, %c0_i32 : i32, i32, i32
  }
  func.func @transform_1(%arg0: i32, %arg1: i32) -> (i32, i32) {
    %c0_i32 = arith.constant 0 : i32
    %c0_i32_0 = arith.constant 0 : i32
    %c0_i32_1 = arith.constant 0 : i32
    return %c0_i32, %c0_i32_0 : i32, i32
  }
  func.func @transform_2(%arg0: i32, %arg1: i32) -> (i32, i32) {
    %c0_i32 = arith.constant 0 : i32
    %c0_i32_0 = arith.constant 0 : i32
    %c0_i32_1 = arith.constant 0 : i32
    return %c0_i32, %c0_i32_0 : i32, i32
  }
  func.func @transform_3(%arg0: i32, %arg1: i32) -> (i32, i32, i32) {
    %c0_i32 = arith.constant 0 : i32
    %c0_i32_0 = arith.constant 0 : i32
    return %arg0, %arg1, %c0_i32 : i32, i32, i32
  }
}

</mosaic_0001>

<llo_original>
// kernel: gpt_forward.4
$region0: #{gpt_forward.4}
  #allocation0 [shape = 'u32[]', space=smem, size = 0x4, offset = 0x4, fixed_abs, tag = 'smem constant byte address 0x4 - core index']
  #allocation1 [shape = 'u32[144,128]{1,0:T(1,128)}', space=vmem, size = 0x12000, scoped, tag = 'internal scratch']
  %s0 = inlined_call_operand.vmem [shape: f32[2,8,16], index: 0, kind: input, shape index: {}]
  %s1 = inlined_call_operand.vmem [shape: f32[16,64], index: 1, kind: input, shape index: {}]
  %s2 = inlined_call_operand.vmem [shape: f32[1,64], index: 2, kind: input, shape index: {}]
  %s3 = inlined_call_operand.vmem [shape: f32[8,64], index: 3, kind: input, shape index: {}]
  %s4 = inlined_call_operand.vmem [shape: f32[2,8,64], index: 4, kind: output, shape index: {}]
  %s5 = sld [smem:[#allocation0]]
  $region49: #{gpt_forward.4} parent=0
    _
  %s7 = ssub.s32 1, %s5
  %s8 = scalar_select 0, %s7, %s5
  loop: start=0, step=1, limit=4
  $region2: #{gpt_forward.4} parent=0 // loop_pre_header
    _
  $region3: #{gpt_forward.4} parent=0 // loop_header
    %s10 = sphi 0, %s14
    %p11 = scmp.ge.s32.totalorder %s10, 4
    %s17 = sphi 0, %s29
    %s18 = sphi 0, %s25
    %s19 = sphi 0, %s17
    %s20 = sphi 0, %s18
    %s21 = sphi 0, %s19
    %s22 = sphi 0, %s20
    %s34 = sphi 0, %s36
    %s37 = sphi 0, %s34
    %s38 = sphi 0, %s37
    %s54 = sphi 0, %s38
    %s58 = sphi 0, %s58
    %s60 = sphi 0, %s58
    %s61 = sphi 0, %s60
    %s75 = sphi 0, %s61
    %s79 = sphi 0, %s79
    %s81 = sphi 0, %s79
    %s82 = sphi 0, %s81
    %s96 = sphi 0, %s82
    %s102 = sphi 0, %s104
    %s105 = sphi 0, %s102
    %s106 = sphi 0, %s105
    %s122 = sphi 0, %s106
    %s130 = sphi 0, %s132
    %s133 = sphi 0, %s130
    %s134 = sphi 0, %s133
    %s150 = sphi 0, %s134
  $region4: #{gpt_forward.4} parent=0 // loop_header_branch
    %13 = sbr.rel (%p11) target = $region8
  $region5: #{gpt_forward.4} parent=0 // loop_body
    %s15 = ssub.s32 %s10, 1
    %s16 = ssub.s32 %s10, 2
    %s23 = sadd.s32 1, %s18
    %p24 = scmp.ge.s32.totalorder %s23, 1
    %s25 = scalar_select %p24, 0, %s23
    %s26 = sadd.s32 1, %s17
    %s27 = scalar_select %p24, %s26, %s17
    %p28 = scmp.ge.s32.totalorder %s27, 2
    %s29 = scalar_select %p28, 0, %s27
    %s30 = ssub.s32 %s17, %s29
    %s31 = ssub.s32 %s18, %s25
    %s32 = sor.u32 %s30, %s31
    %p33 = scmp.eq.s32.totalorder %s32, 0
    %s35 = sadd.s32 %s34, 1
    %s36 = scalar_select %p33, %s34, %s35
    %p39 = pneg %p33
    %p40 = scmp.eq.s32.totalorder %s10, 1
    %p41 = por %p39, %p40
    %p42 = scmp.ne.s32.totalorder %s34, %s37
    %p43 = scmp.eq.s32.totalorder %s10, 0
    %p44 = por %p42, %p43
    %p45 = scmp.ne.s32.totalorder %s34, %s37
    %p46 = scmp.eq.s32.totalorder %s15, 1
    %p47 = por %p45, %p46
    %p48 = scmp.ne.s32.totalorder %s37, %s38
    %p49 = scmp.eq.s32.totalorder %s15, 0
    %p50 = por %p48, %p49
    %p51 = scmp.ne.s32.totalorder %s37, %s38
    %p52 = scmp.eq.s32.totalorder %s16, 1
    %p53 = por %p51, %p52
    %p55 = scmp.ne.s32.totalorder %s38, %s54
    %p56 = scmp.eq.s32.totalorder %s16, 0
    %p57 = por %p55, %p56
    %s59 = sadd.s32 %s58, 1
    %p62 = scmp.eq.s32.totalorder %s10, 1
    %p63 = scmp.ne.s32.totalorder %s58, %s60
    %p64 = scmp.eq.s32.totalorder %s10, 0
    %p65 = por %p63, %p64
    %p66 = scmp.ne.s32.totalorder %s58, %s60
    %p67 = scmp.eq.s32.totalorder %s15, 1
    %p68 = por %p66, %p67
    %p69 = scmp.ne.s32.totalorder %s60, %s61
    %p70 = scmp.eq.s32.totalorder %s15, 0
    %p71 = por %p69, %p70
    %p72 = scmp.ne.s32.totalorder %s60, %s61
    %p73 = scmp.eq.s32.totalorder %s16, 1
    %p74 = por %p72, %p73
    %p76 = scmp.ne.s32.totalorder %s61, %s75
    %p77 = scmp.eq.s32.totalorder %s16, 0
    %p78 = por %p76, %p77
    %s80 = sadd.s32 %s79, 1
    %p83 = scmp.eq.s32.totalorder %s10, 1
    %p84 = scmp.ne.s32.totalorder %s79, %s81
    %p85 = scmp.eq.s32.totalorder %s10, 0
    %p86 = por %p84, %p85
    %p87 = scmp.ne.s32.totalorder %s79, %s81
    %p88 = scmp.eq.s32.totalorder %s15, 1
    %p89 = por %p87, %p88
    %p90 = scmp.ne.s32.totalorder %s81, %s82
    %p91 = scmp.eq.s32.totalorder %s15, 0
    %p92 = por %p90, %p91
    %p93 = scmp.ne.s32.totalorder %s81, %s82
    %p94 = scmp.eq.s32.totalorder %s16, 1
    %p95 = por %p93, %p94
    %p97 = scmp.ne.s32.totalorder %s82, %s96
    %p98 = scmp.eq.s32.totalorder %s16, 0
    %p99 = por %p97, %p98
    %s100 = ssub.s32 %s18, %s25
    %p101 = scmp.eq.s32.totalorder %s100, 0
    %s103 = sadd.s32 %s102, 1
    %s104 = scalar_select %p101, %s102, %s103
    %p107 = pneg %p101
    %p108 = scmp.eq.s32.totalorder %s10, 1
    %p109 = por %p107, %p108
    %p110 = scmp.ne.s32.totalorder %s102, %s105
    %p111 = scmp.eq.s32.totalorder %s10, 0
    %p112 = por %p110, %p111
    %p113 = scmp.ne.s32.totalorder %s102, %s105
    %p114 = scmp.eq.s32.totalorder %s15, 1
    %p115 = por %p113, %p114
    %p116 = scmp.ne.s32.totalorder %s105, %s106
    %p117 = scmp.eq.s32.totalorder %s15, 0
    %p118 = por %p116, %p117
    %p119 = scmp.ne.s32.totalorder %s105, %s106
    %p120 = scmp.eq.s32.totalorder %s16, 1
    %p121 = por %p119, %p120
    %p123 = scmp.ne.s32.totalorder %s106, %s122
    %p124 = scmp.eq.s32.totalorder %s16, 0
    %p125 = por %p123, %p124
    %s126 = ssub.s32 %s17, %s29
    %s127 = ssub.s32 %s18, %s25
    %s128 = sor.u32 %s126, %s127
    %p129 = scmp.eq.s32.totalorder %s128, 0
    %s131 = sadd.s32 %s130, 1
    %s132 = scalar_select %p129, %s130, %s131
    %p135 = pneg %p129
    %p136 = scmp.eq.s32.totalorder %s10, 1
    %p137 = por %p135, %p136
    %p138 = scmp.ne.s32.totalorder %s130, %s133
    %p139 = scmp.eq.s32.totalorder %s10, 0
    %p140 = por %p138, %p139
    %p141 = scmp.ne.s32.totalorder %s130, %s133
    %p142 = scmp.eq.s32.totalorder %s15, 1
    %p143 = por %p141, %p142
    %p144 = scmp.ne.s32.totalorder %s133, %s134
    %p145 = scmp.eq.s32.totalorder %s15, 0
    %p146 = por %p144, %p145
    %p147 = scmp.ne.s32.totalorder %s133, %s134
    %p148 = scmp.eq.s32.totalorder %s16, 1
    %p149 = por %p147, %p148
    %p151 = scmp.ne.s32.totalorder %s134, %s150
    %p152 = scmp.eq.s32.totalorder %s16, 0
    %p153 = por %p151, %p152
    %p154 = scmp.le.s32.totalorder 1, %s10
    %p155 = scmp.lt.s32.totalorder %s10, 3
    %p156 = pnand %p154, %p155
    %p157 = pneg %p156
    // Predicated region
    $region9: #{gpt_forward.4} parent=5 // pred_check
      _
    $region10: #{gpt_forward.4} parent=5 // pred_check_branch
      %159 = sbr.rel (%p156) target = $region12
    $region11: #{gpt_forward.4} parent=5 // pred_region
      %s160 = ssub.s32 %s10, 1
      // Predicated region
      $region13: #{gpt_forward.4} parent=11 // pred_check
        %p161 = pneg %p71
      $region14: #{gpt_forward.4} parent=11 // pred_check_branch
        %163 = sbr.rel (%p161) target = $region16
      $region15: #{gpt_forward.4} parent=11 // pred_region
        _
      $region16: #{gpt_forward.4} parent=11 // pred_fallthru
        _
      // Predicated region
      $region17: #{gpt_forward.4} parent=11 // pred_check
        %p164 = pneg %p92
      $region18: #{gpt_forward.4} parent=11 // pred_check_branch
        %166 = sbr.rel (%p164) target = $region20
      $region19: #{gpt_forward.4} parent=11 // pred_region
        _
      $region20: #{gpt_forward.4} parent=11 // pred_fallthru
        _
      // Predicated region
      $region21: #{gpt_forward.4} parent=11 // pred_check
        %p167 = pneg %p118
      $region22: #{gpt_forward.4} parent=11 // pred_check_branch
        %169 = sbr.rel (%p167) target = $region24
      $region23: #{gpt_forward.4} parent=11 // pred_region
        %p170 = scmp.lt.s32.totalorder %s20, 0
        %s171 = scalar_select %p170, %s20, 0
        %s172 = smul.addr %s171, 8
        %s173 = scalar_lea.vmem %s3, %s172
      $region24: #{gpt_forward.4} parent=11 // pred_fallthru
        _
    $region12: #{gpt_forward.4} parent=5 // pred_fallthru
      _
    %p174 = scmp.lt.s32.totalorder %s10, 2
    // Predicated region
    $region25: #{gpt_forward.4} parent=5 // pred_check
      %p175 = pneg %p174
    $region26: #{gpt_forward.4} parent=5 // pred_check_branch
      %177 = sbr.rel (%p175) target = $region28
    $region27: #{gpt_forward.4} parent=5 // pred_region
      // Predicated region
      $region29: #{gpt_forward.4} parent=27 // pred_check
        %p178 = pneg %p44
      $region30: #{gpt_forward.4} parent=27 // pred_check_branch
        %180 = sbr.rel (%p178) target = $region32
      $region31: #{gpt_forward.4} parent=27 // pred_region
        %p181 = scmp.lt.s32.totalorder %s17, 1
        %s182 = scalar_select %p181, %s17, 1
        %p183 = scmp.lt.s32.totalorder %s18, 0
        %s184 = scalar_select %p183, %s18, 0
        %s185 = sadd.s32 %s184, %s182
        %s186 = smul.addr %s185, 8
        %s187 = scalar_lea.vmem %s0, %s186
      $region32: #{gpt_forward.4} parent=27 // pred_fallthru
        _
    $region28: #{gpt_forward.4} parent=5 // pred_fallthru
      _
    %p188 = scmp.le.s32.totalorder 1, %s10
    %p189 = scmp.lt.s32.totalorder %s10, 3
    %p190 = pnand %p188, %p189
    %p191 = pneg %p190
    // Predicated region
    $region33: #{gpt_forward.4} parent=5 // pred_check
      _
    $region34: #{gpt_forward.4} parent=5 // pred_check_branch
      %193 = sbr.rel (%p190) target = $region36
    $region35: #{gpt_forward.4} parent=5 // pred_region
      %s194 = ssub.s32 %s10, 1
      %p195 = scmp.lt.s32.totalorder %s19, 1
      %s196 = scalar_select %p195, %s19, 1
      %p197 = scmp.lt.s32.totalorder %s20, 0
      %s198 = scalar_select %p197, %s20, 0
      %s199 = sadd.s32 %s198, %s196
      %s200 = smul.addr %s199, 8
      %s201 = scalar_lea.vmem %s0, %s200
      %p202 = pneg %p50
      %p203 = pneg %p47
      %p204 = pneg %p71
      %p205 = pneg %p68
      %p206 = pneg %p92
      %p207 = pneg %p89
      %p208 = scmp.lt.s32.totalorder %s20, 0
      %s209 = scalar_select %p208, %s20, 0
      %s210 = smul.addr %s209, 8
      %s211 = scalar_lea.vmem %s3, %s210
      %p212 = pneg %p118
      %p213 = pneg %p115
      %p214 = pneg %p146
      %p215 = pneg %p143
      %p216 = scmp.lt.s32.totalorder %s19, 1
      %s217 = scalar_select %p216, %s19, 1
      %p218 = scmp.lt.s32.totalorder %s20, 0
      %s219 = scalar_select %p218, %s20, 0
      %s220 = sadd.s32 %s219, %s217
      %s221 = smul.addr %s220, 8
      %s222 = scalar_lea.vmem %s4, %s221
      %p223 = scmp.lt.s32.totalorder %s19, 1
      %s224 = scalar_select %p223, %s19, 1
      %p225 = scmp.lt.s32.totalorder %s20, 0
      %s226 = scalar_select %p225, %s20, 0
      %s227 = sadd.s32 %s226, %s224
      %s228 = smul.addr %s227, 8
      %s229 = scalar_lea.vmem %s0, %s228
      %p230 = scmp.lt.s32.totalorder %s20, 0
      %s231 = scalar_select %p230, %s20, 0
      %s232 = smul.addr %s231, 8
      %s233 = scalar_lea.vmem %s3, %s232
      %p234 = scmp.lt.s32.totalorder %s19, 1
      %s235 = scalar_select %p234, %s19, 1
      %p236 = scmp.lt.s32.totalorder %s20, 0
      %s237 = scalar_select %p236, %s20, 0
      %s238 = sadd.s32 %s237, %s235
      %s239 = smul.addr %s238, 8
      %s240 = scalar_lea.vmem %s4, %s239
      %v241 = vld [vmem:[%s229] sm:$0xff]
      %v242 = vld [vmem:[%s1] sm:$0xff]
      %v243 = vld [vmem:[%s1 + $0x8] sm:$0xff]
      %v244 = vld [vmem:[%s2] sm:$0x1]
      %v246 = vlaneseq
      %v247 = vshrl.u32 %v246, 7
      %v248 = vsub.s32 0, %v247
      %v249 = vrot.slane %v244, %v248
      %vm251 = vcmask 130048
      %v253 = vsel %vm251, %v241, 0
      %255 = vmatprep.subr.mxu0 0.0
      %256 = vmatpush1.msra.mxu0 %v242
      %257 = vmatprep.subr.mxu0 0.0
      %258 = vmatpush1.msra.mxu0 %v243
      %259 = vmatprep.subr.mxu0 0.0
      %260 = vmatpush1.msra.mxu0 0.0
      %261 = vmatprep.subr.mxu0 0.0
      %262 = vmatpush1.msra.mxu0 0.0
      %263 = vmatprep.subr.mxu0 0.0
      %264 = vmatpush1.msra.mxu0 0.0
      %265 = vmatprep.subr.mxu0 0.0
      %266 = vmatpush1.msra.mxu0 0.0
      %267 = vmatprep.subr.mxu0 0.0
      %268 = vmatpush1.msra.mxu0 0.0
      %269 = vmatprep.subr.mxu0 0.0
      %270 = vmatpush1.msra.mxu0 0.0
      %271 = vmatprep.subr.mxu0 0.0
      %272 = vmatpush1.msra.mxu0 0.0
      %273 = vmatprep.subr.mxu0 0.0
      %274 = vmatpush1.msra.mxu0 0.0
      %275 = vmatprep.subr.mxu0 0.0
      %276 = vmatpush1.msra.mxu0 0.0
      %277 = vmatprep.subr.mxu0 0.0
      %278 = vmatpush1.msra.mxu0 0.0
      %279 = vmatprep.subr.mxu0 0.0
      %280 = vmatpush1.msra.mxu0 0.0
      %281 = vmatprep.subr.mxu0 0.0
      %282 = vmatpush1.msra.mxu0 0.0
      %283 = vmatprep.subr.mxu0 0.0
      %284 = vmatpush1.msra.mxu0 0.0
      %285 = vmatprep.subr.mxu0 0.0
      %286 = vmatpush1.msra.mxu0 0.0
      %287 = vmatprep.subr.mxu0 0.0
      %288 = vmatpush1.msra.mxu0 0.0
      %289 = vmatprep.subr.mxu0 0.0
      %290 = vmatpush1.msra.mxu0 0.0
      %291 = vmatprep.subr.mxu0 0.0
      %292 = vmatpush1.msra.mxu0 0.0
      %293 = vmatprep.subr.mxu0 0.0
      %294 = vmatpush1.msra.mxu0 0.0
      %295 = vmatprep.subr.mxu0 0.0
      %296 = vmatpush1.msra.mxu0 0.0
      %297 = vmatprep.subr.mxu0 0.0
      %298 = vmatpush1.msra.mxu0 0.0
      %299 = vmatprep.subr.mxu0 0.0
      %300 = vmatpush1.msra.mxu0 0.0
      %301 = vmatprep.subr.mxu0 0.0
      %302 = vmatpush1.msra.mxu0 0.0
      %303 = vmatprep.subr.mxu0 0.0
      %304 = vmatpush1.msra.mxu0 0.0
      %305 = vmatprep.subr.mxu0 0.0
      %306 = vmatpush1.msra.mxu0 0.0
      %307 = vmatprep.subr.mxu0 0.0
      %308 = vmatpush1.msra.mxu0 0.0
      %309 = vmatprep.subr.mxu0 0.0
      %310 = vmatpush1.msra.mxu0 0.0
      %311 = vmatprep.subr.mxu0 0.0
      %312 = vmatpush1.msra.mxu0 0.0
      %313 = vmatprep.subr.mxu0 0.0
      %314 = vmatpush1.msra.mxu0 0.0
      %315 = vmatprep.subr.mxu0 0.0
      %316 = vmatpush1.msra.mxu0 0.0
      %317 = vmatprep.subr.mxu0 0.0
      %318 = vmatpush1.msra.mxu0 0.0
      %319 = vmatprep.mubr.f32.mxu0 0.0
      %320 = vmatmul.mubr.f32.gmra.mrb[0].mxu0 %v253
      %v321 = vpop.f32.mrb[0].mxu0
      %v322 = vadd.f32 %v249, %v321
      %v323 = vpop.f32.mrb[0].mxu0
      %324 = vdwg.mxu0
      %v325 = vld [vmem:[%s233] sm:$0xff]
      %v326 = vadd.f32 %v322, %v325
      %vm327 = vcmask 523264
      %328 = vst.msk [vmem:[%s240] sm:$0xff] %vm327, %v326
      %p329 = scmp.lt.s32.totalorder %s19, 1
      %s330 = scalar_select %p329, %s19, 1
      %p331 = scmp.lt.s32.totalorder %s20, 0
      %s332 = scalar_select %p331, %s20, 0
      %s333 = sadd.s32 %s332, %s330
      %s334 = smul.addr %s333, 8
      %s335 = scalar_lea.vmem %s4, %s334
      // Predicated region
      $region37: #{gpt_forward.4} parent=35 // pred_check
        %p336 = pneg %p143
      $region38: #{gpt_forward.4} parent=35 // pred_check_branch
        %338 = sbr.rel (%p336) target = $region40
      $region39: #{gpt_forward.4} parent=35 // pred_region
        _
      $region40: #{gpt_forward.4} parent=35 // pred_fallthru
        _
    $region36: #{gpt_forward.4} parent=5 // pred_fallthru
      _
    %p339 = scmp.le.s32.totalorder 2, %s10
    // Predicated region
    $region41: #{gpt_forward.4} parent=5 // pred_check
      %p340 = pneg %p339
    $region42: #{gpt_forward.4} parent=5 // pred_check_branch
      %342 = sbr.rel (%p340) target = $region44
    $region43: #{gpt_forward.4} parent=5 // pred_region
      %s343 = ssub.s32 %s10, 2
      // Predicated region
      $region45: #{gpt_forward.4} parent=43 // pred_check
        %p344 = pneg %p149
      $region46: #{gpt_forward.4} parent=43 // pred_check_branch
        %346 = sbr.rel (%p344) target = $region48
      $region47: #{gpt_forward.4} parent=43 // pred_region
        %p347 = scmp.lt.s32.totalorder %s21, 1
        %s348 = scalar_select %p347, %s21, 1
        %p349 = scmp.lt.s32.totalorder %s22, 0
        %s350 = scalar_select %p349, %s22, 0
        %s351 = sadd.s32 %s350, %s348
        %s352 = smul.addr %s351, 8
        %s353 = scalar_lea.vmem %s4, %s352
      $region48: #{gpt_forward.4} parent=43 // pred_fallthru
        _
    $region44: #{gpt_forward.4} parent=5 // pred_fallthru
      _
  $region6: #{gpt_forward.4} parent=0 // loop_footer
    %s14 = sadd.s32 1, %s10
  $region7: #{gpt_forward.4} parent=0 // loop_footer_branch
    %9 = sbr.rel target = $region3
  $region8: #{gpt_forward.4} parent=0 // loop_exit
    _

// kernel: gpt_forward.7
$region0: #{gpt_forward.7}
  #allocation0 [shape = 'u32[]', space=smem, size = 0x4, offset = 0x4, fixed_abs, tag = 'smem constant byte address 0x4 - core index']
  #allocation1 [shape = 'u32[144,128]{1,0:T(1,128)}', space=vmem, size = 0x12000, scoped, tag = 'internal scratch']
  %s0 = inlined_call_operand.vmem [shape: f32[2,8,64], index: 0, kind: input, shape index: {}]
  %s1 = inlined_call_operand.vmem [shape: f32[64,16], index: 1, kind: input, shape index: {}]
  %s2 = inlined_call_operand.vmem [shape: f32[1,16], index: 2, kind: input, shape index: {}]
  %s3 = inlined_call_operand.hbm [shape: f32[2,8,16], index: 3, kind: output, shape index: {}]
  %s4 = sld [smem:[#allocation0]]
  $region45: #{gpt_forward.7} parent=0
    _
  %s6 = ssub.s32 1, %s4
  %s7 = scalar_select 0, %s6, %s4
  $region1: #{gpt_forward.7} parent=0
    #allocation2 [shape = 'u8[8192]{0}', space=vmem, size = 0x2000, scoped, tag = 'output window, operand 0']
    #allocation3 [shape = 's32[2]{0}', space=sflag, size = 0x8, scoped, tag = 'scoped memory for gpt_forward.7']
    %8 = vsyncpa [#allocation3], 0
    %s9 = scalar_lea.sflag [#allocation3], 1
    %10 = vsyncpa %s9, 0
    loop: start=0, step=1, limit=4
    $region2: #{gpt_forward.7} parent=1 // loop_pre_header
      _
    $region3: #{gpt_forward.7} parent=1 // loop_header
      %s12 = sphi 0, %s16
      %p13 = scmp.ge.s32.totalorder %s12, 4
      %s19 = sphi 0, %s31
      %s20 = sphi 0, %s27
      %s21 = sphi 0, %s19
      %s22 = sphi 0, %s20
      %s23 = sphi 0, %s21
      %s24 = sphi 0, %s22
      %s36 = sphi 0, %s38
      %s39 = sphi 0, %s36
      %s40 = sphi 0, %s39
      %s56 = sphi 0, %s40
      %s60 = sphi 0, %s60
      %s62 = sphi 0, %s60
      %s63 = sphi 0, %s62
      %s77 = sphi 0, %s63
      %s81 = sphi 0, %s81
      %s83 = sphi 0, %s81
      %s84 = sphi 0, %s83
      %s98 = sphi 0, %s84
      %s106 = sphi 0, %s108
      %s109 = sphi 0, %s106
      %s110 = sphi 0, %s109
      %s126 = sphi 0, %s110
    $region4: #{gpt_forward.7} parent=1 // loop_header_branch
      %15 = sbr.rel (%p13) target = $region8
    $region5: #{gpt_forward.7} parent=1 // loop_body
      %s17 = ssub.s32 %s12, 1
      %s18 = ssub.s32 %s12, 2
      %s25 = sadd.s32 1, %s20
      %p26 = scmp.ge.s32.totalorder %s25, 1
      %s27 = scalar_select %p26, 0, %s25
      %s28 = sadd.s32 1, %s19
      %s29 = scalar_select %p26, %s28, %s19
      %p30 = scmp.ge.s32.totalorder %s29, 2
      %s31 = scalar_select %p30, 0, %s29
      %s32 = ssub.s32 %s19, %s31
      %s33 = ssub.s32 %s20, %s27
      %s34 = sor.u32 %s32, %s33
      %p35 = scmp.eq.s32.totalorder %s34, 0
      %s37 = sadd.s32 %s36, 1
      %s38 = scalar_select %p35, %s36, %s37
      %p41 = pneg %p35
      %p42 = scmp.eq.s32.totalorder %s12, 1
      %p43 = por %p41, %p42
      %p44 = scmp.ne.s32.totalorder %s36, %s39
      %p45 = scmp.eq.s32.totalorder %s12, 0
      %p46 = por %p44, %p45
      %p47 = scmp.ne.s32.totalorder %s36, %s39
      %p48 = scmp.eq.s32.totalorder %s17, 1
      %p49 = por %p47, %p48
      %p50 = scmp.ne.s32.totalorder %s39, %s40
      %p51 = scmp.eq.s32.totalorder %s17, 0
      %p52 = por %p50, %p51
      %p53 = scmp.ne.s32.totalorder %s39, %s40
      %p54 = scmp.eq.s32.totalorder %s18, 1
      %p55 = por %p53, %p54
      %p57 = scmp.ne.s32.totalorder %s40, %s56
      %p58 = scmp.eq.s32.totalorder %s18, 0
      %p59 = por %p57, %p58
      %s61 = sadd.s32 %s60, 1
      %p64 = scmp.eq.s32.totalorder %s12, 1
      %p65 = scmp.ne.s32.totalorder %s60, %s62
      %p66 = scmp.eq.s32.totalorder %s12, 0
      %p67 = por %p65, %p66
      %p68 = scmp.ne.s32.totalorder %s60, %s62
      %p69 = scmp.eq.s32.totalorder %s17, 1
      %p70 = por %p68, %p69
      %p71 = scmp.ne.s32.totalorder %s62, %s63
      %p72 = scmp.eq.s32.totalorder %s17, 0
      %p73 = por %p71, %p72
      %p74 = scmp.ne.s32.totalorder %s62, %s63
      %p75 = scmp.eq.s32.totalorder %s18, 1
      %p76 = por %p74, %p75
      %p78 = scmp.ne.s32.totalorder %s63, %s77
      %p79 = scmp.eq.s32.totalorder %s18, 0
      %p80 = por %p78, %p79
      %s82 = sadd.s32 %s81, 1
      %p85 = scmp.eq.s32.totalorder %s12, 1
      %p86 = scmp.ne.s32.totalorder %s81, %s83
      %p87 = scmp.eq.s32.totalorder %s12, 0
      %p88 = por %p86, %p87
      %p89 = scmp.ne.s32.totalorder %s81, %s83
      %p90 = scmp.eq.s32.totalorder %s17, 1
      %p91 = por %p89, %p90
      %p92 = scmp.ne.s32.totalorder %s83, %s84
      %p93 = scmp.eq.s32.totalorder %s17, 0
      %p94 = por %p92, %p93
      %p95 = scmp.ne.s32.totalorder %s83, %s84
      %p96 = scmp.eq.s32.totalorder %s18, 1
      %p97 = por %p95, %p96
      %p99 = scmp.ne.s32.totalorder %s84, %s98
      %p100 = scmp.eq.s32.totalorder %s18, 0
      %p101 = por %p99, %p100
      %s102 = ssub.s32 %s19, %s31
      %s103 = ssub.s32 %s20, %s27
      %s104 = sor.u32 %s102, %s103
      %p105 = scmp.eq.s32.totalorder %s104, 0
      %s107 = sadd.s32 %s106, 1
      %s108 = scalar_select %p105, %s106, %s107
      %p111 = pneg %p105
      %p112 = scmp.eq.s32.totalorder %s12, 1
      %p113 = por %p111, %p112
      %p114 = scmp.ne.s32.totalorder %s106, %s109
      %p115 = scmp.eq.s32.totalorder %s12, 0
      %p116 = por %p114, %p115
      %p117 = scmp.ne.s32.totalorder %s106, %s109
      %p118 = scmp.eq.s32.totalorder %s17, 1
      %p119 = por %p117, %p118
      %p120 = scmp.ne.s32.totalorder %s109, %s110
      %p121 = scmp.eq.s32.totalorder %s17, 0
      %p122 = por %p120, %p121
      %p123 = scmp.ne.s32.totalorder %s109, %s110
      %p124 = scmp.eq.s32.totalorder %s18, 1
      %p125 = por %p123, %p124
      %p127 = scmp.ne.s32.totalorder %s110, %s126
      %p128 = scmp.eq.s32.totalorder %s18, 0
      %p129 = por %p127, %p128
      %p130 = scmp.le.s32.totalorder 1, %s12
      %p131 = scmp.lt.s32.totalorder %s12, 3
      %p132 = pnand %p130, %p131
      %p133 = pneg %p132
      // Predicated region
      $region9: #{gpt_forward.7} parent=5 // pred_check
        _
      $region10: #{gpt_forward.7} parent=5 // pred_check_branch
        %135 = sbr.rel (%p132) target = $region12
      $region11: #{gpt_forward.7} parent=5 // pred_region
        %s136 = ssub.s32 %s12, 1
        // Predicated region
        $region13: #{gpt_forward.7} parent=11 // pred_check
          %p137 = pneg %p73
        $region14: #{gpt_forward.7} parent=11 // pred_check_branch
          %139 = sbr.rel (%p137) target = $region16
        $region15: #{gpt_forward.7} parent=11 // pred_region
          _
        $region16: #{gpt_forward.7} parent=11 // pred_fallthru
          _
        // Predicated region
        $region17: #{gpt_forward.7} parent=11 // pred_check
          %p140 = pneg %p94
        $region18: #{gpt_forward.7} parent=11 // pred_check_branch
          %142 = sbr.rel (%p140) target = $region20
        $region19: #{gpt_forward.7} parent=11 // pred_region
          _
        $region20: #{gpt_forward.7} parent=11 // pred_fallthru
          _
      $region12: #{gpt_forward.7} parent=5 // pred_fallthru
        _
      %p143 = scmp.lt.s32.totalorder %s12, 2
      // Predicated region
      $region21: #{gpt_forward.7} parent=5 // pred_check
        %p144 = pneg %p143
      $region22: #{gpt_forward.7} parent=5 // pred_check_branch
        %146 = sbr.rel (%p144) target = $region24
      $region23: #{gpt_forward.7} parent=5 // pred_region
        // Predicated region
        $region25: #{gpt_forward.7} parent=23 // pred_check
          %p147 = pneg %p46
        $region26: #{gpt_forward.7} parent=23 // pred_check_branch
          %149 = sbr.rel (%p147) target = $region28
        $region27: #{gpt_forward.7} parent=23 // pred_region
          %p150 = scmp.lt.s32.totalorder %s19, 1
          %s151 = scalar_select %p150, %s19, 1
          %p152 = scmp.lt.s32.totalorder %s20, 0
          %s153 = scalar_select %p152, %s20, 0
          %s154 = sadd.s32 %s153, %s151
          %s155 = smul.addr %s154, 8
          %s156 = scalar_lea.vmem %s0, %s155
        $region28: #{gpt_forward.7} parent=23 // pred_fallthru
          _
      $region24: #{gpt_forward.7} parent=5 // pred_fallthru
        _
      %p157 = scmp.le.s32.totalorder 1, %s12
      %p158 = scmp.lt.s32.totalorder %s12, 3
      %p159 = pnand %p157, %p158
      %p160 = pneg %p159
      // Predicated region
      $region29: #{gpt_forward.7} parent=5 // pred_check
        _
      $region30: #{gpt_forward.7} parent=5 // pred_check_branch
        %162 = sbr.rel (%p159) target = $region32
      $region31: #{gpt_forward.7} parent=5 // pred_region
        %s163 = ssub.s32 %s12, 1
        %p164 = scmp.lt.s32.totalorder %s21, 1
        %s165 = scalar_select %p164, %s21, 1
        %p166 = scmp.lt.s32.totalorder %s22, 0
        %s167 = scalar_select %p166, %s22, 0
        %s168 = sadd.s32 %s167, %s165
        %s169 = smul.addr %s168, 8
        %s170 = scalar_lea.vmem %s0, %s169
        %p171 = pneg %p52
        %p172 = pneg %p49
        %p173 = pneg %p73
        %p174 = pneg %p70
        %p175 = pneg %p94
        %p176 = pneg %p91
        %p177 = pneg %p122
        %p178 = pneg %p119
        %s179 = sand.u32 %s109, 1
        %s180 = scalar_lea.sflag [#allocation3], %s179
        %s181 = sand.u32 %s109, 1
        %s182 = smul.addr %s181, 8
        %s183 = scalar_lea.vmem [#allocation2], %s182
        %p184 = scmp.lt.s32.totalorder %s21, 1
        %s185 = scalar_select %p184, %s21, 1
        %p186 = scmp.lt.s32.totalorder %s22, 0
        %s187 = scalar_select %p186, %s22, 0
        %s188 = sadd.s32 %s187, %s185
        %s189 = smul.addr %s188, 8
        %s190 = scalar_lea.vmem %s0, %s189
        %v191 = vld [vmem:[%s190] sm:$0xff]
        %v192 = vld [vmem:[%s1] sm:$0xff]
        %v193 = vld [vmem:[%s1 + $0x8] sm:$0xff]
        %v194 = vld [vmem:[%s1 + $0x10] sm:$0xff]
        %v195 = vld [vmem:[%s1 + $0x18] sm:$0xff]
        %v196 = vld [vmem:[%s1 + $0x20] sm:$0xff]
        %v197 = vld [vmem:[%s1 + $0x28] sm:$0xff]
        %v198 = vld [vmem:[%s1 + $0x30] sm:$0xff]
        %v199 = vld [vmem:[%s1 + $0x38] sm:$0xff]
        %v200 = vld [vmem:[%s2] sm:$0x1]
        %v202 = vlaneseq
        %v203 = vshrl.u32 %v202, 7
        %v204 = vsub.s32 0, %v203
        %v205 = vrot.slane %v200, %v204
        %vm207 = vcmask 523264
        %v209 = vsel %vm207, %v191, 0
        %211 = vmatprep.subr.mxu0 0.0
        %212 = vmatpush1.msra.mxu0 %v192
        %213 = vmatprep.subr.mxu0 0.0
        %214 = vmatpush1.msra.mxu0 %v193
        %215 = vmatprep.subr.mxu0 0.0
        %216 = vmatpush1.msra.mxu0 %v194
        %217 = vmatprep.subr.mxu0 0.0
        %218 = vmatpush1.msra.mxu0 %v195
        %219 = vmatprep.subr.mxu0 0.0
        %220 = vmatpush1.msra.mxu0 %v196
        %221 = vmatprep.subr.mxu0 0.0
        %222 = vmatpush1.msra.mxu0 %v197
        %223 = vmatprep.subr.mxu0 0.0
        %224 = vmatpush1.msra.mxu0 %v198
        %225 = vmatprep.subr.mxu0 0.0
        %226 = vmatpush1.msra.mxu0 %v199
        %227 = vmatprep.subr.mxu0 0.0
        %228 = vmatpush1.msra.mxu0 0.0
        %229 = vmatprep.subr.mxu0 0.0
        %230 = vmatpush1.msra.mxu0 0.0
        %231 = vmatprep.subr.mxu0 0.0
        %232 = vmatpush1.msra.mxu0 0.0
        %233 = vmatprep.subr.mxu0 0.0
        %234 = vmatpush1.msra.mxu0 0.0
        %235 = vmatprep.subr.mxu0 0.0
        %236 = vmatpush1.msra.mxu0 0.0
        %237 = vmatprep.subr.mxu0 0.0
        %238 = vmatpush1.msra.mxu0 0.0
        %239 = vmatprep.subr.mxu0 0.0
        %240 = vmatpush1.msra.mxu0 0.0
        %241 = vmatprep.subr.mxu0 0.0
        %242 = vmatpush1.msra.mxu0 0.0
        %243 = vmatprep.subr.mxu0 0.0
        %244 = vmatpush1.msra.mxu0 0.0
        %245 = vmatprep.subr.mxu0 0.0
        %246 = vmatpush1.msra.mxu0 0.0
        %247 = vmatprep.subr.mxu0 0.0
        %248 = vmatpush1.msra.mxu0 0.0
        %249 = vmatprep.subr.mxu0 0.0
        %250 = vmatpush1.msra.mxu0 0.0
        %251 = vmatprep.subr.mxu0 0.0
        %252 = vmatpush1.msra.mxu0 0.0
        %253 = vmatprep.subr.mxu0 0.0
        %254 = vmatpush1.msra.mxu0 0.0
        %255 = vmatprep.subr.mxu0 0.0
        %256 = vmatpush1.msra.mxu0 0.0
        %257 = vmatprep.subr.mxu0 0.0
        %258 = vmatpush1.msra.mxu0 0.0
        %259 = vmatprep.subr.mxu0 0.0
        %260 = vmatpush1.msra.mxu0 0.0
        %261 = vmatprep.subr.mxu0 0.0
        %262 = vmatpush1.msra.mxu0 0.0
        %263 = vmatprep.subr.mxu0 0.0
        %264 = vmatpush1.msra.mxu0 0.0
        %265 = vmatprep.subr.mxu0 0.0
        %266 = vmatpush1.msra.mxu0 0.0
        %267 = vmatprep.subr.mxu0 0.0
        %268 = vmatpush1.msra.mxu0 0.0
        %269 = vmatprep.subr.mxu0 0.0
        %270 = vmatpush1.msra.mxu0 0.0
        %271 = vmatprep.subr.mxu0 0.0
        %272 = vmatpush1.msra.mxu0 0.0
        %273 = vmatprep.subr.mxu0 0.0
        %274 = vmatpush1.msra.mxu0 0.0
        %275 = vmatprep.mubr.f32.mxu0 0.0
        %276 = vmatmul.mubr.f32.gmra.mrb[0].mxu0 %v209
        %v277 = vpop.f32.mrb[0].mxu0
        %v278 = vadd.f32 %v205, %v277
        %v279 = vpop.f32.mrb[0].mxu0
        %280 = vdwg.mxu0
        %vm281 = vcmask 130048
        %v282 = vsel %vm281, %v278, -inf
        %283 = vmax.xlane.f32.xlu0 %v282
        %v284 = vpop.xlane.xlu0 %283
        %v285 = vsub.f32 %v278, %v284
        %v286 = vmul.f32 %v285, 1.442695
        %v287 = vpow.pop %v286
        %v288 = vsel %vm281, %v287, 0.0
        %289 = vadd.xlane.f32.xlu0 %v288
        %v290 = vpop.xlane.xlu0 %289
        %v291 = vrcp.pop %v290
        %v292 = vmul.f32 %v287, %v291
        %293 = vst.msk [vmem:[%s183] sm:$0xff] %vm281, %v292
        %s294 = sand.u32 %s109, 1
        %s295 = scalar_lea.sflag [#allocation3], %s294
        %s296 = sand.u32 %s109, 1
        %s297 = smul.addr %s296, 8
        %s298 = scalar_lea.vmem [#allocation2], %s297
        // Predicated region
        $region33: #{gpt_forward.7} parent=31 // pred_check
          %p299 = pneg %p119
        $region34: #{gpt_forward.7} parent=31 // pred_check_branch
          %301 = sbr.rel (%p299) target = $region36
        $region35: #{gpt_forward.7} parent=31 // pred_region
          %s303 = ssub.s32 128, 128
          %304 = vsyncadd %s295, %s303
          %s305 = sadd.s32 %s22, %s21
          %s306 = smul.addr %s305, 128
          %s307 = scalar_lea.hbm %s3, %s306
          %s309 = sshll.u32 %s298, 4
          %s310 = int_to_ptr.vmem [resolvable:$true] %s309
          %312 = dma.vmem_to_hbm [thread:$0]  %s310, 128, %s307, %s295
        $region36: #{gpt_forward.7} parent=31 // pred_fallthru
          _
      $region32: #{gpt_forward.7} parent=5 // pred_fallthru
        _
      %p313 = scmp.le.s32.totalorder 2, %s12
      // Predicated region
      $region37: #{gpt_forward.7} parent=5 // pred_check
        %p314 = pneg %p313
      $region38: #{gpt_forward.7} parent=5 // pred_check_branch
        %316 = sbr.rel (%p314) target = $region40
      $region39: #{gpt_forward.7} parent=5 // pred_region
        %s317 = ssub.s32 %s12, 2
        // Predicated region
        $region41: #{gpt_forward.7} parent=39 // pred_check
          %p318 = pneg %p125
        $region42: #{gpt_forward.7} parent=39 // pred_check_branch
          %320 = sbr.rel (%p318) target = $region44
        $region43: #{gpt_forward.7} parent=39 // pred_region
          %s321 = sand.u32 %s110, 1
          %s322 = scalar_lea.sflag [#allocation3], %s321
          %s323 = sand.u32 %s110, 1
          %s324 = smul.addr %s323, 8
          %s325 = scalar_lea.vmem [#allocation2], %s324
          %326 = dma.done %s322, 128
        $region44: #{gpt_forward.7} parent=39 // pred_fallthru
          _
      $region40: #{gpt_forward.7} parent=5 // pred_fallthru
        _
    $region6: #{gpt_forward.7} parent=1 // loop_footer
      %s16 = sadd.s32 1, %s12
    $region7: #{gpt_forward.7} parent=1 // loop_footer_branch
      %11 = sbr.rel target = $region3
    $region8: #{gpt_forward.7} parent=1 // loop_exit
      _
    %327 = vsyncpa [#allocation3], 1
    %s328 = scalar_lea.sflag [#allocation3], 1
    %329 = vsyncpa %s328, 1

// kernel: gpt_forward.5
$region0: #{gpt_forward.5}
  #allocation0 [shape = 'u32[]', space=smem, size = 0x4, offset = 0x4, fixed_abs, tag = 'smem constant byte address 0x4 - core index']
  #allocation1 [shape = 'u32[144,128]{1,0:T(1,128)}', space=vmem, size = 0x12000, scoped, tag = 'internal scratch']
  %s0 = inlined_call_operand.vmem [shape: f32[2,8,64], index: 0, kind: input, shape index: {}]
  %s1 = inlined_call_operand.vmem [shape: f32[64,64], index: 1, kind: input, shape index: {}]
  %s2 = inlined_call_operand.vmem [shape: f32[1,64], index: 2, kind: input, shape index: {}]
  %s3 = inlined_call_operand.vmem [shape: f32[64,64], index: 3, kind: input, shape index: {}]
  %s4 = inlined_call_operand.vmem [shape: f32[1,64], index: 4, kind: input, shape index: {}]
  %s5 = inlined_call_operand.vmem [shape: f32[64,64], index: 5, kind: input, shape index: {}]
  %s6 = inlined_call_operand.vmem [shape: f32[1,64], index: 6, kind: input, shape index: {}]
  %s7 = inlined_call_operand.vmem [shape: f32[512,64], index: 7, kind: input, shape index: {}]
  %s8 = inlined_call_operand.vmem [shape: f32[1,64], index: 8, kind: input, shape index: {}]
  %s9 = inlined_call_operand.vmem [shape: f32[1,64], index: 9, kind: input, shape index: {}]
  %s10 = inlined_call_operand.vmem [shape: f32[1,64], index: 10, kind: input, shape index: {}]
  %s11 = inlined_call_operand.vmem [shape: f32[64,256], index: 11, kind: input, shape index: {}]
  %s12 = inlined_call_operand.vmem [shape: f32[1,256], index: 12, kind: input, shape index: {}]
  %s13 = inlined_call_operand.vmem [shape: f32[256,64], index: 13, kind: input, shape index: {}]
  %s14 = inlined_call_operand.vmem [shape: f32[1,64], index: 14, kind: input, shape index: {}]
  %s15 = inlined_call_operand.vmem [shape: f32[1,64], index: 15, kind: input, shape index: {}]
  %s16 = inlined_call_operand.vmem [shape: f32[1,64], index: 16, kind: input, shape index: {}]
  %s17 = inlined_call_operand.vmem [shape: f32[2,8,64], index: 17, kind: output, shape index: {}]
  %s18 = sld [smem:[#allocation0]]
  $region101: #{gpt_forward.5} parent=0
    _
  %s20 = ssub.s32 1, %s18
  %s21 = scalar_select 0, %s20, %s18
  loop: start=0, step=1, limit=4
  $region2: #{gpt_forward.5} parent=0 // loop_pre_header
    _
  $region3: #{gpt_forward.5} parent=0 // loop_header
    %s23 = sphi 0, %s27
    %p24 = scmp.ge.s32.totalorder %s23, 4
    %s33 = sphi 0, %s35
    %s36 = sphi 0, %s33
    %s37 = sphi 0, %s36
    %s53 = sphi 0, %s37
    %s57 = sphi 0, %s57
    %s59 = sphi 0, %s57
    %s60 = sphi 0, %s59
    %s74 = sphi 0, %s60
    %s78 = sphi 0, %s78
    %s80 = sphi 0, %s78
    %s81 = sphi 0, %s80
    %s95 = sphi 0, %s81
    %s99 = sphi 0, %s99
    %s101 = sphi 0, %s99
    %s102 = sphi 0, %s101
    %s116 = sphi 0, %s102
    %s120 = sphi 0, %s120
    %s122 = sphi 0, %s120
    %s123 = sphi 0, %s122
    %s137 = sphi 0, %s123
    %s141 = sphi 0, %s141
    %s143 = sphi 0, %s141
    %s144 = sphi 0, %s143
    %s158 = sphi 0, %s144
    %s162 = sphi 0, %s162
    %s164 = sphi 0, %s162
    %s165 = sphi 0, %s164
    %s179 = sphi 0, %s165
    %s183 = sphi 0, %s183
    %s185 = sphi 0, %s183
    %s186 = sphi 0, %s185
    %s200 = sphi 0, %s186
    %s204 = sphi 0, %s204
    %s206 = sphi 0, %s204
    %s207 = sphi 0, %s206
    %s221 = sphi 0, %s207
    %s225 = sphi 0, %s225
    %s227 = sphi 0, %s225
    %s228 = sphi 0, %s227
    %s242 = sphi 0, %s228
    %s246 = sphi 0, %s246
    %s248 = sphi 0, %s246
    %s249 = sphi 0, %s248
    %s263 = sphi 0, %s249
    %s267 = sphi 0, %s267
    %s269 = sphi 0, %s267
    %s270 = sphi 0, %s269
    %s284 = sphi 0, %s270
    %s288 = sphi 0, %s288
    %s290 = sphi 0, %s288
    %s291 = sphi 0, %s290
    %s305 = sphi 0, %s291
    %s309 = sphi 0, %s309
    %s311 = sphi 0, %s309
    %s312 = sphi 0, %s311
    %s326 = sphi 0, %s312
    %s330 = sphi 0, %s330
    %s332 = sphi 0, %s330
    %s333 = sphi 0, %s332
    %s347 = sphi 0, %s333
    %s351 = sphi 0, %s351
    %s353 = sphi 0, %s351
    %s354 = sphi 0, %s353
    %s368 = sphi 0, %s354
    %s372 = sphi 0, %s372
    %s374 = sphi 0, %s372
    %s375 = sphi 0, %s374
    %s389 = sphi 0, %s375
    %s395 = sphi 0, %s397
    %s398 = sphi 0, %s395
    %s399 = sphi 0, %s398
    %s415 = sphi 0, %s399
  $region4: #{gpt_forward.5} parent=0 // loop_header_branch
    %26 = sbr.rel (%p24) target = $region8
  $region5: #{gpt_forward.5} parent=0 // loop_body
    %s28 = ssub.s32 %s23, 1
    %s29 = ssub.s32 %s23, 2
    %s30 = sadd.s32 %s23, 1
    %s31 = ssub.s32 %s23, %s30
    %p32 = scmp.eq.s32.totalorder %s31, 0
    %s34 = sadd.s32 %s33, 1
    %s35 = scalar_select %p32, %s33, %s34
    %p38 = pneg %p32
    %p39 = scmp.eq.s32.totalorder %s23, 1
    %p40 = por %p38, %p39
    %p41 = scmp.ne.s32.totalorder %s33, %s36
    %p42 = scmp.eq.s32.totalorder %s23, 0
    %p43 = por %p41, %p42
    %p44 = scmp.ne.s32.totalorder %s33, %s36
    %p45 = scmp.eq.s32.totalorder %s28, 1
    %p46 = por %p44, %p45
    %p47 = scmp.ne.s32.totalorder %s36, %s37
    %p48 = scmp.eq.s32.totalorder %s28, 0
    %p49 = por %p47, %p48
    %p50 = scmp.ne.s32.totalorder %s36, %s37
    %p51 = scmp.eq.s32.totalorder %s29, 1
    %p52 = por %p50, %p51
    %p54 = scmp.ne.s32.totalorder %s37, %s53
    %p55 = scmp.eq.s32.totalorder %s29, 0
    %p56 = por %p54, %p55
    %s58 = sadd.s32 %s57, 1
    %p61 = scmp.eq.s32.totalorder %s23, 1
    %p62 = scmp.ne.s32.totalorder %s57, %s59
    %p63 = scmp.eq.s32.totalorder %s23, 0
    %p64 = por %p62, %p63
    %p65 = scmp.ne.s32.totalorder %s57, %s59
    %p66 = scmp.eq.s32.totalorder %s28, 1
    %p67 = por %p65, %p66
    %p68 = scmp.ne.s32.totalorder %s59, %s60
    %p69 = scmp.eq.s32.totalorder %s28, 0
    %p70 = por %p68, %p69
    %p71 = scmp.ne.s32.totalorder %s59, %s60
    %p72 = scmp.eq.s32.totalorder %s29, 1
    %p73 = por %p71, %p72
    %p75 = scmp.ne.s32.totalorder %s60, %s74
    %p76 = scmp.eq.s32.totalorder %s29, 0
    %p77 = por %p75, %p76
    %s79 = sadd.s32 %s78, 1
    %p82 = scmp.eq.s32.totalorder %s23, 1
    %p83 = scmp.ne.s32.totalorder %s78, %s80
    %p84 = scmp.eq.s32.totalorder %s23, 0
    %p85 = por %p83, %p84
    %p86 = scmp.ne.s32.totalorder %s78, %s80
    %p87 = scmp.eq.s32.totalorder %s28, 1
    %p88 = por %p86, %p87
    %p89 = scmp.ne.s32.totalorder %s80, %s81
    %p90 = scmp.eq.s32.totalorder %s28, 0
    %p91 = por %p89, %p90
    %p92 = scmp.ne.s32.totalorder %s80, %s81
    %p93 = scmp.eq.s32.totalorder %s29, 1
    %p94 = por %p92, %p93
    %p96 = scmp.ne.s32.totalorder %s81, %s95
    %p97 = scmp.eq.s32.totalorder %s29, 0
    %p98 = por %p96, %p97
    %s100 = sadd.s32 %s99, 1
    %p103 = scmp.eq.s32.totalorder %s23, 1
    %p104 = scmp.ne.s32.totalorder %s99, %s101
    %p105 = scmp.eq.s32.totalorder %s23, 0
    %p106 = por %p104, %p105
    %p107 = scmp.ne.s32.totalorder %s99, %s101
    %p108 = scmp.eq.s32.totalorder %s28, 1
    %p109 = por %p107, %p108
    %p110 = scmp.ne.s32.totalorder %s101, %s102
    %p111 = scmp.eq.s32.totalorder %s28, 0
    %p112 = por %p110, %p111
    %p113 = scmp.ne.s32.totalorder %s101, %s102
    %p114 = scmp.eq.s32.totalorder %s29, 1
    %p115 = por %p113, %p114
    %p117 = scmp.ne.s32.totalorder %s102, %s116
    %p118 = scmp.eq.s32.totalorder %s29, 0
    %p119 = por %p117, %p118
    %s121 = sadd.s32 %s120, 1
    %p124 = scmp.eq.s32.totalorder %s23, 1
    %p125 = scmp.ne.s32.totalorder %s120, %s122
    %p126 = scmp.eq.s32.totalorder %s23, 0
    %p127 = por %p125, %p126
    %p128 = scmp.ne.s32.totalorder %s120, %s122
    %p129 = scmp.eq.s32.totalorder %s28, 1
    %p130 = por %p128, %p129
    %p131 = scmp.ne.s32.totalorder %s122, %s123
    %p132 = scmp.eq.s32.totalorder %s28, 0
    %p133 = por %p131, %p132
    %p134 = scmp.ne.s32.totalorder %s122, %s123
    %p135 = scmp.eq.s32.totalorder %s29, 1
    %p136 = por %p134, %p135
    %p138 = scmp.ne.s32.totalorder %s123, %s137
    %p139 = scmp.eq.s32.totalorder %s29, 0
    %p140 = por %p138, %p139
    %s142 = sadd.s32 %s141, 1
    %p145 = scmp.eq.s32.totalorder %s23, 1
    %p146 = scmp.ne.s32.totalorder %s141, %s143
    %p147 = scmp.eq.s32.totalorder %s23, 0
    %p148 = por %p146, %p147
    %p149 = scmp.ne.s32.totalorder %s141, %s143
    %p150 = scmp.eq.s32.totalorder %s28, 1
    %p151 = por %p149, %p150
    %p152 = scmp.ne.s32.totalorder %s143, %s144
    %p153 = scmp.eq.s32.totalorder %s28, 0
    %p154 = por %p152, %p153
    %p155 = scmp.ne.s32.totalorder %s143, %s144
    %p156 = scmp.eq.s32.totalorder %s29, 1
    %p157 = por %p155, %p156
    %p159 = scmp.ne.s32.totalorder %s144, %s158
    %p160 = scmp.eq.s32.totalorder %s29, 0
    %p161 = por %p159, %p160
    %s163 = sadd.s32 %s162, 1
    %p166 = scmp.eq.s32.totalorder %s23, 1
    %p167 = scmp.ne.s32.totalorder %s162, %s164
    %p168 = scmp.eq.s32.totalorder %s23, 0
    %p169 = por %p167, %p168
    %p170 = scmp.ne.s32.totalorder %s162, %s164
    %p171 = scmp.eq.s32.totalorder %s28, 1
    %p172 = por %p170, %p171
    %p173 = scmp.ne.s32.totalorder %s164, %s165
    %p174 = scmp.eq.s32.totalorder %s28, 0
    %p175 = por %p173, %p174
    %p176 = scmp.ne.s32.totalorder %s164, %s165
    %p177 = scmp.eq.s32.totalorder %s29, 1
    %p178 = por %p176, %p177
    %p180 = scmp.ne.s32.totalorder %s165, %s179
    %p181 = scmp.eq.s32.totalorder %s29, 0
    %p182 = por %p180, %p181
    %s184 = sadd.s32 %s183, 1
    %p187 = scmp.eq.s32.totalorder %s23, 1
    %p188 = scmp.ne.s32.totalorder %s183, %s185
    %p189 = scmp.eq.s32.totalorder %s23, 0
    %p190 = por %p188, %p189
    %p191 = scmp.ne.s32.totalorder %s183, %s185
    %p192 = scmp.eq.s32.totalorder %s28, 1
    %p193 = por %p191, %p192
    %p194 = scmp.ne.s32.totalorder %s185, %s186
    %p195 = scmp.eq.s32.totalorder %s28, 0
    %p196 = por %p194, %p195
    %p197 = scmp.ne.s32.totalorder %s185, %s186
    %p198 = scmp.eq.s32.totalorder %s29, 1
    %p199 = por %p197, %p198
    %p201 = scmp.ne.s32.totalorder %s186, %s200
    %p202 = scmp.eq.s32.totalorder %s29, 0
    %p203 = por %p201, %p202
    %s205 = sadd.s32 %s204, 1
    %p208 = scmp.eq.s32.totalorder %s23, 1
    %p209 = scmp.ne.s32.totalorder %s204, %s206
    %p210 = scmp.eq.s32.totalorder %s23, 0
    %p211 = por %p209, %p210
    %p212 = scmp.ne.s32.totalorder %s204, %s206
    %p213 = scmp.eq.s32.totalorder %s28, 1
    %p214 = por %p212, %p213
    %p215 = scmp.ne.s32.totalorder %s206, %s207
    %p216 = scmp.eq.s32.totalorder %s28, 0
    %p217 = por %p215, %p216
    %p218 = scmp.ne.s32.totalorder %s206, %s207
    %p219 = scmp.eq.s32.totalorder %s29, 1
    %p220 = por %p218, %p219
    %p222 = scmp.ne.s32.totalorder %s207, %s221
    %p223 = scmp.eq.s32.totalorder %s29, 0
    %p224 = por %p222, %p223
    %s226 = sadd.s32 %s225, 1
    %p229 = scmp.eq.s32.totalorder %s23, 1
    %p230 = scmp.ne.s32.totalorder %s225, %s227
    %p231 = scmp.eq.s32.totalorder %s23, 0
    %p232 = por %p230, %p231
    %p233 = scmp.ne.s32.totalorder %s225, %s227
    %p234 = scmp.eq.s32.totalorder %s28, 1
    %p235 = por %p233, %p234
    %p236 = scmp.ne.s32.totalorder %s227, %s228
    %p237 = scmp.eq.s32.totalorder %s28, 0
    %p238 = por %p236, %p237
    %p239 = scmp.ne.s32.totalorder %s227, %s228
    %p240 = scmp.eq.s32.totalorder %s29, 1
    %p241 = por %p239, %p240
    %p243 = scmp.ne.s32.totalorder %s228, %s242
    %p244 = scmp.eq.s32.totalorder %s29, 0
    %p245 = por %p243, %p244
    %s247 = sadd.s32 %s246, 1
    %p250 = scmp.eq.s32.totalorder %s23, 1
    %p251 = scmp.ne.s32.totalorder %s246, %s248
    %p252 = scmp.eq.s32.totalorder %s23, 0
    %p253 = por %p251, %p252
    %p254 = scmp.ne.s32.totalorder %s246, %s248
    %p255 = scmp.eq.s32.totalorder %s28, 1
    %p256 = por %p254, %p255
    %p257 = scmp.ne.s32.totalorder %s248, %s249
    %p258 = scmp.eq.s32.totalorder %s28, 0
    %p259 = por %p257, %p258
    %p260 = scmp.ne.s32.totalorder %s248, %s249
    %p261 = scmp.eq.s32.totalorder %s29, 1
    %p262 = por %p260, %p261
    %p264 = scmp.ne.s32.totalorder %s249, %s263
    %p265 = scmp.eq.s32.totalorder %s29, 0
    %p266 = por %p264, %p265
    %s268 = sadd.s32 %s267, 1
    %p271 = scmp.eq.s32.totalorder %s23, 1
    %p272 = scmp.ne.s32.totalorder %s267, %s269
    %p273 = scmp.eq.s32.totalorder %s23, 0
    %p274 = por %p272, %p273
    %p275 = scmp.ne.s32.totalorder %s267, %s269
    %p276 = scmp.eq.s32.totalorder %s28, 1
    %p277 = por %p275, %p276
    %p278 = scmp.ne.s32.totalorder %s269, %s270
    %p279 = scmp.eq.s32.totalorder %s28, 0
    %p280 = por %p278, %p279
    %p281 = scmp.ne.s32.totalorder %s269, %s270
    %p282 = scmp.eq.s32.totalorder %s29, 1
    %p283 = por %p281, %p282
    %p285 = scmp.ne.s32.totalorder %s270, %s284
    %p286 = scmp.eq.s32.totalorder %s29, 0
    %p287 = por %p285, %p286
    %s289 = sadd.s32 %s288, 1
    %p292 = scmp.eq.s32.totalorder %s23, 1
    %p293 = scmp.ne.s32.totalorder %s288, %s290
    %p294 = scmp.eq.s32.totalorder %s23, 0
    %p295 = por %p293, %p294
    %p296 = scmp.ne.s32.totalorder %s288, %s290
    %p297 = scmp.eq.s32.totalorder %s28, 1
    %p298 = por %p296, %p297
    %p299 = scmp.ne.s32.totalorder %s290, %s291
    %p300 = scmp.eq.s32.totalorder %s28, 0
    %p301 = por %p299, %p300
    %p302 = scmp.ne.s32.totalorder %s290, %s291
    %p303 = scmp.eq.s32.totalorder %s29, 1
    %p304 = por %p302, %p303
    %p306 = scmp.ne.s32.totalorder %s291, %s305
    %p307 = scmp.eq.s32.totalorder %s29, 0
    %p308 = por %p306, %p307
    %s310 = sadd.s32 %s309, 1
    %p313 = scmp.eq.s32.totalorder %s23, 1
    %p314 = scmp.ne.s32.totalorder %s309, %s311
    %p315 = scmp.eq.s32.totalorder %s23, 0
    %p316 = por %p314, %p315
    %p317 = scmp.ne.s32.totalorder %s309, %s311
    %p318 = scmp.eq.s32.totalorder %s28, 1
    %p319 = por %p317, %p318
    %p320 = scmp.ne.s32.totalorder %s311, %s312
    %p321 = scmp.eq.s32.totalorder %s28, 0
    %p322 = por %p320, %p321
    %p323 = scmp.ne.s32.totalorder %s311, %s312
    %p324 = scmp.eq.s32.totalorder %s29, 1
    %p325 = por %p323, %p324
    %p327 = scmp.ne.s32.totalorder %s312, %s326
    %p328 = scmp.eq.s32.totalorder %s29, 0
    %p329 = por %p327, %p328
    %s331 = sadd.s32 %s330, 1
    %p334 = scmp.eq.s32.totalorder %s23, 1
    %p335 = scmp.ne.s32.totalorder %s330, %s332
    %p336 = scmp.eq.s32.totalorder %s23, 0
    %p337 = por %p335, %p336
    %p338 = scmp.ne.s32.totalorder %s330, %s332
    %p339 = scmp.eq.s32.totalorder %s28, 1
    %p340 = por %p338, %p339
    %p341 = scmp.ne.s32.totalorder %s332, %s333
    %p342 = scmp.eq.s32.totalorder %s28, 0
    %p343 = por %p341, %p342
    %p344 = scmp.ne.s32.totalorder %s332, %s333
    %p345 = scmp.eq.s32.totalorder %s29, 1
    %p346 = por %p344, %p345
    %p348 = scmp.ne.s32.totalorder %s333, %s347
    %p349 = scmp.eq.s32.totalorder %s29, 0
    %p350 = por %p348, %p349
    %s352 = sadd.s32 %s351, 1
    %p355 = scmp.eq.s32.totalorder %s23, 1
    %p356 = scmp.ne.s32.totalorder %s351, %s353
    %p357 = scmp.eq.s32.totalorder %s23, 0
    %p358 = por %p356, %p357
    %p359 = scmp.ne.s32.totalorder %s351, %s353
    %p360 = scmp.eq.s32.totalorder %s28, 1
    %p361 = por %p359, %p360
    %p362 = scmp.ne.s32.totalorder %s353, %s354
    %p363 = scmp.eq.s32.totalorder %s28, 0
    %p364 = por %p362, %p363
    %p365 = scmp.ne.s32.totalorder %s353, %s354
    %p366 = scmp.eq.s32.totalorder %s29, 1
    %p367 = por %p365, %p366
    %p369 = scmp.ne.s32.totalorder %s354, %s368
    %p370 = scmp.eq.s32.totalorder %s29, 0
    %p371 = por %p369, %p370
    %s373 = sadd.s32 %s372, 1
    %p376 = scmp.eq.s32.totalorder %s23, 1
    %p377 = scmp.ne.s32.totalorder %s372, %s374
    %p378 = scmp.eq.s32.totalorder %s23, 0
    %p379 = por %p377, %p378
    %p380 = scmp.ne.s32.totalorder %s372, %s374
    %p381 = scmp.eq.s32.totalorder %s28, 1
    %p382 = por %p380, %p381
    %p383 = scmp.ne.s32.totalorder %s374, %s375
    %p384 = scmp.eq.s32.totalorder %s28, 0
    %p385 = por %p383, %p384
    %p386 = scmp.ne.s32.totalorder %s374, %s375
    %p387 = scmp.eq.s32.totalorder %s29, 1
    %p388 = por %p386, %p387
    %p390 = scmp.ne.s32.totalorder %s375, %s389
    %p391 = scmp.eq.s32.totalorder %s29, 0
    %p392 = por %p390, %p391
    %s393 = ssub.s32 %s23, %s30
    %p394 = scmp.eq.s32.totalorder %s393, 0
    %s396 = sadd.s32 %s395, 1
    %s397 = scalar_select %p394, %s395, %s396
    %p400 = pneg %p394
    %p401 = scmp.eq.s32.totalorder %s23, 1
    %p402 = por %p400, %p401
    %p403 = scmp.ne.s32.totalorder %s395, %s398
    %p404 = scmp.eq.s32.totalorder %s23, 0
    %p405 = por %p403, %p404
    %p406 = scmp.ne.s32.totalorder %s395, %s398
    %p407 = scmp.eq.s32.totalorder %s28, 1
    %p408 = por %p406, %p407
    %p409 = scmp.ne.s32.totalorder %s398, %s399
    %p410 = scmp.eq.s32.totalorder %s28, 0
    %p411 = por %p409, %p410
    %p412 = scmp.ne.s32.totalorder %s398, %s399
    %p413 = scmp.eq.s32.totalorder %s29, 1
    %p414 = por %p412, %p413
    %p416 = scmp.ne.s32.totalorder %s399, %s415
    %p417 = scmp.eq.s32.totalorder %s29, 0
    %p418 = por %p416, %p417
    %p419 = scmp.le.s32.totalorder 1, %s23
    %p420 = scmp.lt.s32.totalorder %s23, 3
    %p421 = pnand %p419, %p420
    %p422 = pneg %p421
    // Predicated region
    $region9: #{gpt_forward.5} parent=5 // pred_check
      _
    $region10: #{gpt_forward.5} parent=5 // pred_check_branch
      %424 = sbr.rel (%p421) target = $region12
    $region11: #{gpt_forward.5} parent=5 // pred_region
      %s425 = ssub.s32 %s23, 1
      // Predicated region
      $region13: #{gpt_forward.5} parent=11 // pred_check
        %p426 = pneg %p70
      $region14: #{gpt_forward.5} parent=11 // pred_check_branch
        %428 = sbr.rel (%p426) target = $region16
      $region15: #{gpt_forward.5} parent=11 // pred_region
        _
      $region16: #{gpt_forward.5} parent=11 // pred_fallthru
        _
      // Predicated region
      $region17: #{gpt_forward.5} parent=11 // pred_check
        %p429 = pneg %p91
      $region18: #{gpt_forward.5} parent=11 // pred_check_branch
        %431 = sbr.rel (%p429) target = $region20
      $region19: #{gpt_forward.5} parent=11 // pred_region
        _
      $region20: #{gpt_forward.5} parent=11 // pred_fallthru
        _
      // Predicated region
      $region21: #{gpt_forward.5} parent=11 // pred_check
        %p432 = pneg %p112
      $region22: #{gpt_forward.5} parent=11 // pred_check_branch
        %434 = sbr.rel (%p432) target = $region24
      $region23: #{gpt_forward.5} parent=11 // pred_region
        _
      $region24: #{gpt_forward.5} parent=11 // pred_fallthru
        _
      // Predicated region
      $region25: #{gpt_forward.5} parent=11 // pred_check
        %p435 = pneg %p133
      $region26: #{gpt_forward.5} parent=11 // pred_check_branch
        %437 = sbr.rel (%p435) target = $region28
      $region27: #{gpt_forward.5} parent=11 // pred_region
        _
      $region28: #{gpt_forward.5} parent=11 // pred_fallthru
        _
      // Predicated region
      $region29: #{gpt_forward.5} parent=11 // pred_check
        %p438 = pneg %p154
      $region30: #{gpt_forward.5} parent=11 // pred_check_branch
        %440 = sbr.rel (%p438) target = $region32
      $region31: #{gpt_forward.5} parent=11 // pred_region
        _
      $region32: #{gpt_forward.5} parent=11 // pred_fallthru
        _
      // Predicated region
      $region33: #{gpt_forward.5} parent=11 // pred_check
        %p441 = pneg %p175
      $region34: #{gpt_forward.5} parent=11 // pred_check_branch
        %443 = sbr.rel (%p441) target = $region36
      $region35: #{gpt_forward.5} parent=11 // pred_region
        _
      $region36: #{gpt_forward.5} parent=11 // pred_fallthru
        _
      // Predicated region
      $region37: #{gpt_forward.5} parent=11 // pred_check
        %p444 = pneg %p196
      $region38: #{gpt_forward.5} parent=11 // pred_check_branch
        %446 = sbr.rel (%p444) target = $region40
      $region39: #{gpt_forward.5} parent=11 // pred_region
        _
      $region40: #{gpt_forward.5} parent=11 // pred_fallthru
        _
      // Predicated region
      $region41: #{gpt_forward.5} parent=11 // pred_check
        %p447 = pneg %p217
      $region42: #{gpt_forward.5} parent=11 // pred_check_branch
        %449 = sbr.rel (%p447) target = $region44
      $region43: #{gpt_forward.5} parent=11 // pred_region
        _
      $region44: #{gpt_forward.5} parent=11 // pred_fallthru
        _
      // Predicated region
      $region45: #{gpt_forward.5} parent=11 // pred_check
        %p450 = pneg %p238
      $region46: #{gpt_forward.5} parent=11 // pred_check_branch
        %452 = sbr.rel (%p450) target = $region48
      $region47: #{gpt_forward.5} parent=11 // pred_region
        _
      $region48: #{gpt_forward.5} parent=11 // pred_fallthru
        _
      // Predicated region
      $region49: #{gpt_forward.5} parent=11 // pred_check
        %p453 = pneg %p259
      $region50: #{gpt_forward.5} parent=11 // pred_check_branch
        %455 = sbr.rel (%p453) target = $region52
      $region51: #{gpt_forward.5} parent=11 // pred_region
        _
      $region52: #{gpt_forward.5} parent=11 // pred_fallthru
        _
      // Predicated region
      $region53: #{gpt_forward.5} parent=11 // pred_check
        %p456 = pneg %p280
      $region54: #{gpt_forward.5} parent=11 // pred_check_branch
        %458 = sbr.rel (%p456) target = $region56
      $region55: #{gpt_forward.5} parent=11 // pred_region
        _
      $region56: #{gpt_forward.5} parent=11 // pred_fallthru
        _
      // Predicated region
      $region57: #{gpt_forward.5} parent=11 // pred_check
        %p459 = pneg %p301
      $region58: #{gpt_forward.5} parent=11 // pred_check_branch
        %461 = sbr.rel (%p459) target = $region60
      $region59: #{gpt_forward.5} parent=11 // pred_region
        _
      $region60: #{gpt_forward.5} parent=11 // pred_fallthru
        _
      // Predicated region
      $region61: #{gpt_forward.5} parent=11 // pred_check
        %p462 = pneg %p322
      $region62: #{gpt_forward.5} parent=11 // pred_check_branch
        %464 = sbr.rel (%p462) target = $region64
      $region63: #{gpt_forward.5} parent=11 // pred_region
        _
      $region64: #{gpt_forward.5} parent=11 // pred_fallthru
        _
      // Predicated region
      $region65: #{gpt_forward.5} parent=11 // pred_check
        %p465 = pneg %p343
      $region66: #{gpt_forward.5} parent=11 // pred_check_branch
        %467 = sbr.rel (%p465) target = $region68
      $region67: #{gpt_forward.5} parent=11 // pred_region
        _
      $region68: #{gpt_forward.5} parent=11 // pred_fallthru
        _
      // Predicated region
      $region69: #{gpt_forward.5} parent=11 // pred_check
        %p468 = pneg %p364
      $region70: #{gpt_forward.5} parent=11 // pred_check_branch
        %470 = sbr.rel (%p468) target = $region72
      $region71: #{gpt_forward.5} parent=11 // pred_region
        _
      $region72: #{gpt_forward.5} parent=11 // pred_fallthru
        _
      // Predicated region
      $region73: #{gpt_forward.5} parent=11 // pred_check
        %p471 = pneg %p385
      $region74: #{gpt_forward.5} parent=11 // pred_check_branch
        %473 = sbr.rel (%p471) target = $region76
      $region75: #{gpt_forward.5} parent=11 // pred_region
        _
      $region76: #{gpt_forward.5} parent=11 // pred_fallthru
        _
    $region12: #{gpt_forward.5} parent=5 // pred_fallthru
      _
    %p474 = scmp.lt.s32.totalorder %s23, 2
    // Predicated region
    $region77: #{gpt_forward.5} parent=5 // pred_check
      %p475 = pneg %p474
    $region78: #{gpt_forward.5} parent=5 // pred_check_branch
      %477 = sbr.rel (%p475) target = $region80
    $region79: #{gpt_forward.5} parent=5 // pred_region
      // Predicated region
      $region81: #{gpt_forward.5} parent=79 // pred_check
        %p478 = pneg %p43
      $region82: #{gpt_forward.5} parent=79 // pred_check_branch
        %480 = sbr.rel (%p478) target = $region84
      $region83: #{gpt_forward.5} parent=79 // pred_region
        %p481 = scmp.lt.s32.totalorder %s23, 1
        %s482 = scalar_select %p481, %s23, 1
        %s483 = smul.addr %s482, 8
        %s484 = scalar_lea.vmem %s0, %s483
      $region84: #{gpt_forward.5} parent=79 // pred_fallthru
        _
    $region80: #{gpt_forward.5} parent=5 // pred_fallthru
      _
    %p485 = scmp.le.s32.totalorder 1, %s23
    %p486 = scmp.lt.s32.totalorder %s23, 3
    %p487 = pnand %p485, %p486
    %p488 = pneg %p487
    // Predicated region
    $region85: #{gpt_forward.5} parent=5 // pred_check
      _
    $region86: #{gpt_forward.5} parent=5 // pred_check_branch
      %490 = sbr.rel (%p487) target = $region88
    $region87: #{gpt_forward.5} parent=5 // pred_region
      %s491 = ssub.s32 %s23, 1
      %p492 = scmp.lt.s32.totalorder %s28, 1
      %s493 = scalar_select %p492, %s28, 1
      %s494 = smul.addr %s493, 8
      %s495 = scalar_lea.vmem %s0, %s494
      %p496 = pneg %p49
      %p497 = pneg %p46
      %p498 = pneg %p70
      %p499 = pneg %p67
      %p500 = pneg %p91
      %p501 = pneg %p88
      %p502 = pneg %p112
      %p503 = pneg %p109
      %p504 = pneg %p133
      %p505 = pneg %p130
      %p506 = pneg %p154
      %p507 = pneg %p151
      %p508 = pneg %p175
      %p509 = pneg %p172
      %p510 = pneg %p196
      %p511 = pneg %p193
      %p512 = pneg %p217
      %p513 = pneg %p214
      %p514 = pneg %p238
      %p515 = pneg %p235
      %p516 = pneg %p259
      %p517 = pneg %p256
      %p518 = pneg %p280
      %p519 = pneg %p277
      %p520 = pneg %p301
      %p521 = pneg %p298
      %p522 = pneg %p322
      %p523 = pneg %p319
      %p524 = pneg %p343
      %p525 = pneg %p340
      %p526 = pneg %p364
      %p527 = pneg %p361
      %p528 = pneg %p385
      %p529 = pneg %p382
      %p530 = pneg %p411
      %p531 = pneg %p408
      %p532 = scmp.lt.s32.totalorder %s28, 1
      %s533 = scalar_select %p532, %s28, 1
      %s534 = smul.addr %s533, 8
      %s535 = scalar_lea.vmem %s17, %s534
      %p536 = scmp.lt.s32.totalorder %s28, 1
      %s537 = scalar_select %p536, %s28, 1
      %s538 = smul.addr %s537, 8
      %s539 = scalar_lea.vmem %s0, %s538
      %p540 = scmp.lt.s32.totalorder %s28, 1
      %s541 = scalar_select %p540, %s28, 1
      %s542 = smul.addr %s541, 8
      %s543 = scalar_lea.vmem %s17, %s542
      %v544 = vld [vmem:[%s539] sm:$0xff]
      %v545 = vld [vmem:[%s1] sm:$0xff]
      %v546 = vld [vmem:[%s1 + $0x8] sm:$0xff]
      %v547 = vld [vmem:[%s1 + $0x10] sm:$0xff]
      %v548 = vld [vmem:[%s1 + $0x18] sm:$0xff]
      %v549 = vld [vmem:[%s1 + $0x20] sm:$0xff]
      %v550 = vld [vmem:[%s1 + $0x28] sm:$0xff]
      %v551 = vld [vmem:[%s1 + $0x30] sm:$0xff]
      %v552 = vld [vmem:[%s1 + $0x38] sm:$0xff]
      %v553 = vld [vmem:[%s2] sm:$0x1]
      %v555 = vlaneseq
      %v556 = vshrl.u32 %v555, 7
      %v557 = vsub.s32 0, %v556
      %v558 = vrot.slane %v553, %v557
      %vm560 = vcmask 523264
      %v562 = vsel %vm560, %v544, 0
      %564 = vmatprep.subr.mxu0 0.0
      %565 = vmatpush1.msra.mxu0 %v545
      %566 = vmatprep.subr.mxu0 0.0
      %567 = vmatpush1.msra.mxu0 %v546
      %568 = vmatprep.subr.mxu0 0.0
      %569 = vmatpush1.msra.mxu0 %v547
      %570 = vmatprep.subr.mxu0 0.0
      %571 = vmatpush1.msra.mxu0 %v548
      %572 = vmatprep.subr.mxu0 0.0
      %573 = vmatpush1.msra.mxu0 %v549
      %574 = vmatprep.subr.mxu0 0.0
      %575 = vmatpush1.msra.mxu0 %v550
      %576 = vmatprep.subr.mxu0 0.0
      %577 = vmatpush1.msra.mxu0 %v551
      %578 = vmatprep.subr.mxu0 0.0
      %579 = vmatpush1.msra.mxu0 %v552
      %580 = vmatprep.subr.mxu0 0.0
      %581 = vmatpush1.msra.mxu0 0.0
      %582 = vmatprep.subr.mxu0 0.0
      %583 = vmatpush1.msra.mxu0 0.0
      %584 = vmatprep.subr.mxu0 0.0
      %585 = vmatpush1.msra.mxu0 0.0
      %586 = vmatprep.subr.mxu0 0.0
      %587 = vmatpush1.msra.mxu0 0.0
      %588 = vmatprep.subr.mxu0 0.0
      %589 = vmatpush1.msra.mxu0 0.0
      %590 = vmatprep.subr.mxu0 0.0
      %591 = vmatpush1.msra.mxu0 0.0
      %592 = vmatprep.subr.mxu0 0.0
      %593 = vmatpush1.msra.mxu0 0.0
      %594 = vmatprep.subr.mxu0 0.0
      %595 = vmatpush1.msra.mxu0 0.0
      %596 = vmatprep.subr.mxu0 0.0
      %597 = vmatpush1.msra.mxu0 0.0
      %598 = vmatprep.subr.mxu0 0.0
      %599 = vmatpush1.msra.mxu0 0.0
      %600 = vmatprep.subr.mxu0 0.0
      %601 = vmatpush1.msra.mxu0 0.0
      %602 = vmatprep.subr.mxu0 0.0
      %603 = vmatpush1.msra.mxu0 0.0
      %604 = vmatprep.subr.mxu0 0.0
      %605 = vmatpush1.msra.mxu0 0.0
      %606 = vmatprep.subr.mxu0 0.0
      %607 = vmatpush1.msra.mxu0 0.0
      %608 = vmatprep.subr.mxu0 0.0
      %609 = vmatpush1.msra.mxu0 0.0
      %610 = vmatprep.subr.mxu0 0.0
      %611 = vmatpush1.msra.mxu0 0.0
      %612 = vmatprep.subr.mxu0 0.0
      %613 = vmatpush1.msra.mxu0 0.0
      %614 = vmatprep.subr.mxu0 0.0
      %615 = vmatpush1.msra.mxu0 0.0
      %616 = vmatprep.subr.mxu0 0.0
      %617 = vmatpush1.msra.mxu0 0.0
      %618 = vmatprep.subr.mxu0 0.0
      %619 = vmatpush1.msra.mxu0 0.0
      %620 = vmatprep.subr.mxu0 0.0
      %621 = vmatpush1.msra.mxu0 0.0
      %622 = vmatprep.subr.mxu0 0.0
      %623 = vmatpush1.msra.mxu0 0.0
      %624 = vmatprep.subr.mxu0 0.0
      %625 = vmatpush1.msra.mxu0 0.0
      %626 = vmatprep.subr.mxu0 0.0
      %627 = vmatpush1.msra.mxu0 0.0
      %628 = vmatprep.mubr.f32.mxu0 0.0
      %629 = vmatmul.mubr.f32.gmra.mrb[0].mxu0 %v562
      %v630 = vpop.f32.mrb[0].mxu0
      %v631 = vadd.f32 %v558, %v630
      %v632 = vpop.f32.mrb[0].mxu0
      %633 = vdwg.mxu0
      %v634 = vld [vmem:[%s3] sm:$0xff]
      %v635 = vld [vmem:[%s3 + $0x8] sm:$0xff]
      %v636 = vld [vmem:[%s3 + $0x10] sm:$0xff]
      %v637 = vld [vmem:[%s3 + $0x18] sm:$0xff]
      %v638 = vld [vmem:[%s3 + $0x20] sm:$0xff]
      %v639 = vld [vmem:[%s3 + $0x28] sm:$0xff]
      %v640 = vld [vmem:[%s3 + $0x30] sm:$0xff]
      %v641 = vld [vmem:[%s3 + $0x38] sm:$0xff]
      %v642 = vld [vmem:[%s4] sm:$0x1]
      %v644 = vlaneseq
      %v645 = vshrl.u32 %v644, 7
      %v646 = vsub.s32 0, %v645
      %v647 = vrot.slane %v642, %v646
      %649 = vmatprep.subr.mxu0 0.0
      %650 = vmatpush1.msra.mxu0 %v634
      %651 = vmatprep.subr.mxu0 0.0
      %652 = vmatpush1.msra.mxu0 %v635
      %653 = vmatprep.subr.mxu0 0.0
      %654 = vmatpush1.msra.mxu0 %v636
      %655 = vmatprep.subr.mxu0 0.0
      %656 = vmatpush1.msra.mxu0 %v637
      %657 = vmatprep.subr.mxu0 0.0
      %658 = vmatpush1.msra.mxu0 %v638
      %659 = vmatprep.subr.mxu0 0.0
      %660 = vmatpush1.msra.mxu0 %v639
      %661 = vmatprep.subr.mxu0 0.0
      %662 = vmatpush1.msra.mxu0 %v640
      %663 = vmatprep.subr.mxu0 0.0
      %664 = vmatpush1.msra.mxu0 %v641
      %665 = vmatprep.subr.mxu0 0.0
      %666 = vmatpush1.msra.mxu0 0.0
      %667 = vmatprep.subr.mxu0 0.0
      %668 = vmatpush1.msra.mxu0 0.0
      %669 = vmatprep.subr.mxu0 0.0
      %670 = vmatpush1.msra.mxu0 0.0
      %671 = vmatprep.subr.mxu0 0.0
      %672 = vmatpush1.msra.mxu0 0.0
      %673 = vmatprep.subr.mxu0 0.0
      %674 = vmatpush1.msra.mxu0 0.0
      %675 = vmatprep.subr.mxu0 0.0
      %676 = vmatpush1.msra.mxu0 0.0
      %677 = vmatprep.subr.mxu0 0.0
      %678 = vmatpush1.msra.mxu0 0.0
      %679 = vmatprep.subr.mxu0 0.0
      %680 = vmatpush1.msra.mxu0 0.0
      %681 = vmatprep.subr.mxu0 0.0
      %682 = vmatpush1.msra.mxu0 0.0
      %683 = vmatprep.subr.mxu0 0.0
      %684 = vmatpush1.msra.mxu0 0.0
      %685 = vmatprep.subr.mxu0 0.0
      %686 = vmatpush1.msra.mxu0 0.0
      %687 = vmatprep.subr.mxu0 0.0
      %688 = vmatpush1.msra.mxu0 0.0
      %689 = vmatprep.subr.mxu0 0.0
      %690 = vmatpush1.msra.mxu0 0.0
      %691 = vmatprep.subr.mxu0 0.0
      %692 = vmatpush1.msra.mxu0 0.0
      %693 = vmatprep.subr.mxu0 0.0
      %694 = vmatpush1.msra.mxu0 0.0
      %695 = vmatprep.subr.mxu0 0.0
      %696 = vmatpush1.msra.mxu0 0.0
      %697 = vmatprep.subr.mxu0 0.0
      %698 = vmatpush1.msra.mxu0 0.0
      %699 = vmatprep.subr.mxu0 0.0
      %700 = vmatpush1.msra.mxu0 0.0
      %701 = vmatprep.subr.mxu0 0.0
      %702 = vmatpush1.msra.mxu0 0.0
      %703 = vmatprep.subr.mxu0 0.0
      %704 = vmatpush1.msra.mxu0 0.0
      %705 = vmatprep.subr.mxu0 0.0
      %706 = vmatpush1.msra.mxu0 0.0
      %707 = vmatprep.subr.mxu0 0.0
      %708 = vmatpush1.msra.mxu0 0.0
      %709 = vmatprep.subr.mxu0 0.0
      %710 = vmatpush1.msra.mxu0 0.0
      %711 = vmatprep.subr.mxu0 0.0
      %712 = vmatpush1.msra.mxu0 0.0
      %713 = vmatprep.mubr.f32.mxu0 0.0
      %714 = vmatmul.mubr.f32.gmra.mrb[0].mxu0 %v562
      %v715 = vpop.f32.mrb[0].mxu0
      %v716 = vadd.f32 %v647, %v715
      %v717 = vpop.f32.mrb[0].mxu0
      %718 = vdwg.mxu0
      %v719 = vld [vmem:[%s5] sm:$0xff]
      %v720 = vld [vmem:[%s5 + $0x8] sm:$0xff]
      %v721 = vld [vmem:[%s5 + $0x10] sm:$0xff]
      %v722 = vld [vmem:[%s5 + $0x18] sm:$0xff]
      %v723 = vld [vmem:[%s5 + $0x20] sm:$0xff]
      %v724 = vld [vmem:[%s5 + $0x28] sm:$0xff]
      %v725 = vld [vmem:[%s5 + $0x30] sm:$0xff]
      %v726 = vld [vmem:[%s5 + $0x38] sm:$0xff]
      %v727 = vld [vmem:[%s6] sm:$0x1]
      %v729 = vlaneseq
      %v730 = vshrl.u32 %v729, 7
      %v731 = vsub.s32 0, %v730
      %v732 = vrot.slane %v727, %v731
      %734 = vmatprep.subr.mxu0 0.0
      %735 = vmatpush1.msra.mxu0 %v719
      %736 = vmatprep.subr.mxu0 0.0
      %737 = vmatpush1.msra.mxu0 %v720
      %738 = vmatprep.subr.mxu0 0.0
      %739 = vmatpush1.msra.mxu0 %v721
      %740 = vmatprep.subr.mxu0 0.0
      %741 = vmatpush1.msra.mxu0 %v722
      %742 = vmatprep.subr.mxu0 0.0
      %743 = vmatpush1.msra.mxu0 %v723
      %744 = vmatprep.subr.mxu0 0.0
      %745 = vmatpush1.msra.mxu0 %v724
      %746 = vmatprep.subr.mxu0 0.0
      %747 = vmatpush1.msra.mxu0 %v725
      %748 = vmatprep.subr.mxu0 0.0
      %749 = vmatpush1.msra.mxu0 %v726
      %750 = vmatprep.subr.mxu0 0.0
      %751 = vmatpush1.msra.mxu0 0.0
      %752 = vmatprep.subr.mxu0 0.0
      %753 = vmatpush1.msra.mxu0 0.0
      %754 = vmatprep.subr.mxu0 0.0
      %755 = vmatpush1.msra.mxu0 0.0
      %756 = vmatprep.subr.mxu0 0.0
      %757 = vmatpush1.msra.mxu0 0.0
      %758 = vmatprep.subr.mxu0 0.0
      %759 = vmatpush1.msra.mxu0 0.0
      %760 = vmatprep.subr.mxu0 0.0
      %761 = vmatpush1.msra.mxu0 0.0
      %762 = vmatprep.subr.mxu0 0.0
      %763 = vmatpush1.msra.mxu0 0.0
      %764 = vmatprep.subr.mxu0 0.0
      %765 = vmatpush1.msra.mxu0 0.0
      %766 = vmatprep.subr.mxu0 0.0
      %767 = vmatpush1.msra.mxu0 0.0
      %768 = vmatprep.subr.mxu0 0.0
      %769 = vmatpush1.msra.mxu0 0.0
      %770 = vmatprep.subr.mxu0 0.0
      %771 = vmatpush1.msra.mxu0 0.0
      %772 = vmatprep.subr.mxu0 0.0
      %773 = vmatpush1.msra.mxu0 0.0
      %774 = vmatprep.subr.mxu0 0.0
      %775 = vmatpush1.msra.mxu0 0.0
      %776 = vmatprep.subr.mxu0 0.0
      %777 = vmatpush1.msra.mxu0 0.0
      %778 = vmatprep.subr.mxu0 0.0
      %779 = vmatpush1.msra.mxu0 0.0
      %780 = vmatprep.subr.mxu0 0.0
      %781 = vmatpush1.msra.mxu0 0.0
      %782 = vmatprep.subr.mxu0 0.0
      %783 = vmatpush1.msra.mxu0 0.0
      %784 = vmatprep.subr.mxu0 0.0
      %785 = vmatpush1.msra.mxu0 0.0
      %786 = vmatprep.subr.mxu0 0.0
      %787 = vmatpush1.msra.mxu0 0.0
      %788 = vmatprep.subr.mxu0 0.0
      %789 = vmatpush1.msra.mxu0 0.0
      %790 = vmatprep.subr.mxu0 0.0
      %791 = vmatpush1.msra.mxu0 0.0
      %792 = vmatprep.subr.mxu0 0.0
      %793 = vmatpush1.msra.mxu0 0.0
      %794 = vmatprep.subr.mxu0 0.0
      %795 = vmatpush1.msra.mxu0 0.0
      %796 = vmatprep.subr.mxu0 0.0
      %797 = vmatpush1.msra.mxu0 0.0
      %798 = vmatprep.mubr.f32.mxu0 0.0
      %799 = vmatmul.mubr.f32.gmra.mrb[0].mxu0 %v562
      %v800 = vpop.f32.mrb[0].mxu0
      %v801 = vadd.f32 %v732, %v800
      %v802 = vpop.f32.mrb[0].mxu0
      %803 = vdwg.mxu0
      %v804 = vlaneseq
      %v805 = vshrl.u32 %v804, 7
      %v806 = vlaneseq
      %v807 = vand.u32 %v806, 127
      %vm808 = vcmp.le.s32.totalorder %v807, %v805
      %vm809 = vcmask 64512
      %v811 = vsel %vm809, %v631, 0
      %v814 = vsel %vm809, %v716, 0
      %816 = vmatprep.subr.mxu0 0.0
      %817 = vmatpush1.xpose.msra.mxu0 %v814
      %818 = vmatprep.subr.mxu0 0.0
      %819 = vmatpush1.xpose.msra.mxu0 0.0
      %820 = vmatprep.subr.mxu0 0.0
      %821 = vmatpush1.xpose.msra.mxu0 0.0
      %822 = vmatprep.subr.mxu0 0.0
      %823 = vmatpush1.xpose.msra.mxu0 0.0
      %824 = vmatprep.subr.mxu0 0.0
      %825 = vmatpush1.xpose.msra.mxu0 0.0
      %826 = vmatprep.subr.mxu0 0.0
      %827 = vmatpush1.xpose.msra.mxu0 0.0
      %828 = vmatprep.subr.mxu0 0.0
      %829 = vmatpush1.xpose.msra.mxu0 0.0
      %830 = vmatprep.subr.mxu0 0.0
      %831 = vmatpush1.xpose.msra.mxu0 0.0
      %832 = vmatprep.subr.mxu0 0.0
      %833 = vmatpush1.xpose.msra.mxu0 0.0
      %834 = vmatprep.subr.mxu0 0.0
      %835 = vmatpush1.xpose.msra.mxu0 0.0
      %836 = vmatprep.subr.mxu0 0.0
      %837 = vmatpush1.xpose.msra.mxu0 0.0
      %838 = vmatprep.subr.mxu0 0.0
      %839 = vmatpush1.xpose.msra.mxu0 0.0
      %840 = vmatprep.subr.mxu0 0.0
      %841 = vmatpush1.xpose.msra.mxu0 0.0
      %842 = vmatprep.subr.mxu0 0.0
      %843 = vmatpush1.xpose.msra.mxu0 0.0
      %844 = vmatprep.subr.mxu0 0.0
      %845 = vmatpush1.xpose.msra.mxu0 0.0
      %846 = vmatprep.subr.mxu0 0.0
      %847 = vmatpush1.xpose.msra.mxu0 0.0
      %848 = vmatprep.subr.mxu0 0.0
      %849 = vmatpush1.xpose.msra.mxu0 0.0
      %850 = vmatprep.subr.mxu0 0.0
      %851 = vmatpush1.xpose.msra.mxu0 0.0
      %852 = vmatprep.subr.mxu0 0.0
      %853 = vmatpush1.xpose.msra.mxu0 0.0
      %854 = vmatprep.subr.mxu0 0.0
      %855 = vmatpush1.xpose.msra.mxu0 0.0
      %856 = vmatprep.subr.mxu0 0.0
      %857 = vmatpush1.xpose.msra.mxu0 0.0
      %858 = vmatprep.subr.mxu0 0.0
      %859 = vmatpush1.xpose.msra.mxu0 0.0
      %860 = vmatprep.subr.mxu0 0.0
      %861 = vmatpush1.xpose.msra.mxu0 0.0
      %862 = vmatprep.subr.mxu0 0.0
      %863 = vmatpush1.xpose.msra.mxu0 0.0
      %864 = vmatprep.subr.mxu0 0.0
      %865 = vmatpush1.xpose.msra.mxu0 0.0
      %866 = vmatprep.subr.mxu0 0.0
      %867 = vmatpush1.xpose.msra.mxu0 0.0
      %868 = vmatprep.subr.mxu0 0.0
      %869 = vmatpush1.xpose.msra.mxu0 0.0
      %870 = vmatprep.subr.mxu0 0.0
      %871 = vmatpush1.xpose.msra.mxu0 0.0
      %872 = vmatprep.subr.mxu0 0.0
      %873 = vmatpush1.xpose.msra.mxu0 0.0
      %874 = vmatprep.subr.mxu0 0.0
      %875 = vmatpush1.xpose.msra.mxu0 0.0
      %876 = vmatprep.subr.mxu0 0.0
      %877 = vmatpush1.xpose.msra.mxu0 0.0
      %878 = vmatprep.subr.mxu0 0.0
      %879 = vmatpush1.xpose.msra.mxu0 0.0
      %880 = vmatprep.mubr.f32.mxu0 0.0
      %881 = vmatmul.mubr.f32.gmra.mrb[0].mxu0 %v811
      %v882 = vpop.f32.mrb[0].mxu0
      %v883 = vadd.f32 0.0, %v882
      %v884 = vpop.f32.mrb[0].mxu0
      %885 = vdwg.mxu0
      %v886 = vsel %vm808, %v883, -1e+30
      %v887 = vsel %vm809, %v886, -inf
      %888 = vmax.xlane.f32.xlu0 %v887
      %v889 = vpop.xlane.xlu0 %888
      %v890 = vsub.f32 %v886, %v889
      %v891 = vmul.f32 %v890, 1.442695
      %v892 = vpow.pop %v891
      %v893 = vsel %vm809, %v892, 0.0
      %894 = vadd.xlane.f32.xlu0 %v893
      %v895 = vpop.xlane.xlu0 %894
      %v896 = vrcp.pop %v895
      %v897 = vmul.f32 %v892, %v896
      %v899 = vsel %vm809, %v897, 0
      %901 = vmatprep.subr.mxu0 0.0
      %902 = vmatpush1.msra.mxu0 %v801
      %903 = vmatprep.subr.mxu0 0.0
      %904 = vmatpush1.msra.mxu0 0.0
      %905 = vmatprep.subr.mxu0 0.0
      %906 = vmatpush1.msra.mxu0 0.0
      %907 = vmatprep.subr.mxu0 0.0
      %908 = vmatpush1.msra.mxu0 0.0
      %909 = vmatprep.subr.mxu0 0.0
      %910 = vmatpush1.msra.mxu0 0.0
      %911 = vmatprep.subr.mxu0 0.0
      %912 = vmatpush1.msra.mxu0 0.0
      %913 = vmatprep.subr.mxu0 0.0
      %914 = vmatpush1.msra.mxu0 0.0
      %915 = vmatprep.subr.mxu0 0.0
      %916 = vmatpush1.msra.mxu0 0.0
      %917 = vmatprep.subr.mxu0 0.0
      %918 = vmatpush1.msra.mxu0 0.0
      %919 = vmatprep.subr.mxu0 0.0
      %920 = vmatpush1.msra.mxu0 0.0
      %921 = vmatprep.subr.mxu0 0.0
      %922 = vmatpush1.msra.mxu0 0.0
      %923 = vmatprep.subr.mxu0 0.0
      %924 = vmatpush1.msra.mxu0 0.0
      %925 = vmatprep.subr.mxu0 0.0
      %926 = vmatpush1.msra.mxu0 0.0
      %927 = vmatprep.subr.mxu0 0.0
      %928 = vmatpush1.msra.mxu0 0.0
      %929 = vmatprep.subr.mxu0 0.0
      %930 = vmatpush1.msra.mxu0 0.0
      %931 = vmatprep.subr.mxu0 0.0
      %932 = vmatpush1.msra.mxu0 0.0
      %933 = vmatprep.subr.mxu0 0.0
      %934 = vmatpush1.msra.mxu0 0.0
      %935 = vmatprep.subr.mxu0 0.0
      %936 = vmatpush1.msra.mxu0 0.0
      %937 = vmatprep.subr.mxu0 0.0
      %938 = vmatpush1.msra.mxu0 0.0
      %939 = vmatprep.subr.mxu0 0.0
      %940 = vmatpush1.msra.mxu0 0.0
      %941 = vmatprep.subr.mxu0 0.0
      %942 = vmatpush1.msra.mxu0 0.0
      %943 = vmatprep.subr.mxu0 0.0
      %944 = vmatpush1.msra.mxu0 0.0
      %945 = vmatprep.subr.mxu0 0.0
      %946 = vmatpush1.msra.mxu0 0.0
      %947 = vmatprep.subr.mxu0 0.0
      %948 = vmatpush1.msra.mxu0 0.0
      %949 = vmatprep.subr.mxu0 0.0
      %950 = vmatpush1.msra.mxu0 0.0
      %951 = vmatprep.subr.mxu0 0.0
      %952 = vmatpush1.msra.mxu0 0.0
      %953 = vmatprep.subr.mxu0 0.0
      %954 = vmatpush1.msra.mxu0 0.0
      %955 = vmatprep.subr.mxu0 0.0
      %956 = vmatpush1.msra.mxu0 0.0
      %957 = vmatprep.subr.mxu0 0.0
      %958 = vmatpush1.msra.mxu0 0.0
      %959 = vmatprep.subr.mxu0 0.0
      %960 = vmatpush1.msra.mxu0 0.0
      %961 = vmatprep.subr.mxu0 0.0
      %962 = vmatpush1.msra.mxu0 0.0
      %963 = vmatprep.subr.mxu0 0.0
      %964 = vmatpush1.msra.mxu0 0.0
      %965 = vmatprep.mubr.f32.mxu0 0.0
      %966 = vmatmul.mubr.f32.gmra.mrb[0].mxu0 %v899
      %v967 = vpop.f32.mrb[0].mxu0
      %v968 = vadd.f32 0.0, %v967
      %v969 = vpop.f32.mrb[0].mxu0
      %970 = vdwg.mxu0
      %971 = vrot.lane.b32.xlu0 %v631, 120
      %v972 = vpop.permute.xlu0 %971
      %973 = vrot.lane.b32.xlu0 %v716, 120
      %v974 = vpop.permute.xlu0 %973
      %v975 = vsel %vm809, %v972, 0
      %v977 = vsel %vm809, %v974, 0
      %979 = vmatprep.subr.mxu0 0.0
      %980 = vmatpush1.xpose.msra.mxu0 %v977
      %981 = vmatprep.subr.mxu0 0.0
      %982 = vmatpush1.xpose.msra.mxu0 0.0
      %983 = vmatprep.subr.mxu0 0.0
      %984 = vmatpush1.xpose.msra.mxu0 0.0
      %985 = vmatprep.subr.mxu0 0.0
      %986 = vmatpush1.xpose.msra.mxu0 0.0
      %987 = vmatprep.subr.mxu0 0.0
      %988 = vmatpush1.xpose.msra.mxu0 0.0
      %989 = vmatprep.subr.mxu0 0.0
      %990 = vmatpush1.xpose.msra.mxu0 0.0
      %991 = vmatprep.subr.mxu0 0.0
      %992 = vmatpush1.xpose.msra.mxu0 0.0
      %993 = vmatprep.subr.mxu0 0.0
      %994 = vmatpush1.xpose.msra.mxu0 0.0
      %995 = vmatprep.subr.mxu0 0.0
      %996 = vmatpush1.xpose.msra.mxu0 0.0
      %997 = vmatprep.subr.mxu0 0.0
      %998 = vmatpush1.xpose.msra.mxu0 0.0
      %999 = vmatprep.subr.mxu0 0.0
      %1000 = vmatpush1.xpose.msra.mxu0 0.0
      %1001 = vmatprep.subr.mxu0 0.0
      %1002 = vmatpush1.xpose.msra.mxu0 0.0
      %1003 = vmatprep.subr.mxu0 0.0
      %1004 = vmatpush1.xpose.msra.mxu0 0.0
      %1005 = vmatprep.subr.mxu0 0.0
      %1006 = vmatpush1.xpose.msra.mxu0 0.0
      %1007 = vmatprep.subr.mxu0 0.0
      %1008 = vmatpush1.xpose.msra.mxu0 0.0
      %1009 = vmatprep.subr.mxu0 0.0
      %1010 = vmatpush1.xpose.msra.mxu0 0.0
      %1011 = vmatprep.subr.mxu0 0.0
      %1012 = vmatpush1.xpose.msra.mxu0 0.0
      %1013 = vmatprep.subr.mxu0 0.0
      %1014 = vmatpush1.xpose.msra.mxu0 0.0
      %1015 = vmatprep.subr.mxu0 0.0
      %1016 = vmatpush1.xpose.msra.mxu0 0.0
      %1017 = vmatprep.subr.mxu0 0.0
      %1018 = vmatpush1.xpose.msra.mxu0 0.0
      %1019 = vmatprep.subr.mxu0 0.0
      %1020 = vmatpush1.xpose.msra.mxu0 0.0
      %1021 = vmatprep.subr.mxu0 0.0
      %1022 = vmatpush1.xpose.msra.mxu0 0.0
      %1023 = vmatprep.subr.mxu0 0.0
      %1024 = vmatpush1.xpose.msra.mxu0 0.0
      %1025 = vmatprep.subr.mxu0 0.0
      %1026 = vmatpush1.xpose.msra.mxu0 0.0
      %1027 = vmatprep.subr.mxu0 0.0
      %1028 = vmatpush1.xpose.msra.mxu0 0.0
      %1029 = vmatprep.subr.mxu0 0.0
      %1030 = vmatpush1.xpose.msra.mxu0 0.0
      %1031 = vmatprep.subr.mxu0 0.0
      %1032 = vmatpush1.xpose.msra.mxu0 0.0
      %1033 = vmatprep.subr.mxu0 0.0
      %1034 = vmatpush1.xpose.msra.mxu0 0.0
      %1035 = vmatprep.subr.mxu0 0.0
      %1036 = vmatpush1.xpose.msra.mxu0 0.0
      %1037 = vmatprep.subr.mxu0 0.0
      %1038 = vmatpush1.xpose.msra.mxu0 0.0
      %1039 = vmatprep.subr.mxu0 0.0
      %1040 = vmatpush1.xpose.msra.mxu0 0.0
      %1041 = vmatprep.subr.mxu0 0.0
      %1042 = vmatpush1.xpose.msra.mxu0 0.0
      %1043 = vmatprep.mubr.f32.mxu0 0.0
      %1044 = vmatmul.mubr.f32.gmra.mrb[0].mxu0 %v975
      %v1045 = vpop.f32.mrb[0].mxu0
      %v1046 = vadd.f32 0.0, %v1045
      %v1047 = vpop.f32.mrb[0].mxu0
      %1048 = vdwg.mxu0
      %v1049 = vsel %vm808, %v1046, -1e+30
      %v1050 = vsel %vm809, %v1049, -inf
      %1051 = vmax.xlane.f32.xlu0 %v1050
      %v1052 = vpop.xlane.xlu0 %1051
      %v1053 = vsub.f32 %v1049, %v1052
      %v1054 = vmul.f32 %v1053, 1.442695
      %v1055 = vpow.pop %v1054
      %v1056 = vsel %vm809, %v1055, 0.0
      %1057 = vadd.xlane.f32.xlu0 %v1056
      %v1058 = vpop.xlane.xlu0 %1057
      %v1059 = vrcp.pop %v1058
      %v1060 = vmul.f32 %v1055, %v1059
      %v1062 = vsel %vm809, %v1060, 0
      %1064 = vmatprep.subr.mxu0 0.0
      %1065 = vmatpush1.msra.mxu0 %v801
      %1066 = vmatprep.subr.mxu0 0.0
      %1067 = vmatpush1.msra.mxu0 0.0
      %1068 = vmatprep.subr.mxu0 0.0
      %1069 = vmatpush1.msra.mxu0 0.0
      %1070 = vmatprep.subr.mxu0 0.0
      %1071 = vmatpush1.msra.mxu0 0.0
      %1072 = vmatprep.subr.mxu0 0.0
      %1073 = vmatpush1.msra.mxu0 0.0
      %1074 = vmatprep.subr.mxu0 0.0
      %1075 = vmatpush1.msra.mxu0 0.0
      %1076 = vmatprep.subr.mxu0 0.0
      %1077 = vmatpush1.msra.mxu0 0.0
      %1078 = vmatprep.subr.mxu0 0.0
      %1079 = vmatpush1.msra.mxu0 0.0
      %1080 = vmatprep.subr.mxu0 0.0
      %1081 = vmatpush1.msra.mxu0 0.0
      %1082 = vmatprep.subr.mxu0 0.0
      %1083 = vmatpush1.msra.mxu0 0.0
      %1084 = vmatprep.subr.mxu0 0.0
      %1085 = vmatpush1.msra.mxu0 0.0
      %1086 = vmatprep.subr.mxu0 0.0
      %1087 = vmatpush1.msra.mxu0 0.0
      %1088 = vmatprep.subr.mxu0 0.0
      %1089 = vmatpush1.msra.mxu0 0.0
      %1090 = vmatprep.subr.mxu0 0.0
      %1091 = vmatpush1.msra.mxu0 0.0
      %1092 = vmatprep.subr.mxu0 0.0
      %1093 = vmatpush1.msra.mxu0 0.0
      %1094 = vmatprep.subr.mxu0 0.0
      %1095 = vmatpush1.msra.mxu0 0.0
      %1096 = vmatprep.subr.mxu0 0.0
      %1097 = vmatpush1.msra.mxu0 0.0
      %1098 = vmatprep.subr.mxu0 0.0
      %1099 = vmatpush1.msra.mxu0 0.0
      %1100 = vmatprep.subr.mxu0 0.0
      %1101 = vmatpush1.msra.mxu0 0.0
      %1102 = vmatprep.subr.mxu0 0.0
      %1103 = vmatpush1.msra.mxu0 0.0
      %1104 = vmatprep.subr.mxu0 0.0
      %1105 = vmatpush1.msra.mxu0 0.0
      %1106 = vmatprep.subr.mxu0 0.0
      %1107 = vmatpush1.msra.mxu0 0.0
      %1108 = vmatprep.subr.mxu0 0.0
      %1109 = vmatpush1.msra.mxu0 0.0
      %1110 = vmatprep.subr.mxu0 0.0
      %1111 = vmatpush1.msra.mxu0 0.0
      %1112 = vmatprep.subr.mxu0 0.0
      %1113 = vmatpush1.msra.mxu0 0.0
      %1114 = vmatprep.subr.mxu0 0.0
      %1115 = vmatpush1.msra.mxu0 0.0
      %1116 = vmatprep.subr.mxu0 0.0
      %1117 = vmatpush1.msra.mxu0 0.0
      %1118 = vmatprep.subr.mxu0 0.0
      %1119 = vmatpush1.msra.mxu0 0.0
      %1120 = vmatprep.subr.mxu0 0.0
      %1121 = vmatpush1.msra.mxu0 0.0
      %1122 = vmatprep.subr.mxu0 0.0
      %1123 = vmatpush1.msra.mxu0 0.0
      %1124 = vmatprep.subr.mxu0 0.0
      %1125 = vmatpush1.msra.mxu0 0.0
      %1126 = vmatprep.subr.mxu0 0.0
      %1127 = vmatpush1.msra.mxu0 0.0
      %1128 = vmatprep.mubr.f32.mxu0 0.0
      %1129 = vmatmul.mubr.f32.gmra.mrb[0].mxu0 %v1062
      %v1130 = vpop.f32.mrb[0].mxu0
      %v1131 = vadd.f32 0.0, %v1130
      %v1132 = vpop.f32.mrb[0].mxu0
      %1133 = vdwg.mxu0
      %1134 = vrot.lane.b32.xlu0 %v631, 112
      %v1135 = vpop.permute.xlu0 %1134
      %1136 = vrot.lane.b32.xlu0 %v716, 112
      %v1137 = vpop.permute.xlu0 %1136
      %v1138 = vsel %vm809, %v1135, 0
      %v1140 = vsel %vm809, %v1137, 0
      %1142 = vmatprep.subr.mxu0 0.0
      %1143 = vmatpush1.xpose.msra.mxu0 %v1140
      %1144 = vmatprep.subr.mxu0 0.0
      %1145 = vmatpush1.xpose.msra.mxu0 0.0
      %1146 = vmatprep.subr.mxu0 0.0
      %1147 = vmatpush1.xpose.msra.mxu0 0.0
      %1148 = vmatprep.subr.mxu0 0.0
      %1149 = vmatpush1.xpose.msra.mxu0 0.0
      %1150 = vmatprep.subr.mxu0 0.0
      %1151 = vmatpush1.xpose.msra.mxu0 0.0
      %1152 = vmatprep.subr.mxu0 0.0
      %1153 = vmatpush1.xpose.msra.mxu0 0.0
      %1154 = vmatprep.subr.mxu0 0.0
      %1155 = vmatpush1.xpose.msra.mxu0 0.0
      %1156 = vmatprep.subr.mxu0 0.0
      %1157 = vmatpush1.xpose.msra.mxu0 0.0
      %1158 = vmatprep.subr.mxu0 0.0
      %1159 = vmatpush1.xpose.msra.mxu0 0.0
      %1160 = vmatprep.subr.mxu0 0.0
      %1161 = vmatpush1.xpose.msra.mxu0 0.0
      %1162 = vmatprep.subr.mxu0 0.0
      %1163 = vmatpush1.xpose.msra.mxu0 0.0
      %1164 = vmatprep.subr.mxu0 0.0
      %1165 = vmatpush1.xpose.msra.mxu0 0.0
      %1166 = vmatprep.subr.mxu0 0.0
      %1167 = vmatpush1.xpose.msra.mxu0 0.0
      %1168 = vmatprep.subr.mxu0 0.0
      %1169 = vmatpush1.xpose.msra.mxu0 0.0
      %1170 = vmatprep.subr.mxu0 0.0
      %1171 = vmatpush1.xpose.msra.mxu0 0.0
      %1172 = vmatprep.subr.mxu0 0.0
      %1173 = vmatpush1.xpose.msra.mxu0 0.0
      %1174 = vmatprep.subr.mxu0 0.0
      %1175 = vmatpush1.xpose.msra.mxu0 0.0
      %1176 = vmatprep.subr.mxu0 0.0
      %1177 = vmatpush1.xpose.msra.mxu0 0.0
      %1178 = vmatprep.subr.mxu0 0.0
      %1179 = vmatpush1.xpose.msra.mxu0 0.0
      %1180 = vmatprep.subr.mxu0 0.0
      %1181 = vmatpush1.xpose.msra.mxu0 0.0
      %1182 = vmatprep.subr.mxu0 0.0
      %1183 = vmatpush1.xpose.msra.mxu0 0.0
      %1184 = vmatprep.subr.mxu0 0.0
      %1185 = vmatpush1.xpose.msra.mxu0 0.0
      %1186 = vmatprep.subr.mxu0 0.0
      %1187 = vmatpush1.xpose.msra.mxu0 0.0
      %1188 = vmatprep.subr.mxu0 0.0
      %1189 = vmatpush1.xpose.msra.mxu0 0.0
      %1190 = vmatprep.subr.mxu0 0.0
      %1191 = vmatpush1.xpose.msra.mxu0 0.0
      %1192 = vmatprep.subr.mxu0 0.0
      %1193 = vmatpush1.xpose.msra.mxu0 0.0
      %1194 = vmatprep.subr.mxu0 0.0
      %1195 = vmatpush1.xpose.msra.mxu0 0.0
      %1196 = vmatprep.subr.mxu0 0.0
      %1197 = vmatpush1.xpose.msra.mxu0 0.0
      %1198 = vmatprep.subr.mxu0 0.0
      %1199 = vmatpush1.xpose.msra.mxu0 0.0
      %1200 = vmatprep.subr.mxu0 0.0
      %1201 = vmatpush1.xpose.msra.mxu0 0.0
      %1202 = vmatprep.subr.mxu0 0.0
      %1203 = vmatpush1.xpose.msra.mxu0 0.0
      %1204 = vmatprep.subr.mxu0 0.0
      %1205 = vmatpush1.xpose.msra.mxu0 0.0
      %1206 = vmatprep.mubr.f32.mxu0 0.0
      %1207 = vmatmul.mubr.f32.gmra.mrb[0].mxu0 %v1138
      %v1208 = vpop.f32.mrb[0].mxu0
      %v1209 = vadd.f32 0.0, %v1208
      %v1210 = vpop.f32.mrb[0].mxu0
      %1211 = vdwg.mxu0
      %v1212 = vsel %vm808, %v1209, -1e+30
      %v1213 = vsel %vm809, %v1212, -inf
      %1214 = vmax.xlane.f32.xlu0 %v1213
      %v1215 = vpop.xlane.xlu0 %1214
      %v1216 = vsub.f32 %v1212, %v1215
      %v1217 = vmul.f32 %v1216, 1.442695
      %v1218 = vpow.pop %v1217
      %v1219 = vsel %vm809, %v1218, 0.0
      %1220 = vadd.xlane.f32.xlu0 %v1219
      %v1221 = vpop.xlane.xlu0 %1220
      %v1222 = vrcp.pop %v1221
      %v1223 = vmul.f32 %v1218, %v1222
      %v1225 = vsel %vm809, %v1223, 0
      %1227 = vmatprep.subr.mxu0 0.0
      %1228 = vmatpush1.msra.mxu0 %v801
      %1229 = vmatprep.subr.mxu0 0.0
      %1230 = vmatpush1.msra.mxu0 0.0
      %1231 = vmatprep.subr.mxu0 0.0
      %1232 = vmatpush1.msra.mxu0 0.0
      %1233 = vmatprep.subr.mxu0 0.0
      %1234 = vmatpush1.msra.mxu0 0.0
      %1235 = vmatprep.subr.mxu0 0.0
      %1236 = vmatpush1.msra.mxu0 0.0
      %1237 = vmatprep.subr.mxu0 0.0
      %1238 = vmatpush1.msra.mxu0 0.0
      %1239 = vmatprep.subr.mxu0 0.0
      %1240 = vmatpush1.msra.mxu0 0.0
      %1241 = vmatprep.subr.mxu0 0.0
      %1242 = vmatpush1.msra.mxu0 0.0
      %1243 = vmatprep.subr.mxu0 0.0
      %1244 = vmatpush1.msra.mxu0 0.0
      %1245 = vmatprep.subr.mxu0 0.0
      %1246 = vmatpush1.msra.mxu0 0.0
      %1247 = vmatprep.subr.mxu0 0.0
      %1248 = vmatpush1.msra.mxu0 0.0
      %1249 = vmatprep.subr.mxu0 0.0
      %1250 = vmatpush1.msra.mxu0 0.0
      %1251 = vmatprep.subr.mxu0 0.0
      %1252 = vmatpush1.msra.mxu0 0.0
      %1253 = vmatprep.subr.mxu0 0.0
      %1254 = vmatpush1.msra.mxu0 0.0
      %1255 = vmatprep.subr.mxu0 0.0
      %1256 = vmatpush1.msra.mxu0 0.0
      %1257 = vmatprep.subr.mxu0 0.0
      %1258 = vmatpush1.msra.mxu0 0.0
      %1259 = vmatprep.subr.mxu0 0.0
      %1260 = vmatpush1.msra.mxu0 0.0
      %1261 = vmatprep.subr.mxu0 0.0
      %1262 = vmatpush1.msra.mxu0 0.0
      %1263 = vmatprep.subr.mxu0 0.0
      %1264 = vmatpush1.msra.mxu0 0.0
      %1265 = vmatprep.subr.mxu0 0.0
      %1266 = vmatpush1.msra.mxu0 0.0
      %1267 = vmatprep.subr.mxu0 0.0
      %1268 = vmatpush1.msra.mxu0 0.0
      %1269 = vmatprep.subr.mxu0 0.0
      %1270 = vmatpush1.msra.mxu0 0.0
      %1271 = vmatprep.subr.mxu0 0.0
      %1272 = vmatpush1.msra.mxu0 0.0
      %1273 = vmatprep.subr.mxu0 0.0
      %1274 = vmatpush1.msra.mxu0 0.0
      %1275 = vmatprep.subr.mxu0 0.0
      %1276 = vmatpush1.msra.mxu0 0.0
      %1277 = vmatprep.subr.mxu0 0.0
      %1278 = vmatpush1.msra.mxu0 0.0
      %1279 = vmatprep.subr.mxu0 0.0
      %1280 = vmatpush1.msra.mxu0 0.0
      %1281 = vmatprep.subr.mxu0 0.0
      %1282 = vmatpush1.msra.mxu0 0.0
      %1283 = vmatprep.subr.mxu0 0.0
      %1284 = vmatpush1.msra.mxu0 0.0
      %1285 = vmatprep.subr.mxu0 0.0
      %1286 = vmatpush1.msra.mxu0 0.0
      %1287 = vmatprep.subr.mxu0 0.0
      %1288 = vmatpush1.msra.mxu0 0.0
      %1289 = vmatprep.subr.mxu0 0.0
      %1290 = vmatpush1.msra.mxu0 0.0
      %1291 = vmatprep.mubr.f32.mxu0 0.0
      %1292 = vmatmul.mubr.f32.gmra.mrb[0].mxu0 %v1225
      %v1293 = vpop.f32.mrb[0].mxu0
      %v1294 = vadd.f32 0.0, %v1293
      %v1295 = vpop.f32.mrb[0].mxu0
      %1296 = vdwg.mxu0
      %1297 = vrot.lane.b32.xlu0 %v631, 104
      %v1298 = vpop.permute.xlu0 %1297
      %1299 = vrot.lane.b32.xlu0 %v716, 104
      %v1300 = vpop.permute.xlu0 %1299
      %v1301 = vsel %vm809, %v1298, 0
      %v1303 = vsel %vm809, %v1300, 0
      %1305 = vmatprep.subr.mxu0 0.0
      %1306 = vmatpush1.xpose.msra.mxu0 %v1303
      %1307 = vmatprep.subr.mxu0 0.0
      %1308 = vmatpush1.xpose.msra.mxu0 0.0
      %1309 = vmatprep.subr.mxu0 0.0
      %1310 = vmatpush1.xpose.msra.mxu0 0.0
      %1311 = vmatprep.subr.mxu0 0.0
      %1312 = vmatpush1.xpose.msra.mxu0 0.0
      %1313 = vmatprep.subr.mxu0 0.0
      %1314 = vmatpush1.xpose.msra.mxu0 0.0
      %1315 = vmatprep.subr.mxu0 0.0
      %1316 = vmatpush1.xpose.msra.mxu0 0.0
      %1317 = vmatprep.subr.mxu0 0.0
      %1318 = vmatpush1.xpose.msra.mxu0 0.0
      %1319 = vmatprep.subr.mxu0 0.0
      %1320 = vmatpush1.xpose.msra.mxu0 0.0
      %1321 = vmatprep.subr.mxu0 0.0
      %1322 = vmatpush1.xpose.msra.mxu0 0.0
      %1323 = vmatprep.subr.mxu0 0.0
      %1324 = vmatpush1.xpose.msra.mxu0 0.0
      %1325 = vmatprep.subr.mxu0 0.0
      %1326 = vmatpush1.xpose.msra.mxu0 0.0
      %1327 = vmatprep.subr.mxu0 0.0
      %1328 = vmatpush1.xpose.msra.mxu0 0.0
      %1329 = vmatprep.subr.mxu0 0.0
      %1330 = vmatpush1.xpose.msra.mxu0 0.0
      %1331 = vmatprep.subr.mxu0 0.0
      %1332 = vmatpush1.xpose.msra.mxu0 0.0
      %1333 = vmatprep.subr.mxu0 0.0
      %1334 = vmatpush1.xpose.msra.mxu0 0.0
      %1335 = vmatprep.subr.mxu0 0.0
      %1336 = vmatpush1.xpose.msra.mxu0 0.0
      %1337 = vmatprep.subr.mxu0 0.0
      %1338 = vmatpush1.xpose.msra.mxu0 0.0
      %1339 = vmatprep.subr.mxu0 0.0
      %1340 = vmatpush1.xpose.msra.mxu0 0.0
      %1341 = vmatprep.subr.mxu0 0.0
      %1342 = vmatpush1.xpose.msra.mxu0 0.0
      %1343 = vmatprep.subr.mxu0 0.0
      %1344 = vmatpush1.xpose.msra.mxu0 0.0
      %1345 = vmatprep.subr.mxu0 0.0
      %1346 = vmatpush1.xpose.msra.mxu0 0.0
      %1347 = vmatprep.subr.mxu0 0.0
      %1348 = vmatpush1.xpose.msra.mxu0 0.0
      %1349 = vmatprep.subr.mxu0 0.0
      %1350 = vmatpush1.xpose.msra.mxu0 0.0
      %1351 = vmatprep.subr.mxu0 0.0
      %1352 = vmatpush1.xpose.msra.mxu0 0.0
      %1353 = vmatprep.subr.mxu0 0.0
      %1354 = vmatpush1.xpose.msra.mxu0 0.0
      %1355 = vmatprep.subr.mxu0 0.0
      %1356 = vmatpush1.xpose.msra.mxu0 0.0
      %1357 = vmatprep.subr.mxu0 0.0
      %1358 = vmatpush1.xpose.msra.mxu0 0.0
      %1359 = vmatprep.subr.mxu0 0.0
      %1360 = vmatpush1.xpose.msra.mxu0 0.0
      %1361 = vmatprep.subr.mxu0 0.0
      %1362 = vmatpush1.xpose.msra.mxu0 0.0
      %1363 = vmatprep.subr.mxu0 0.0
      %1364 = vmatpush1.xpose.msra.mxu0 0.0
      %1365 = vmatprep.subr.mxu0 0.0
      %1366 = vmatpush1.xpose.msra.mxu0 0.0
      %1367 = vmatprep.subr.mxu0 0.0
      %1368 = vmatpush1.xpose.msra.mxu0 0.0
      %1369 = vmatprep.mubr.f32.mxu0 0.0
      %1370 = vmatmul.mubr.f32.gmra.mrb[0].mxu0 %v1301
      %v1371 = vpop.f32.mrb[0].mxu0
      %v1372 = vadd.f32 0.0, %v1371
      %v1373 = vpop.f32.mrb[0].mxu0
      %1374 = vdwg.mxu0
      %v1375 = vsel %vm808, %v1372, -1e+30
      %v1376 = vsel %vm809, %v1375, -inf
      %1377 = vmax.xlane.f32.xlu0 %v1376
      %v1378 = vpop.xlane.xlu0 %1377
      %v1379 = vsub.f32 %v1375, %v1378
      %v1380 = vmul.f32 %v1379, 1.442695
      %v1381 = vpow.pop %v1380
      %v1382 = vsel %vm809, %v1381, 0.0
      %1383 = vadd.xlane.f32.xlu0 %v1382
      %v1384 = vpop.xlane.xlu0 %1383
      %v1385 = vrcp.pop %v1384
      %v1386 = vmul.f32 %v1381, %v1385
      %v1388 = vsel %vm809, %v1386, 0
      %1390 = vmatprep.subr.mxu0 0.0
      %1391 = vmatpush1.msra.mxu0 %v801
      %1392 = vmatprep.subr.mxu0 0.0
      %1393 = vmatpush1.msra.mxu0 0.0
      %1394 = vmatprep.subr.mxu0 0.0
      %1395 = vmatpush1.msra.mxu0 0.0
      %1396 = vmatprep.subr.mxu0 0.0
      %1397 = vmatpush1.msra.mxu0 0.0
      %1398 = vmatprep.subr.mxu0 0.0
      %1399 = vmatpush1.msra.mxu0 0.0
      %1400 = vmatprep.subr.mxu0 0.0
      %1401 = vmatpush1.msra.mxu0 0.0
      %1402 = vmatprep.subr.mxu0 0.0
      %1403 = vmatpush1.msra.mxu0 0.0
      %1404 = vmatprep.subr.mxu0 0.0
      %1405 = vmatpush1.msra.mxu0 0.0
      %1406 = vmatprep.subr.mxu0 0.0
      %1407 = vmatpush1.msra.mxu0 0.0
      %1408 = vmatprep.subr.mxu0 0.0
      %1409 = vmatpush1.msra.mxu0 0.0
      %1410 = vmatprep.subr.mxu0 0.0
      %1411 = vmatpush1.msra.mxu0 0.0
      %1412 = vmatprep.subr.mxu0 0.0
      %1413 = vmatpush1.msra.mxu0 0.0
      %1414 = vmatprep.subr.mxu0 0.0
      %1415 = vmatpush1.msra.mxu0 0.0
      %1416 = vmatprep.subr.mxu0 0.0
      %1417 = vmatpush1.msra.mxu0 0.0
      %1418 = vmatprep.subr.mxu0 0.0
      %1419 = vmatpush1.msra.mxu0 0.0
      %1420 = vmatprep.subr.mxu0 0.0
      %1421 = vmatpush1.msra.mxu0 0.0
      %1422 = vmatprep.subr.mxu0 0.0
      %1423 = vmatpush1.msra.mxu0 0.0
      %1424 = vmatprep.subr.mxu0 0.0
      %1425 = vmatpush1.msra.mxu0 0.0
      %1426 = vmatprep.subr.mxu0 0.0
      %1427 = vmatpush1.msra.mxu0 0.0
      %1428 = vmatprep.subr.mxu0 0.0
      %1429 = vmatpush1.msra.mxu0 0.0
      %1430 = vmatprep.subr.mxu0 0.0
      %1431 = vmatpush1.msra.mxu0 0.0
      %1432 = vmatprep.subr.mxu0 0.0
      %1433 = vmatpush1.msra.mxu0 0.0
      %1434 = vmatprep.subr.mxu0 0.0
      %1435 = vmatpush1.msra.mxu0 0.0
      %1436 = vmatprep.subr.mxu0 0.0
      %1437 = vmatpush1.msra.mxu0 0.0
      %1438 = vmatprep.subr.mxu0 0.0
      %1439 = vmatpush1.msra.mxu0 0.0
      %1440 = vmatprep.subr.mxu0 0.0
      %1441 = vmatpush1.msra.mxu0 0.0
      %1442 = vmatprep.subr.mxu0 0.0
      %1443 = vmatpush1.msra.mxu0 0.0
      %1444 = vmatprep.subr.mxu0 0.0
      %1445 = vmatpush1.msra.mxu0 0.0
      %1446 = vmatprep.subr.mxu0 0.0
      %1447 = vmatpush1.msra.mxu0 0.0
      %1448 = vmatprep.subr.mxu0 0.0
      %1449 = vmatpush1.msra.mxu0 0.0
      %1450 = vmatprep.subr.mxu0 0.0
      %1451 = vmatpush1.msra.mxu0 0.0
      %1452 = vmatprep.subr.mxu0 0.0
      %1453 = vmatpush1.msra.mxu0 0.0
      %1454 = vmatprep.mubr.f32.mxu0 0.0
      %1455 = vmatmul.mubr.f32.gmra.mrb[0].mxu0 %v1388
      %v1456 = vpop.f32.mrb[0].mxu0
      %v1457 = vadd.f32 0.0, %v1456
      %v1458 = vpop.f32.mrb[0].mxu0
      %1459 = vdwg.mxu0
      %1460 = vrot.lane.b32.xlu0 %v631, 96
      %v1461 = vpop.permute.xlu0 %1460
      %1462 = vrot.lane.b32.xlu0 %v716, 96
      %v1463 = vpop.permute.xlu0 %1462
      %v1464 = vsel %vm809, %v1461, 0
      %v1466 = vsel %vm809, %v1463, 0
      %1468 = vmatprep.subr.mxu0 0.0
      %1469 = vmatpush1.xpose.msra.mxu0 %v1466
      %1470 = vmatprep.subr.mxu0 0.0
      %1471 = vmatpush1.xpose.msra.mxu0 0.0
      %1472 = vmatprep.subr.mxu0 0.0
      %1473 = vmatpush1.xpose.msra.mxu0 0.0
      %1474 = vmatprep.subr.mxu0 0.0
      %1475 = vmatpush1.xpose.msra.mxu0 0.0
      %1476 = vmatprep.subr.mxu0 0.0
      %1477 = vmatpush1.xpose.msra.mxu0 0.0
      %1478 = vmatprep.subr.mxu0 0.0
      %1479 = vmatpush1.xpose.msra.mxu0 0.0
      %1480 = vmatprep.subr.mxu0 0.0
      %1481 = vmatpush1.xpose.msra.mxu0 0.0
      %1482 = vmatprep.subr.mxu0 0.0
      %1483 = vmatpush1.xpose.msra.mxu0 0.0
      %1484 = vmatprep.subr.mxu0 0.0
      %1485 = vmatpush1.xpose.msra.mxu0 0.0
      %1486 = vmatprep.subr.mxu0 0.0
      %1487 = vmatpush1.xpose.msra.mxu0 0.0
      %1488 = vmatprep.subr.mxu0 0.0
      %1489 = vmatpush1.xpose.msra.mxu0 0.0
      %1490 = vmatprep.subr.mxu0 0.0
      %1491 = vmatpush1.xpose.msra.mxu0 0.0
      %1492 = vmatprep.subr.mxu0 0.0
      %1493 = vmatpush1.xpose.msra.mxu0 0.0
      %1494 = vmatprep.subr.mxu0 0.0
      %1495 = vmatpush1.xpose.msra.mxu0 0.0
      %1496 = vmatprep.subr.mxu0 0.0
      %1497 = vmatpush1.xpose.msra.mxu0 0.0
      %1498 = vmatprep.subr.mxu0 0.0
      %1499 = vmatpush1.xpose.msra.mxu0 0.0
      %1500 = vmatprep.subr.mxu0 0.0
      %1501 = vmatpush1.xpose.msra.mxu0 0.0
      %1502 = vmatprep.subr.mxu0 0.0
      %1503 = vmatpush1.xpose.msra.mxu0 0.0
      %1504 = vmatprep.subr.mxu0 0.0
      %1505 = vmatpush1.xpose.msra.mxu0 0.0
      %1506 = vmatprep.subr.mxu0 0.0
      %1507 = vmatpush1.xpose.msra.mxu0 0.0
      %1508 = vmatprep.subr.mxu0 0.0
      %1509 = vmatpush1.xpose.msra.mxu0 0.0
      %1510 = vmatprep.subr.mxu0 0.0
      %1511 = vmatpush1.xpose.msra.mxu0 0.0
      %1512 = vmatprep.subr.mxu0 0.0
      %1513 = vmatpush1.xpose.msra.mxu0 0.0
      %1514 = vmatprep.subr.mxu0 0.0
      %1515 = vmatpush1.xpose.msra.mxu0 0.0
      %1516 = vmatprep.subr.mxu0 0.0
      %1517 = vmatpush1.xpose.msra.mxu0 0.0
      %1518 = vmatprep.subr.mxu0 0.0
      %1519 = vmatpush1.xpose.msra.mxu0 0.0
      %1520 = vmatprep.subr.mxu0 0.0
      %1521 = vmatpush1.xpose.msra.mxu0 0.0
      %1522 = vmatprep.subr.mxu0 0.0
      %1523 = vmatpush1.xpose.msra.mxu0 0.0
      %1524 = vmatprep.subr.mxu0 0.0
      %1525 = vmatpush1.xpose.msra.mxu0 0.0
      %1526 = vmatprep.subr.mxu0 0.0
      %1527 = vmatpush1.xpose.msra.mxu0 0.0
      %1528 = vmatprep.subr.mxu0 0.0
      %1529 = vmatpush1.xpose.msra.mxu0 0.0
      %1530 = vmatprep.subr.mxu0 0.0
      %1531 = vmatpush1.xpose.msra.mxu0 0.0
      %1532 = vmatprep.mubr.f32.mxu0 0.0
      %1533 = vmatmul.mubr.f32.gmra.mrb[0].mxu0 %v1464
      %v1534 = vpop.f32.mrb[0].mxu0
      %v1535 = vadd.f32 0.0, %v1534
      %v1536 = vpop.f32.mrb[0].mxu0
      %1537 = vdwg.mxu0
      %v1538 = vsel %vm808, %v1535, -1e+30
      %v1539 = vsel %vm809, %v1538, -inf
      %1540 = vmax.xlane.f32.xlu0 %v1539
      %v1541 = vpop.xlane.xlu0 %1540
      %v1542 = vsub.f32 %v1538, %v1541
      %v1543 = vmul.f32 %v1542, 1.442695
      %v1544 = vpow.pop %v1543
      %v1545 = vsel %vm809, %v1544, 0.0
      %1546 = vadd.xlane.f32.xlu0 %v1545
      %v1547 = vpop.xlane.xlu0 %1546
      %v1548 = vrcp.pop %v1547
      %v1549 = vmul.f32 %v1544, %v1548
      %v1551 = vsel %vm809, %v1549, 0
      %1553 = vmatprep.subr.mxu0 0.0
      %1554 = vmatpush1.msra.mxu0 %v801
      %1555 = vmatprep.subr.mxu0 0.0
      %1556 = vmatpush1.msra.mxu0 0.0
      %1557 = vmatprep.subr.mxu0 0.0
      %1558 = vmatpush1.msra.mxu0 0.0
      %1559 = vmatprep.subr.mxu0 0.0
      %1560 = vmatpush1.msra.mxu0 0.0
      %1561 = vmatprep.subr.mxu0 0.0
      %1562 = vmatpush1.msra.mxu0 0.0
      %1563 = vmatprep.subr.mxu0 0.0
      %1564 = vmatpush1.msra.mxu0 0.0
      %1565 = vmatprep.subr.mxu0 0.0
      %1566 = vmatpush1.msra.mxu0 0.0
      %1567 = vmatprep.subr.mxu0 0.0
      %1568 = vmatpush1.msra.mxu0 0.0
      %1569 = vmatprep.subr.mxu0 0.0
      %1570 = vmatpush1.msra.mxu0 0.0
      %1571 = vmatprep.subr.mxu0 0.0
      %1572 = vmatpush1.msra.mxu0 0.0
      %1573 = vmatprep.subr.mxu0 0.0
      %1574 = vmatpush1.msra.mxu0 0.0
      %1575 = vmatprep.subr.mxu0 0.0
      %1576 = vmatpush1.msra.mxu0 0.0
      %1577 = vmatprep.subr.mxu0 0.0
      %1578 = vmatpush1.msra.mxu0 0.0
      %1579 = vmatprep.subr.mxu0 0.0
      %1580 = vmatpush1.msra.mxu0 0.0
      %1581 = vmatprep.subr.mxu0 0.0
      %1582 = vmatpush1.msra.mxu0 0.0
      %1583 = vmatprep.subr.mxu0 0.0
      %1584 = vmatpush1.msra.mxu0 0.0
      %1585 = vmatprep.subr.mxu0 0.0
      %1586 = vmatpush1.msra.mxu0 0.0
      %1587 = vmatprep.subr.mxu0 0.0
      %1588 = vmatpush1.msra.mxu0 0.0
      %1589 = vmatprep.subr.mxu0 0.0
      %1590 = vmatpush1.msra.mxu0 0.0
      %1591 = vmatprep.subr.mxu0 0.0
      %1592 = vmatpush1.msra.mxu0 0.0
      %1593 = vmatprep.subr.mxu0 0.0
      %1594 = vmatpush1.msra.mxu0 0.0
      %1595 = vmatprep.subr.mxu0 0.0
      %1596 = vmatpush1.msra.mxu0 0.0
      %1597 = vmatprep.subr.mxu0 0.0
      %1598 = vmatpush1.msra.mxu0 0.0
      %1599 = vmatprep.subr.mxu0 0.0
      %1600 = vmatpush1.msra.mxu0 0.0
      %1601 = vmatprep.subr.mxu0 0.0
      %1602 = vmatpush1.msra.mxu0 0.0
      %1603 = vmatprep.subr.mxu0 0.0
      %1604 = vmatpush1.msra.mxu0 0.0
      %1605 = vmatprep.subr.mxu0 0.0
      %1606 = vmatpush1.msra.mxu0 0.0
      %1607 = vmatprep.subr.mxu0 0.0
      %1608 = vmatpush1.msra.mxu0 0.0
      %1609 = vmatprep.subr.mxu0 0.0
      %1610 = vmatpush1.msra.mxu0 0.0
      %1611 = vmatprep.subr.mxu0 0.0
      %1612 = vmatpush1.msra.mxu0 0.0
      %1613 = vmatprep.subr.mxu0 0.0
      %1614 = vmatpush1.msra.mxu0 0.0
      %1615 = vmatprep.subr.mxu0 0.0
      %1616 = vmatpush1.msra.mxu0 0.0
      %1617 = vmatprep.mubr.f32.mxu0 0.0
      %1618 = vmatmul.mubr.f32.gmra.mrb[0].mxu0 %v1551
      %v1619 = vpop.f32.mrb[0].mxu0
      %v1620 = vadd.f32 0.0, %v1619
      %v1621 = vpop.f32.mrb[0].mxu0
      %1622 = vdwg.mxu0
      %1623 = vrot.lane.b32.xlu0 %v631, 88
      %v1624 = vpop.permute.xlu0 %1623
      %1625 = vrot.lane.b32.xlu0 %v716, 88
      %v1626 = vpop.permute.xlu0 %1625
      %v1627 = vsel %vm809, %v1624, 0
      %v1629 = vsel %vm809, %v1626, 0
      %1631 = vmatprep.subr.mxu0 0.0
      %1632 = vmatpush1.xpose.msra.mxu0 %v1629
      %1633 = vmatprep.subr.mxu0 0.0
      %1634 = vmatpush1.xpose.msra.mxu0 0.0
      %1635 = vmatprep.subr.mxu0 0.0
      %1636 = vmatpush1.xpose.msra.mxu0 0.0
      %1637 = vmatprep.subr.mxu0 0.0
      %1638 = vmatpush1.xpose.msra.mxu0 0.0
      %1639 = vmatprep.subr.mxu0 0.0
      %1640 = vmatpush1.xpose.msra.mxu0 0.0
      %1641 = vmatprep.subr.mxu0 0.0
      %1642 = vmatpush1.xpose.msra.mxu0 0.0
      %1643 = vmatprep.subr.mxu0 0.0
      %1644 = vmatpush1.xpose.msra.mxu0 0.0
      %1645 = vmatprep.subr.mxu0 0.0
      %1646 = vmatpush1.xpose.msra.mxu0 0.0
      %1647 = vmatprep.subr.mxu0 0.0
      %1648 = vmatpush1.xpose.msra.mxu0 0.0
      %1649 = vmatprep.subr.mxu0 0.0
      %1650 = vmatpush1.xpose.msra.mxu0 0.0
      %1651 = vmatprep.subr.mxu0 0.0
      %1652 = vmatpush1.xpose.msra.mxu0 0.0
      %1653 = vmatprep.subr.mxu0 0.0
      %1654 = vmatpush1.xpose.msra.mxu0 0.0
      %1655 = vmatprep.subr.mxu0 0.0
      %1656 = vmatpush1.xpose.msra.mxu0 0.0
      %1657 = vmatprep.subr.mxu0 0.0
      %1658 = vmatpush1.xpose.msra.mxu0 0.0
      %1659 = vmatprep.subr.mxu0 0.0
      %1660 = vmatpush1.xpose.msra.mxu0 0.0
      %1661 = vmatprep.subr.mxu0 0.0
      %1662 = vmatpush1.xpose.msra.mxu0 0.0
      %1663 = vmatprep.subr.mxu0 0.0
      %1664 = vmatpush1.xpose.msra.mxu0 0.0
      %1665 = vmatprep.subr.mxu0 0.0
      %1666 = vmatpush1.xpose.msra.mxu0 0.0
      %1667 = vmatprep.subr.mxu0 0.0
      %1668 = vmatpush1.xpose.msra.mxu0 0.0
      %1669 = vmatprep.subr.mxu0 0.0
      %1670 = vmatpush1.xpose.msra.mxu0 0.0
      %1671 = vmatprep.subr.mxu0 0.0
      %1672 = vmatpush1.xpose.msra.mxu0 0.0
      %1673 = vmatprep.subr.mxu0 0.0
      %1674 = vmatpush1.xpose.msra.mxu0 0.0
      %1675 = vmatprep.subr.mxu0 0.0
      %1676 = vmatpush1.xpose.msra.mxu0 0.0
      %1677 = vmatprep.subr.mxu0 0.0
      %1678 = vmatpush1.xpose.msra.mxu0 0.0
      %1679 = vmatprep.subr.mxu0 0.0
      %1680 = vmatpush1.xpose.msra.mxu0 0.0
      %1681 = vmatprep.subr.mxu0 0.0
      %1682 = vmatpush1.xpose.msra.mxu0 0.0
      %1683 = vmatprep.subr.mxu0 0.0
      %1684 = vmatpush1.xpose.msra.mxu0 0.0
      %1685 = vmatprep.subr.mxu0 0.0
      %1686 = vmatpush1.xpose.msra.mxu0 0.0
      %1687 = vmatprep.subr.mxu0 0.0
      %1688 = vmatpush1.xpose.msra.mxu0 0.0
      %1689 = vmatprep.subr.mxu0 0.0
      %1690 = vmatpush1.xpose.msra.mxu0 0.0
      %1691 = vmatprep.subr.mxu0 0.0
      %1692 = vmatpush1.xpose.msra.mxu0 0.0
      %1693 = vmatprep.subr.mxu0 0.0
      %1694 = vmatpush1.xpose.msra.mxu0 0.0
      %1695 = vmatprep.mubr.f32.mxu0 0.0
      %1696 = vmatmul.mubr.f32.gmra.mrb[0].mxu0 %v1627
      %v1697 = vpop.f32.mrb[0].mxu0
      %v1698 = vadd.f32 0.0, %v1697
      %v1699 = vpop.f32.mrb[0].mxu0
      %1700 = vdwg.mxu0
      %v1701 = vsel %vm808, %v1698, -1e+30
      %v1702 = vsel %vm809, %v1701, -inf
      %1703 = vmax.xlane.f32.xlu0 %v1702
      %v1704 = vpop.xlane.xlu0 %1703
      %v1705 = vsub.f32 %v1701, %v1704
      %v1706 = vmul.f32 %v1705, 1.442695
      %v1707 = vpow.pop %v1706
      %v1708 = vsel %vm809, %v1707, 0.0
      %1709 = vadd.xlane.f32.xlu0 %v1708
      %v1710 = vpop.xlane.xlu0 %1709
      %v1711 = vrcp.pop %v1710
      %v1712 = vmul.f32 %v1707, %v1711
      %v1714 = vsel %vm809, %v1712, 0
      %1716 = vmatprep.subr.mxu0 0.0
      %1717 = vmatpush1.msra.mxu0 %v801
      %1718 = vmatprep.subr.mxu0 0.0
      %1719 = vmatpush1.msra.mxu0 0.0
      %1720 = vmatprep.subr.mxu0 0.0
      %1721 = vmatpush1.msra.mxu0 0.0
      %1722 = vmatprep.subr.mxu0 0.0
      %1723 = vmatpush1.msra.mxu0 0.0
      %1724 = vmatprep.subr.mxu0 0.0
      %1725 = vmatpush1.msra.mxu0 0.0
      %1726 = vmatprep.subr.mxu0 0.0
      %1727 = vmatpush1.msra.mxu0 0.0
      %1728 = vmatprep.subr.mxu0 0.0
      %1729 = vmatpush1.msra.mxu0 0.0
      %1730 = vmatprep.subr.mxu0 0.0
      %1731 = vmatpush1.msra.mxu0 0.0
      %1732 = vmatprep.subr.mxu0 0.0
      %1733 = vmatpush1.msra.mxu0 0.0
      %1734 = vmatprep.subr.mxu0 0.0
      %1735 = vmatpush1.msra.mxu0 0.0
      %1736 = vmatprep.subr.mxu0 0.0
      %1737 = vmatpush1.msra.mxu0 0.0
      %1738 = vmatprep.subr.mxu0 0.0
      %1739 = vmatpush1.msra.mxu0 0.0
      %1740 = vmatprep.subr.mxu0 0.0
      %1741 = vmatpush1.msra.mxu0 0.0
      %1742 = vmatprep.subr.mxu0 0.0
      %1743 = vmatpush1.msra.mxu0 0.0
      %1744 = vmatprep.subr.mxu0 0.0
      %1745 = vmatpush1.msra.mxu0 0.0
      %1746 = vmatprep.subr.mxu0 0.0
      %1747 = vmatpush1.msra.mxu0 0.0
      %1748 = vmatprep.subr.mxu0 0.0
      %1749 = vmatpush1.msra.mxu0 0.0
      %1750 = vmatprep.subr.mxu0 0.0
      %1751 = vmatpush1.msra.mxu0 0.0
      %1752 = vmatprep.subr.mxu0 0.0
      %1753 = vmatpush1.msra.mxu0 0.0
      %1754 = vmatprep.subr.mxu0 0.0
      %1755 = vmatpush1.msra.mxu0 0.0
      %1756 = vmatprep.subr.mxu0 0.0
      %1757 = vmatpush1.msra.mxu0 0.0
      %1758 = vmatprep.subr.mxu0 0.0
      %1759 = vmatpush1.msra.mxu0 0.0
      %1760 = vmatprep.subr.mxu0 0.0
      %1761 = vmatpush1.msra.mxu0 0.0
      %1762 = vmatprep.subr.mxu0 0.0
      %1763 = vmatpush1.msra.mxu0 0.0
      %1764 = vmatprep.subr.mxu0 0.0
      %1765 = vmatpush1.msra.mxu0 0.0
      %1766 = vmatprep.subr.mxu0 0.0
      %1767 = vmatpush1.msra.mxu0 0.0
      %1768 = vmatprep.subr.mxu0 0.0
      %1769 = vmatpush1.msra.mxu0 0.0
      %1770 = vmatprep.subr.mxu0 0.0
      %1771 = vmatpush1.msra.mxu0 0.0
      %1772 = vmatprep.subr.mxu0 0.0
      %1773 = vmatpush1.msra.mxu0 0.0
      %1774 = vmatprep.subr.mxu0 0.0
      %1775 = vmatpush1.msra.mxu0 0.0
      %1776 = vmatprep.subr.mxu0 0.0
      %1777 = vmatpush1.msra.mxu0 0.0
      %1778 = vmatprep.subr.mxu0 0.0
      %1779 = vmatpush1.msra.mxu0 0.0
      %1780 = vmatprep.mubr.f32.mxu0 0.0
      %1781 = vmatmul.mubr.f32.gmra.mrb[0].mxu0 %v1714
      %v1782 = vpop.f32.mrb[0].mxu0
      %v1783 = vadd.f32 0.0, %v1782
      %v1784 = vpop.f32.mrb[0].mxu0
      %1785 = vdwg.mxu0
      %1786 = vrot.lane.b32.xlu0 %v631, 80
      %v1787 = vpop.permute.xlu0 %1786
      %1788 = vrot.lane.b32.xlu0 %v716, 80
      %v1789 = vpop.permute.xlu0 %1788
      %v1790 = vsel %vm809, %v1787, 0
      %v1792 = vsel %vm809, %v1789, 0
      %1794 = vmatprep.subr.mxu0 0.0
      %1795 = vmatpush1.xpose.msra.mxu0 %v1792
      %1796 = vmatprep.subr.mxu0 0.0
      %1797 = vmatpush1.xpose.msra.mxu0 0.0
      %1798 = vmatprep.subr.mxu0 0.0
      %1799 = vmatpush1.xpose.msra.mxu0 0.0
      %1800 = vmatprep.subr.mxu0 0.0
      %1801 = vmatpush1.xpose.msra.mxu0 0.0
      %1802 = vmatprep.subr.mxu0 0.0
      %1803 = vmatpush1.xpose.msra.mxu0 0.0
      %1804 = vmatprep.subr.mxu0 0.0
      %1805 = vmatpush1.xpose.msra.mxu0 0.0
      %1806 = vmatprep.subr.mxu0 0.0
      %1807 = vmatpush1.xpose.msra.mxu0 0.0
      %1808 = vmatprep.subr.mxu0 0.0
      %1809 = vmatpush1.xpose.msra.mxu0 0.0
      %1810 = vmatprep.subr.mxu0 0.0
      %1811 = vmatpush1.xpose.msra.mxu0 0.0
      %1812 = vmatprep.subr.mxu0 0.0
      %1813 = vmatpush1.xpose.msra.mxu0 0.0
      %1814 = vmatprep.subr.mxu0 0.0
      %1815 = vmatpush1.xpose.msra.mxu0 0.0
      %1816 = vmatprep.subr.mxu0 0.0
      %1817 = vmatpush1.xpose.msra.mxu0 0.0
      %1818 = vmatprep.subr.mxu0 0.0
      %1819 = vmatpush1.xpose.msra.mxu0 0.0
      %1820 = vmatprep.subr.mxu0 0.0
      %1821 = vmatpush1.xpose.msra.mxu0 0.0
      %1822 = vmatprep.subr.mxu0 0.0
      %1823 = vmatpush1.xpose.msra.mxu0 0.0
      %1824 = vmatprep.subr.mxu0 0.0
      %1825 = vmatpush1.xpose.msra.mxu0 0.0
      %1826 = vmatprep.subr.mxu0 0.0
      %1827 = vmatpush1.xpose.msra.mxu0 0.0
      %1828 = vmatprep.subr.mxu0 0.0
      %1829 = vmatpush1.xpose.msra.mxu0 0.0
      %1830 = vmatprep.subr.mxu0 0.0
      %1831 = vmatpush1.xpose.msra.mxu0 0.0
      %1832 = vmatprep.subr.mxu0 0.0
      %1833 = vmatpush1.xpose.msra.mxu0 0.0
      %1834 = vmatprep.subr.mxu0 0.0
      %1835 = vmatpush1.xpose.msra.mxu0 0.0
      %1836 = vmatprep.subr.mxu0 0.0
      %1837 = vmatpush1.xpose.msra.mxu0 0.0
      %1838 = vmatprep.subr.mxu0 0.0
      %1839 = vmatpush1.xpose.msra.mxu0 0.0
      %1840 = vmatprep.subr.mxu0 0.0
      %1841 = vmatpush1.xpose.msra.mxu0 0.0
      %1842 = vmatprep.subr.mxu0 0.0
      %1843 = vmatpush1.xpose.msra.mxu0 0.0
      %1844 = vmatprep.subr.mxu0 0.0
      %1845 = vmatpush1.xpose.msra.mxu0 0.0
      %1846 = vmatprep.subr.mxu0 0.0
      %1847 = vmatpush1.xpose.msra.mxu0 0.0
      %1848 = vmatprep.subr.mxu0 0.0
      %1849 = vmatpush1.xpose.msra.mxu0 0.0
      %1850 = vmatprep.subr.mxu0 0.0
      %1851 = vmatpush1.xpose.msra.mxu0 0.0
      %1852 = vmatprep.subr.mxu0 0.0
      %1853 = vmatpush1.xpose.msra.mxu0 0.0
      %1854 = vmatprep.subr.mxu0 0.0
      %1855 = vmatpush1.xpose.msra.mxu0 0.0
      %1856 = vmatprep.subr.mxu0 0.0
      %1857 = vmatpush1.xpose.msra.mxu0 0.0
      %1858 = vmatprep.mubr.f32.mxu0 0.0
      %1859 = vmatmul.mubr.f32.gmra.mrb[0].mxu0 %v1790
      %v1860 = vpop.f32.mrb[0].mxu0
      %v1861 = vadd.f32 0.0, %v1860
      %v1862 = vpop.f32.mrb[0].mxu0
      %1863 = vdwg.mxu0
      %v1864 = vsel %vm808, %v1861, -1e+30
      %v1865 = vsel %vm809, %v1864, -inf
      %1866 = vmax.xlane.f32.xlu0 %v1865
      %v1867 = vpop.xlane.xlu0 %1866
      %v1868 = vsub.f32 %v1864, %v1867
      %v1869 = vmul.f32 %v1868, 1.442695
      %v1870 = vpow.pop %v1869
      %v1871 = vsel %vm809, %v1870, 0.0
      %1872 = vadd.xlane.f32.xlu0 %v1871
      %v1873 = vpop.xlane.xlu0 %1872
      %v1874 = vrcp.pop %v1873
      %v1875 = vmul.f32 %v1870, %v1874
      %v1877 = vsel %vm809, %v1875, 0
      %1879 = vmatprep.subr.mxu0 0.0
      %1880 = vmatpush1.msra.mxu0 %v801
      %1881 = vmatprep.subr.mxu0 0.0
      %1882 = vmatpush1.msra.mxu0 0.0
      %1883 = vmatprep.subr.mxu0 0.0
      %1884 = vmatpush1.msra.mxu0 0.0
      %1885 = vmatprep.subr.mxu0 0.0
      %1886 = vmatpush1.msra.mxu0 0.0
      %1887 = vmatprep.subr.mxu0 0.0
      %1888 = vmatpush1.msra.mxu0 0.0
      %1889 = vmatprep.subr.mxu0 0.0
      %1890 = vmatpush1.msra.mxu0 0.0
      %1891 = vmatprep.subr.mxu0 0.0
      %1892 = vmatpush1.msra.mxu0 0.0
      %1893 = vmatprep.subr.mxu0 0.0
      %1894 = vmatpush1.msra.mxu0 0.0
      %1895 = vmatprep.subr.mxu0 0.0
      %1896 = vmatpush1.msra.mxu0 0.0
      %1897 = vmatprep.subr.mxu0 0.0
      %1898 = vmatpush1.msra.mxu0 0.0
      %1899 = vmatprep.subr.mxu0 0.0
      %1900 = vmatpush1.msra.mxu0 0.0
      %1901 = vmatprep.subr.mxu0 0.0
      %1902 = vmatpush1.msra.mxu0 0.0
      %1903 = vmatprep.subr.mxu0 0.0
      %1904 = vmatpush1.msra.mxu0 0.0
      %1905 = vmatprep.subr.mxu0 0.0
      %1906 = vmatpush1.msra.mxu0 0.0
      %1907 = vmatprep.subr.mxu0 0.0
      %1908 = vmatpush1.msra.mxu0 0.0
      %1909 = vmatprep.subr.mxu0 0.0
      %1910 = vmatpush1.msra.mxu0 0.0
      %1911 = vmatprep.subr.mxu0 0.0
      %1912 = vmatpush1.msra.mxu0 0.0
      %1913 = vmatprep.subr.mxu0 0.0
      %1914 = vmatpush1.msra.mxu0 0.0
      %1915 = vmatprep.subr.mxu0 0.0
      %1916 = vmatpush1.msra.mxu0 0.0
      %1917 = vmatprep.subr.mxu0 0.0
      %1918 = vmatpush1.msra.mxu0 0.0
      %1919 = vmatprep.subr.mxu0 0.0
      %1920 = vmatpush1.msra.mxu0 0.0
      %1921 = vmatprep.subr.mxu0 0.0
      %1922 = vmatpush1.msra.mxu0 0.0
      %1923 = vmatprep.subr.mxu0 0.0
      %1924 = vmatpush1.msra.mxu0 0.0
      %1925 = vmatprep.subr.mxu0 0.0
      %1926 = vmatpush1.msra.mxu0 0.0
      %1927 = vmatprep.subr.mxu0 0.0
      %1928 = vmatpush1.msra.mxu0 0.0
      %1929 = vmatprep.subr.mxu0 0.0
      %1930 = vmatpush1.msra.mxu0 0.0
      %1931 = vmatprep.subr.mxu0 0.0
      %1932 = vmatpush1.msra.mxu0 0.0
      %1933 = vmatprep.subr.mxu0 0.0
      %1934 = vmatpush1.msra.mxu0 0.0
      %1935 = vmatprep.subr.mxu0 0.0
      %1936 = vmatpush1.msra.mxu0 0.0
      %1937 = vmatprep.subr.mxu0 0.0
      %1938 = vmatpush1.msra.mxu0 0.0
      %1939 = vmatprep.subr.mxu0 0.0
      %1940 = vmatpush1.msra.mxu0 0.0
      %1941 = vmatprep.subr.mxu0 0.0
      %1942 = vmatpush1.msra.mxu0 0.0
      %1943 = vmatprep.mubr.f32.mxu0 0.0
      %1944 = vmatmul.mubr.f32.gmra.mrb[0].mxu0 %v1877
      %v1945 = vpop.f32.mrb[0].mxu0
      %v1946 = vadd.f32 0.0, %v1945
      %v1947 = vpop.f32.mrb[0].mxu0
      %1948 = vdwg.mxu0
      %1949 = vrot.lane.b32.xlu0 %v631, 72
      %v1950 = vpop.permute.xlu0 %1949
      %1951 = vrot.lane.b32.xlu0 %v716, 72
      %v1952 = vpop.permute.xlu0 %1951
      %v1953 = vsel %vm809, %v1950, 0
      %v1955 = vsel %vm809, %v1952, 0
      %1957 = vmatprep.subr.mxu0 0.0
      %1958 = vmatpush1.xpose.msra.mxu0 %v1955
      %1959 = vmatprep.subr.mxu0 0.0
      %1960 = vmatpush1.xpose.msra.mxu0 0.0
      %1961 = vmatprep.subr.mxu0 0.0
      %1962 = vmatpush1.xpose.msra.mxu0 0.0
      %1963 = vmatprep.subr.mxu0 0.0
      %1964 = vmatpush1.xpose.msra.mxu0 0.0
      %1965 = vmatprep.subr.mxu0 0.0
      %1966 = vmatpush1.xpose.msra.mxu0 0.0
      %1967 = vmatprep.subr.mxu0 0.0
      %1968 = vmatpush1.xpose.msra.mxu0 0.0
      %1969 = vmatprep.subr.mxu0 0.0
      %1970 = vmatpush1.xpose.msra.mxu0 0.0
      %1971 = vmatprep.subr.mxu0 0.0
      %1972 = vmatpush1.xpose.msra.mxu0 0.0
      %1973 = vmatprep.subr.mxu0 0.0
      %1974 = vmatpush1.xpose.msra.mxu0 0.0
      %1975 = vmatprep.subr.mxu0 0.0
      %1976 = vmatpush1.xpose.msra.mxu0 0.0
      %1977 = vmatprep.subr.mxu0 0.0
      %1978 = vmatpush1.xpose.msra.mxu0 0.0
      %1979 = vmatprep.subr.mxu0 0.0
      %1980 = vmatpush1.xpose.msra.mxu0 0.0
      %1981 = vmatprep.subr.mxu0 0.0
      %1982 = vmatpush1.xpose.msra.mxu0 0.0
      %1983 = vmatprep.subr.mxu0 0.0
      %1984 = vmatpush1.xpose.msra.mxu0 0.0
      %1985 = vmatprep.subr.mxu0 0.0
      %1986 = vmatpush1.xpose.msra.mxu0 0.0
      %1987 = vmatprep.subr.mxu0 0.0
      %1988 = vmatpush1.xpose.msra.mxu0 0.0
      %1989 = vmatprep.subr.mxu0 0.0
      %1990 = vmatpush1.xpose.msra.mxu0 0.0
      %1991 = vmatprep.subr.mxu0 0.0
      %1992 = vmatpush1.xpose.msra.mxu0 0.0
      %1993 = vmatprep.subr.mxu0 0.0
      %1994 = vmatpush1.xpose.msra.mxu0 0.0
      %1995 = vmatprep.subr.mxu0 0.0
      %1996 = vmatpush1.xpose.msra.mxu0 0.0
      %1997 = vmatprep.subr.mxu0 0.0
      %1998 = vmatpush1.xpose.msra.mxu0 0.0
      %1999 = vmatprep.subr.mxu0 0.0
      %2000 = vmatpush1.xpose.msra.mxu0 0.0
      %2001 = vmatprep.subr.mxu0 0.0
      %2002 = vmatpush1.xpose.msra.mxu0 0.0
      %2003 = vmatprep.subr.mxu0 0.0
      %2004 = vmatpush1.xpose.msra.mxu0 0.0
      %2005 = vmatprep.subr.mxu0 0.0
      %2006 = vmatpush1.xpose.msra.mxu0 0.0
      %2007 = vmatprep.subr.mxu0 0.0
      %2008 = vmatpush1.xpose.msra.mxu0 0.0
      %2009 = vmatprep.subr.mxu0 0.0
      %2010 = vmatpush1.xpose.msra.mxu0 0.0
      %2011 = vmatprep.subr.mxu0 0.0
      %2012 = vmatpush1.xpose.msra.mxu0 0.0
      %2013 = vmatprep.subr.mxu0 0.0
      %2014 = vmatpush1.xpose.msra.mxu0 0.0
      %2015 = vmatprep.subr.mxu0 0.0
      %2016 = vmatpush1.xpose.msra.mxu0 0.0
      %2017 = vmatprep.subr.mxu0 0.0
      %2018 = vmatpush1.xpose.msra.mxu0 0.0
      %2019 = vmatprep.subr.mxu0 0.0
      %2020 = vmatpush1.xpose.msra.mxu0 0.0
      %2021 = vmatprep.mubr.f32.mxu0 0.0
      %2022 = vmatmul.mubr.f32.gmra.mrb[0].mxu0 %v1953
      %v2023 = vpop.f32.mrb[0].mxu0
      %v2024 = vadd.f32 0.0, %v2023
      %v2025 = vpop.f32.mrb[0].mxu0
      %2026 = vdwg.mxu0
      %v2027 = vsel %vm808, %v2024, -1e+30
      %v2028 = vsel %vm809, %v2027, -inf
      %2029 = vmax.xlane.f32.xlu0 %v2028
      %v2030 = vpop.xlane.xlu0 %2029
      %v2031 = vsub.f32 %v2027, %v2030
      %v2032 = vmul.f32 %v2031, 1.442695
      %v2033 = vpow.pop %v2032
      %v2034 = vsel %vm809, %v2033, 0.0
      %2035 = vadd.xlane.f32.xlu0 %v2034
      %v2036 = vpop.xlane.xlu0 %2035
      %v2037 = vrcp.pop %v2036
      %v2038 = vmul.f32 %v2033, %v2037
      %v2040 = vsel %vm809, %v2038, 0
      %2042 = vmatprep.subr.mxu0 0.0
      %2043 = vmatpush1.msra.mxu0 %v801
      %2044 = vmatprep.subr.mxu0 0.0
      %2045 = vmatpush1.msra.mxu0 0.0
      %2046 = vmatprep.subr.mxu0 0.0
      %2047 = vmatpush1.msra.mxu0 0.0
      %2048 = vmatprep.subr.mxu0 0.0
      %2049 = vmatpush1.msra.mxu0 0.0
      %2050 = vmatprep.subr.mxu0 0.0
      %2051 = vmatpush1.msra.mxu0 0.0
      %2052 = vmatprep.subr.mxu0 0.0
      %2053 = vmatpush1.msra.mxu0 0.0
      %2054 = vmatprep.subr.mxu0 0.0
      %2055 = vmatpush1.msra.mxu0 0.0
      %2056 = vmatprep.subr.mxu0 0.0
      %2057 = vmatpush1.msra.mxu0 0.0
      %2058 = vmatprep.subr.mxu0 0.0
      %2059 = vmatpush1.msra.mxu0 0.0
      %2060 = vmatprep.subr.mxu0 0.0
      %2061 = vmatpush1.msra.mxu0 0.0
      %2062 = vmatprep.subr.mxu0 0.0
      %2063 = vmatpush1.msra.mxu0 0.0
      %2064 = vmatprep.subr.mxu0 0.0
      %2065 = vmatpush1.msra.mxu0 0.0
      %2066 = vmatprep.subr.mxu0 0.0
      %2067 = vmatpush1.msra.mxu0 0.0
      %2068 = vmatprep.subr.mxu0 0.0
      %2069 = vmatpush1.msra.mxu0 0.0
      %2070 = vmatprep.subr.mxu0 0.0
      %2071 = vmatpush1.msra.mxu0 0.0
      %2072 = vmatprep.subr.mxu0 0.0
      %2073 = vmatpush1.msra.mxu0 0.0
      %2074 = vmatprep.subr.mxu0 0.0
      %2075 = vmatpush1.msra.mxu0 0.0
      %2076 = vmatprep.subr.mxu0 0.0
      %2077 = vmatpush1.msra.mxu0 0.0
      %2078 = vmatprep.subr.mxu0 0.0
      %2079 = vmatpush1.msra.mxu0 0.0
      %2080 = vmatprep.subr.mxu0 0.0
      %2081 = vmatpush1.msra.mxu0 0.0
      %2082 = vmatprep.subr.mxu0 0.0
      %2083 = vmatpush1.msra.mxu0 0.0
      %2084 = vmatprep.subr.mxu0 0.0
      %2085 = vmatpush1.msra.mxu0 0.0
      %2086 = vmatprep.subr.mxu0 0.0
      %2087 = vmatpush1.msra.mxu0 0.0
      %2088 = vmatprep.subr.mxu0 0.0
      %2089 = vmatpush1.msra.mxu0 0.0
      %2090 = vmatprep.subr.mxu0 0.0
      %2091 = vmatpush1.msra.mxu0 0.0
      %2092 = vmatprep.subr.mxu0 0.0
      %2093 = vmatpush1.msra.mxu0 0.0
      %2094 = vmatprep.subr.mxu0 0.0
      %2095 = vmatpush1.msra.mxu0 0.0
      %2096 = vmatprep.subr.mxu0 0.0
      %2097 = vmatpush1.msra.mxu0 0.0
      %2098 = vmatprep.subr.mxu0 0.0
      %2099 = vmatpush1.msra.mxu0 0.0
      %2100 = vmatprep.subr.mxu0 0.0
      %2101 = vmatpush1.msra.mxu0 0.0
      %2102 = vmatprep.subr.mxu0 0.0
      %2103 = vmatpush1.msra.mxu0 0.0
      %2104 = vmatprep.subr.mxu0 0.0
      %2105 = vmatpush1.msra.mxu0 0.0
      %2106 = vmatprep.mubr.f32.mxu0 0.0
      %2107 = vmatmul.mubr.f32.gmra.mrb[0].mxu0 %v2040
      %v2108 = vpop.f32.mrb[0].mxu0
      %v2109 = vadd.f32 0.0, %v2108
      %v2110 = vpop.f32.mrb[0].mxu0
      %2111 = vdwg.mxu0
      %2113 = vrot.lane.b32.xlu0 %v1131, 64
      %v2114 = vpop.permute.xlu0 %2113
      %2117 = vrot.lane.b32.xlu0 %v1457, 64
      %v2118 = vpop.permute.xlu0 %2117
      %2121 = vrot.lane.b32.xlu0 %v1783, 64
      %v2122 = vpop.permute.xlu0 %2121
      %2125 = vrot.lane.b32.xlu0 %v2109, 64
      %v2126 = vpop.permute.xlu0 %2125
      %v2128 = vsel %vm560, %v968, %v2114
      %v2129 = vsel %vm560, %v1294, %v2118
      %v2130 = vsel %vm560, %v1620, %v2122
      %v2131 = vsel %vm560, %v1946, %v2126
      %v2132 = vld [vmem:[%s7] sm:$0xff]
      %v2133 = vld [vmem:[%s7 + $0x8] sm:$0xff]
      %v2134 = vld [vmem:[%s7 + $0x10] sm:$0xff]
      %v2135 = vld [vmem:[%s7 + $0x18] sm:$0xff]
      %v2136 = vld [vmem:[%s7 + $0x20] sm:$0xff]
      %v2137 = vld [vmem:[%s7 + $0x28] sm:$0xff]
      %v2138 = vld [vmem:[%s7 + $0x30] sm:$0xff]
      %v2139 = vld [vmem:[%s7 + $0x38] sm:$0xff]
      %v2140 = vld [vmem:[%s7 + $0x40] sm:$0xff]
      %v2141 = vld [vmem:[%s7 + $0x48] sm:$0xff]
      %v2142 = vld [vmem:[%s7 + $0x50] sm:$0xff]
      %v2143 = vld [vmem:[%s7 + $0x58] sm:$0xff]
      %v2144 = vld [vmem:[%s7 + $0x60] sm:$0xff]
      %v2145 = vld [vmem:[%s7 + $0x68] sm:$0xff]
      %v2146 = vld [vmem:[%s7 + $0x70] sm:$0xff]
      %v2147 = vld [vmem:[%s7 + $0x78] sm:$0xff]
      %v2148 = vld [vmem:[%s7 + $0x80] sm:$0xff]
      %v2149 = vld [vmem:[%s7 + $0x88] sm:$0xff]
      %v2150 = vld [vmem:[%s7 + $0x90] sm:$0xff]
      %v2151 = vld [vmem:[%s7 + $0x98] sm:$0xff]
      %v2152 = vld [vmem:[%s7 + $0xa0] sm:$0xff]
      %v2153 = vld [vmem:[%s7 + $0xa8] sm:$0xff]
      %v2154 = vld [vmem:[%s7 + $0xb0] sm:$0xff]
      %v2155 = vld [vmem:[%s7 + $0xb8] sm:$0xff]
      %v2156 = vld [vmem:[%s7 + $0xc0] sm:$0xff]
      %v2157 = vld [vmem:[%s7 + $0xc8] sm:$0xff]
      %v2158 = vld [vmem:[%s7 + $0xd0] sm:$0xff]
      %v2159 = vld [vmem:[%s7 + $0xd8] sm:$0xff]
      %v2160 = vld [vmem:[%s7 + $0xe0] sm:$0xff]
      %v2161 = vld [vmem:[%s7 + $0xe8] sm:$0xff]
      %v2162 = vld [vmem:[%s7 + $0xf0] sm:$0xff]
      %v2163 = vld [vmem:[%s7 + $0xf8] sm:$0xff]
      %v2164 = vld [vmem:[%s7 + $0x100] sm:$0xff]
      %v2165 = vld [vmem:[%s7 + $0x108] sm:$0xff]
      %v2166 = vld [vmem:[%s7 + $0x110] sm:$0xff]
      %v2167 = vld [vmem:[%s7 + $0x118] sm:$0xff]
      %v2168 = vld [vmem:[%s7 + $0x120] sm:$0xff]
      %v2169 = vld [vmem:[%s7 + $0x128] sm:$0xff]
      %v2170 = vld [vmem:[%s7 + $0x130] sm:$0xff]
      %v2171 = vld [vmem:[%s7 + $0x138] sm:$0xff]
      %v2172 = vld [vmem:[%s7 + $0x140] sm:$0xff]
      %v2173 = vld [vmem:[%s7 + $0x148] sm:$0xff]
      %v2174 = vld [vmem:[%s7 + $0x150] sm:$0xff]
      %v2175 = vld [vmem:[%s7 + $0x158] sm:$0xff]
      %v2176 = vld [vmem:[%s7 + $0x160] sm:$0xff]
      %v2177 = vld [vmem:[%s7 + $0x168] sm:$0xff]
      %v2178 = vld [vmem:[%s7 + $0x170] sm:$0xff]
      %v2179 = vld [vmem:[%s7 + $0x178] sm:$0xff]
      %v2180 = vld [vmem:[%s7 + $0x180] sm:$0xff]
      %v2181 = vld [vmem:[%s7 + $0x188] sm:$0xff]
      %v2182 = vld [vmem:[%s7 + $0x190] sm:$0xff]
      %v2183 = vld [vmem:[%s7 + $0x198] sm:$0xff]
      %v2184 = vld [vmem:[%s7 + $0x1a0] sm:$0xff]
      %v2185 = vld [vmem:[%s7 + $0x1a8] sm:$0xff]
      %v2186 = vld [vmem:[%s7 + $0x1b0] sm:$0xff]
      %v2187 = vld [vmem:[%s7 + $0x1b8] sm:$0xff]
      %v2188 = vld [vmem:[%s7 + $0x1c0] sm:$0xff]
      %v2189 = vld [vmem:[%s7 + $0x1c8] sm:$0xff]
      %v2190 = vld [vmem:[%s7 + $0x1d0] sm:$0xff]
      %v2191 = vld [vmem:[%s7 + $0x1d8] sm:$0xff]
      %v2192 = vld [vmem:[%s7 + $0x1e0] sm:$0xff]
      %v2193 = vld [vmem:[%s7 + $0x1e8] sm:$0xff]
      %v2194 = vld [vmem:[%s7 + $0x1f0] sm:$0xff]
      %v2195 = vld [vmem:[%s7 + $0x1f8] sm:$0xff]
      %v2196 = vld [vmem:[%s8] sm:$0x1]
      %v2198 = vlaneseq
      %v2199 = vshrl.u32 %v2198, 7
      %v2200 = vsub.s32 0, %v2199
      %v2201 = vrot.slane %v2196, %v2200
      %2203 = vmatprep.subr.mxu0 0.0
      %2204 = vmatpush1.msra.mxu0 %v2132
      %2205 = vmatprep.subr.mxu0 0.0
      %2206 = vmatpush1.msra.mxu0 %v2133
      %2207 = vmatprep.subr.mxu0 0.0
      %2208 = vmatpush1.msra.mxu0 %v2134
      %2209 = vmatprep.subr.mxu0 0.0
      %2210 = vmatpush1.msra.mxu0 %v2135
      %2211 = vmatprep.subr.mxu0 0.0
      %2212 = vmatpush1.msra.mxu0 %v2136
      %2213 = vmatprep.subr.mxu0 0.0
      %2214 = vmatpush1.msra.mxu0 %v2137
      %2215 = vmatprep.subr.mxu0 0.0
      %2216 = vmatpush1.msra.mxu0 %v2138
      %2217 = vmatprep.subr.mxu0 0.0
      %2218 = vmatpush1.msra.mxu0 %v2139
      %2219 = vmatprep.subr.mxu0 0.0
      %2220 = vmatpush1.msra.mxu0 %v2140
      %2221 = vmatprep.subr.mxu0 0.0
      %2222 = vmatpush1.msra.mxu0 %v2141
      %2223 = vmatprep.subr.mxu0 0.0
      %2224 = vmatpush1.msra.mxu0 %v2142
      %2225 = vmatprep.subr.mxu0 0.0
      %2226 = vmatpush1.msra.mxu0 %v2143
      %2227 = vmatprep.subr.mxu0 0.0
      %2228 = vmatpush1.msra.mxu0 %v2144
      %2229 = vmatprep.subr.mxu0 0.0
      %2230 = vmatpush1.msra.mxu0 %v2145
      %2231 = vmatprep.subr.mxu0 0.0
      %2232 = vmatpush1.msra.mxu0 %v2146
      %2233 = vmatprep.subr.mxu0 0.0
      %2234 = vmatpush1.msra.mxu0 %v2147
      %2235 = vmatprep.subr.mxu0 0.0
      %2236 = vmatpush1.msra.mxu0 %v2148
      %2237 = vmatprep.subr.mxu0 0.0
      %2238 = vmatpush1.msra.mxu0 %v2149
      %2239 = vmatprep.subr.mxu0 0.0
      %2240 = vmatpush1.msra.mxu0 %v2150
      %2241 = vmatprep.subr.mxu0 0.0
      %2242 = vmatpush1.msra.mxu0 %v2151
      %2243 = vmatprep.subr.mxu0 0.0
      %2244 = vmatpush1.msra.mxu0 %v2152
      %2245 = vmatprep.subr.mxu0 0.0
      %2246 = vmatpush1.msra.mxu0 %v2153
      %2247 = vmatprep.subr.mxu0 0.0
      %2248 = vmatpush1.msra.mxu0 %v2154
      %2249 = vmatprep.subr.mxu0 0.0
      %2250 = vmatpush1.msra.mxu0 %v2155
      %2251 = vmatprep.subr.mxu0 0.0
      %2252 = vmatpush1.msra.mxu0 %v2156
      %2253 = vmatprep.subr.mxu0 0.0
      %2254 = vmatpush1.msra.mxu0 %v2157
      %2255 = vmatprep.subr.mxu0 0.0
      %2256 = vmatpush1.msra.mxu0 %v2158
      %2257 = vmatprep.subr.mxu0 0.0
      %2258 = vmatpush1.msra.mxu0 %v2159
      %2259 = vmatprep.subr.mxu0 0.0
      %2260 = vmatpush1.msra.mxu0 %v2160
      %2261 = vmatprep.subr.mxu0 0.0
      %2262 = vmatpush1.msra.mxu0 %v2161
      %2263 = vmatprep.subr.mxu0 0.0
      %2264 = vmatpush1.msra.mxu0 %v2162
      %2265 = vmatprep.subr.mxu0 0.0
      %2266 = vmatpush1.msra.mxu0 %v2163
      %2267 = vmatprep.mubr.f32.mxu0 %v2129
      %2268 = vmatmul.mubr.f32.gmra.mrb[0].mxu0 %v2128
      %v2269 = vpop.f32.mrb[0].mxu0
      %v2270 = vadd.f32 %v2201, %v2269
      %v2271 = vpop.f32.mrb[0].mxu0
      %2272 = vdwg.mxu0
      %2273 = vmatprep.subr.mxu0 0.0
      %2274 = vmatpush1.msra.mxu0 %v2164
      %2275 = vmatprep.subr.mxu0 0.0
      %2276 = vmatpush1.msra.mxu0 %v2165
      %2277 = vmatprep.subr.mxu0 0.0
      %2278 = vmatpush1.msra.mxu0 %v2166
      %2279 = vmatprep.subr.mxu0 0.0
      %2280 = vmatpush1.msra.mxu0 %v2167
      %2281 = vmatprep.subr.mxu0 0.0
      %2282 = vmatpush1.msra.mxu0 %v2168
      %2283 = vmatprep.subr.mxu0 0.0
      %2284 = vmatpush1.msra.mxu0 %v2169
      %2285 = vmatprep.subr.mxu0 0.0
      %2286 = vmatpush1.msra.mxu0 %v2170
      %2287 = vmatprep.subr.mxu0 0.0
      %2288 = vmatpush1.msra.mxu0 %v2171
      %2289 = vmatprep.subr.mxu0 0.0
      %2290 = vmatpush1.msra.mxu0 %v2172
      %2291 = vmatprep.subr.mxu0 0.0
      %2292 = vmatpush1.msra.mxu0 %v2173
      %2293 = vmatprep.subr.mxu0 0.0
      %2294 = vmatpush1.msra.mxu0 %v2174
      %2295 = vmatprep.subr.mxu0 0.0
      %2296 = vmatpush1.msra.mxu0 %v2175
      %2297 = vmatprep.subr.mxu0 0.0
      %2298 = vmatpush1.msra.mxu0 %v2176
      %2299 = vmatprep.subr.mxu0 0.0
      %2300 = vmatpush1.msra.mxu0 %v2177
      %2301 = vmatprep.subr.mxu0 0.0
      %2302 = vmatpush1.msra.mxu0 %v2178
      %2303 = vmatprep.subr.mxu0 0.0
      %2304 = vmatpush1.msra.mxu0 %v2179
      %2305 = vmatprep.subr.mxu0 0.0
      %2306 = vmatpush1.msra.mxu0 %v2180
      %2307 = vmatprep.subr.mxu0 0.0
      %2308 = vmatpush1.msra.mxu0 %v2181
      %2309 = vmatprep.subr.mxu0 0.0
      %2310 = vmatpush1.msra.mxu0 %v2182
      %2311 = vmatprep.subr.mxu0 0.0
      %2312 = vmatpush1.msra.mxu0 %v2183
      %2313 = vmatprep.subr.mxu0 0.0
      %2314 = vmatpush1.msra.mxu0 %v2184
      %2315 = vmatprep.subr.mxu0 0.0
      %2316 = vmatpush1.msra.mxu0 %v2185
      %2317 = vmatprep.subr.mxu0 0.0
      %2318 = vmatpush1.msra.mxu0 %v2186
      %2319 = vmatprep.subr.mxu0 0.0
      %2320 = vmatpush1.msra.mxu0 %v2187
      %2321 = vmatprep.subr.mxu0 0.0
      %2322 = vmatpush1.msra.mxu0 %v2188
      %2323 = vmatprep.subr.mxu0 0.0
      %2324 = vmatpush1.msra.mxu0 %v2189
      %2325 = vmatprep.subr.mxu0 0.0
      %2326 = vmatpush1.msra.mxu0 %v2190
      %2327 = vmatprep.subr.mxu0 0.0
      %2328 = vmatpush1.msra.mxu0 %v2191
      %2329 = vmatprep.subr.mxu0 0.0
      %2330 = vmatpush1.msra.mxu0 %v2192
      %2331 = vmatprep.subr.mxu0 0.0
      %2332 = vmatpush1.msra.mxu0 %v2193
      %2333 = vmatprep.subr.mxu0 0.0
      %2334 = vmatpush1.msra.mxu0 %v2194
      %2335 = vmatprep.subr.mxu0 0.0
      %2336 = vmatpush1.msra.mxu0 %v2195
      %2337 = vmatprep.mubr.f32.mxu0 %v2131
      %2338 = vmatmul.mubr.f32.gmra.mrb[0].mxu0 %v2130
      %v2339 = vpop.f32.mrb[0].mxu0
      %v2340 = vadd.f32 %v2270, %v2339
      %v2341 = vpop.f32.mrb[0].mxu0
      %2342 = vdwg.mxu0
      %v2343 = vadd.f32 %v544, %v2340
      %v2344 = vsel %vm560, %v2343, 0.0
      %2345 = vadd.xlane.f32.xlu0 %v2344
      %v2346 = vpop.xlane.xlu0 %2345
      %v2347 = vrcp.pop 64.0
      %v2348 = vmul.f32 %v2346, %v2347
      %v2349 = vsub.f32 %v2343, %v2348
      %v2350 = vmul.f32 %v2349, %v2349
      %v2351 = vsel %vm560, %v2350, 0.0
      %2352 = vadd.xlane.f32.xlu0 %v2351
      %v2353 = vpop.xlane.xlu0 %2352
      %v2354 = vmul.f32 %v2353, %v2347
      %v2355 = vadd.f32 %v2354, 1e-05
      %v2356 = vrsqrt.pop %v2355
      %v2357 = vmul.f32 %v2349, %v2356
      %v2358 = vld [vmem:[%s9] sm:$0x1]
      %v2360 = vlaneseq
      %v2361 = vshrl.u32 %v2360, 7
      %v2362 = vsub.s32 0, %v2361
      %v2363 = vrot.slane %v2358, %v2362
      %v2365 = vmul.f32 %v2357, %v2363
      %v2366 = vld [vmem:[%s10] sm:$0x1]
      %v2368 = vlaneseq
      %v2369 = vshrl.u32 %v2368, 7
      %v2370 = vsub.s32 0, %v2369
      %v2371 = vrot.slane %v2366, %v2370
      %v2373 = vadd.f32 %v2365, %v2371
      %v2374 = vld [vmem:[%s11] sm:$0xff]
      %v2375 = vld [vmem:[%s11 + $0x8] sm:$0xff]
      %v2376 = vld [vmem:[%s11 + $0x10] sm:$0xff]
      %v2377 = vld [vmem:[%s11 + $0x18] sm:$0xff]
      %v2378 = vld [vmem:[%s11 + $0x20] sm:$0xff]
      %v2379 = vld [vmem:[%s11 + $0x28] sm:$0xff]
      %v2380 = vld [vmem:[%s11 + $0x30] sm:$0xff]
      %v2381 = vld [vmem:[%s11 + $0x38] sm:$0xff]
      %v2382 = vld [vmem:[%s11 + $0x40] sm:$0xff]
      %v2383 = vld [vmem:[%s11 + $0x48] sm:$0xff]
      %v2384 = vld [vmem:[%s11 + $0x50] sm:$0xff]
      %v2385 = vld [vmem:[%s11 + $0x58] sm:$0xff]
      %v2386 = vld [vmem:[%s11 + $0x60] sm:$0xff]
      %v2387 = vld [vmem:[%s11 + $0x68] sm:$0xff]
      %v2388 = vld [vmem:[%s11 + $0x70] sm:$0xff]
      %v2389 = vld [vmem:[%s11 + $0x78] sm:$0xff]
      %v2390 = vld [vmem:[%s12] sm:$0x3]
      %v2392 = vlaneseq
      %v2393 = vshrl.u32 %v2392, 7
      %v2394 = vsub.s32 0, %v2393
      %v2395 = vrot.slane %v2390, %v2394
      %v2396 = vlaneseq
      %v2397 = vshrl.u32 %v2396, 7
      %v2398 = vsub.s32 1, %v2397
      %v2399 = vrot.slane %v2390, %v2398
      %v2403 = vsel %vm560, %v2373, 0
      %2405 = vmatprep.subr.mxu0 %v2375
      %2406 = vmatpush1.msra.mxu0 %v2374
      %2407 = vmatprep.subr.mxu0 %v2377
      %2408 = vmatpush1.msra.mxu0 %v2376
      %2409 = vmatprep.subr.mxu0 %v2379
      %2410 = vmatpush1.msra.mxu0 %v2378
      %2411 = vmatprep.subr.mxu0 %v2381
      %2412 = vmatpush1.msra.mxu0 %v2380
      %2413 = vmatprep.subr.mxu0 %v2383
      %2414 = vmatpush1.msra.mxu0 %v2382
      %2415 = vmatprep.subr.mxu0 %v2385
      %2416 = vmatpush1.msra.mxu0 %v2384
      %2417 = vmatprep.subr.mxu0 %v2387
      %2418 = vmatpush1.msra.mxu0 %v2386
      %2419 = vmatprep.subr.mxu0 %v2389
      %2420 = vmatpush1.msra.mxu0 %v2388
      %2421 = vmatprep.subr.mxu0 0.0
      %2422 = vmatpush1.msra.mxu0 0.0
      %2423 = vmatprep.subr.mxu0 0.0
      %2424 = vmatpush1.msra.mxu0 0.0
      %2425 = vmatprep.subr.mxu0 0.0
      %2426 = vmatpush1.msra.mxu0 0.0
      %2427 = vmatprep.subr.mxu0 0.0
      %2428 = vmatpush1.msra.mxu0 0.0
      %2429 = vmatprep.subr.mxu0 0.0
      %2430 = vmatpush1.msra.mxu0 0.0
      %2431 = vmatprep.subr.mxu0 0.0
      %2432 = vmatpush1.msra.mxu0 0.0
      %2433 = vmatprep.subr.mxu0 0.0
      %2434 = vmatpush1.msra.mxu0 0.0
      %2435 = vmatprep.subr.mxu0 0.0
      %2436 = vmatpush1.msra.mxu0 0.0
      %2437 = vmatprep.subr.mxu0 0.0
      %2438 = vmatpush1.msra.mxu0 0.0
      %2439 = vmatprep.subr.mxu0 0.0
      %2440 = vmatpush1.msra.mxu0 0.0
      %2441 = vmatprep.subr.mxu0 0.0
      %2442 = vmatpush1.msra.mxu0 0.0
      %2443 = vmatprep.subr.mxu0 0.0
      %2444 = vmatpush1.msra.mxu0 0.0
      %2445 = vmatprep.subr.mxu0 0.0
      %2446 = vmatpush1.msra.mxu0 0.0
      %2447 = vmatprep.subr.mxu0 0.0
      %2448 = vmatpush1.msra.mxu0 0.0
      %2449 = vmatprep.subr.mxu0 0.0
      %2450 = vmatpush1.msra.mxu0 0.0
      %2451 = vmatprep.subr.mxu0 0.0
      %2452 = vmatpush1.msra.mxu0 0.0
      %2453 = vmatprep.subr.mxu0 0.0
      %2454 = vmatpush1.msra.mxu0 0.0
      %2455 = vmatprep.subr.mxu0 0.0
      %2456 = vmatpush1.msra.mxu0 0.0
      %2457 = vmatprep.subr.mxu0 0.0
      %2458 = vmatpush1.msra.mxu0 0.0
      %2459 = vmatprep.subr.mxu0 0.0
      %2460 = vmatpush1.msra.mxu0 0.0
      %2461 = vmatprep.subr.mxu0 0.0
      %2462 = vmatpush1.msra.mxu0 0.0
      %2463 = vmatprep.subr.mxu0 0.0
      %2464 = vmatpush1.msra.mxu0 0.0
      %2465 = vmatprep.subr.mxu0 0.0
      %2466 = vmatpush1.msra.mxu0 0.0
      %2467 = vmatprep.subr.mxu0 0.0
      %2468 = vmatpush1.msra.mxu0 0.0
      %2469 = vmatprep.mubr.f32.mxu0 0.0
      %2470 = vmatmul.mubr.f32.gmra.mrb[0].mxu0 %v2403
      %v2471 = vpop.f32.mrb[0].mxu0
      %v2472 = vadd.f32 %v2395, %v2471
      %v2473 = vpop.f32.mrb[0].mxu0
      %v2474 = vadd.f32 %v2399, %v2473
      %2475 = vdwg.mxu0
      %v2476 = vmax.f32 %v2472, 0.0
      %v2477 = vmax.f32 %v2474, 0.0
      %v2478 = vld [vmem:[%s13] sm:$0xff]
      %v2479 = vld [vmem:[%s13 + $0x8] sm:$0xff]
      %v2480 = vld [vmem:[%s13 + $0x10] sm:$0xff]
      %v2481 = vld [vmem:[%s13 + $0x18] sm:$0xff]
      %v2482 = vld [vmem:[%s13 + $0x20] sm:$0xff]
      %v2483 = vld [vmem:[%s13 + $0x28] sm:$0xff]
      %v2484 = vld [vmem:[%s13 + $0x30] sm:$0xff]
      %v2485 = vld [vmem:[%s13 + $0x38] sm:$0xff]
      %v2486 = vld [vmem:[%s13 + $0x40] sm:$0xff]
      %v2487 = vld [vmem:[%s13 + $0x48] sm:$0xff]
      %v2488 = vld [vmem:[%s13 + $0x50] sm:$0xff]
      %v2489 = vld [vmem:[%s13 + $0x58] sm:$0xff]
      %v2490 = vld [vmem:[%s13 + $0x60] sm:$0xff]
      %v2491 = vld [vmem:[%s13 + $0x68] sm:$0xff]
      %v2492 = vld [vmem:[%s13 + $0x70] sm:$0xff]
      %v2493 = vld [vmem:[%s13 + $0x78] sm:$0xff]
      %v2494 = vld [vmem:[%s13 + $0x80] sm:$0xff]
      %v2495 = vld [vmem:[%s13 + $0x88] sm:$0xff]
      %v2496 = vld [vmem:[%s13 + $0x90] sm:$0xff]
      %v2497 = vld [vmem:[%s13 + $0x98] sm:$0xff]
      %v2498 = vld [vmem:[%s13 + $0xa0] sm:$0xff]
      %v2499 = vld [vmem:[%s13 + $0xa8] sm:$0xff]
      %v2500 = vld [vmem:[%s13 + $0xb0] sm:$0xff]
      %v2501 = vld [vmem:[%s13 + $0xb8] sm:$0xff]
      %v2502 = vld [vmem:[%s13 + $0xc0] sm:$0xff]
      %v2503 = vld [vmem:[%s13 + $0xc8] sm:$0xff]
      %v2504 = vld [vmem:[%s13 + $0xd0] sm:$0xff]
      %v2505 = vld [vmem:[%s13 + $0xd8] sm:$0xff]
      %v2506 = vld [vmem:[%s13 + $0xe0] sm:$0xff]
      %v2507 = vld [vmem:[%s13 + $0xe8] sm:$0xff]
      %v2508 = vld [vmem:[%s13 + $0xf0] sm:$0xff]
      %v2509 = vld [vmem:[%s13 + $0xf8] sm:$0xff]
      %v2510 = vld [vmem:[%s14] sm:$0x1]
      %v2512 = vlaneseq
      %v2513 = vshrl.u32 %v2512, 7
      %v2514 = vsub.s32 0, %v2513
      %v2515 = vrot.slane %v2510, %v2514
      %2517 = vmatprep.subr.mxu0 0.0
      %2518 = vmatpush1.msra.mxu0 %v2478
      %2519 = vmatprep.subr.mxu0 0.0
      %2520 = vmatpush1.msra.mxu0 %v2479
      %2521 = vmatprep.subr.mxu0 0.0
      %2522 = vmatpush1.msra.mxu0 %v2480
      %2523 = vmatprep.subr.mxu0 0.0
      %2524 = vmatpush1.msra.mxu0 %v2481
      %2525 = vmatprep.subr.mxu0 0.0
      %2526 = vmatpush1.msra.mxu0 %v2482
      %2527 = vmatprep.subr.mxu0 0.0
      %2528 = vmatpush1.msra.mxu0 %v2483
      %2529 = vmatprep.subr.mxu0 0.0
      %2530 = vmatpush1.msra.mxu0 %v2484
      %2531 = vmatprep.subr.mxu0 0.0
      %2532 = vmatpush1.msra.mxu0 %v2485
      %2533 = vmatprep.subr.mxu0 0.0
      %2534 = vmatpush1.msra.mxu0 %v2486
      %2535 = vmatprep.subr.mxu0 0.0
      %2536 = vmatpush1.msra.mxu0 %v2487
      %2537 = vmatprep.subr.mxu0 0.0
      %2538 = vmatpush1.msra.mxu0 %v2488
      %2539 = vmatprep.subr.mxu0 0.0
      %2540 = vmatpush1.msra.mxu0 %v2489
      %2541 = vmatprep.subr.mxu0 0.0
      %2542 = vmatpush1.msra.mxu0 %v2490
      %2543 = vmatprep.subr.mxu0 0.0
      %2544 = vmatpush1.msra.mxu0 %v2491
      %2545 = vmatprep.subr.mxu0 0.0
      %2546 = vmatpush1.msra.mxu0 %v2492
      %2547 = vmatprep.subr.mxu0 0.0
      %2548 = vmatpush1.msra.mxu0 %v2493
      %2549 = vmatprep.subr.mxu0 0.0
      %2550 = vmatpush1.msra.mxu0 %v2494
      %2551 = vmatprep.subr.mxu0 0.0
      %2552 = vmatpush1.msra.mxu0 %v2495
      %2553 = vmatprep.subr.mxu0 0.0
      %2554 = vmatpush1.msra.mxu0 %v2496
      %2555 = vmatprep.subr.mxu0 0.0
      %2556 = vmatpush1.msra.mxu0 %v2497
      %2557 = vmatprep.subr.mxu0 0.0
      %2558 = vmatpush1.msra.mxu0 %v2498
      %2559 = vmatprep.subr.mxu0 0.0
      %2560 = vmatpush1.msra.mxu0 %v2499
      %2561 = vmatprep.subr.mxu0 0.0
      %2562 = vmatpush1.msra.mxu0 %v2500
      %2563 = vmatprep.subr.mxu0 0.0
      %2564 = vmatpush1.msra.mxu0 %v2501
      %2565 = vmatprep.subr.mxu0 0.0
      %2566 = vmatpush1.msra.mxu0 %v2502
      %2567 = vmatprep.subr.mxu0 0.0
      %2568 = vmatpush1.msra.mxu0 %v2503
      %2569 = vmatprep.subr.mxu0 0.0
      %2570 = vmatpush1.msra.mxu0 %v2504
      %2571 = vmatprep.subr.mxu0 0.0
      %2572 = vmatpush1.msra.mxu0 %v2505
      %2573 = vmatprep.subr.mxu0 0.0
      %2574 = vmatpush1.msra.mxu0 %v2506
      %2575 = vmatprep.subr.mxu0 0.0
      %2576 = vmatpush1.msra.mxu0 %v2507
      %2577 = vmatprep.subr.mxu0 0.0
      %2578 = vmatpush1.msra.mxu0 %v2508
      %2579 = vmatprep.subr.mxu0 0.0
      %2580 = vmatpush1.msra.mxu0 %v2509
      %2581 = vmatprep.mubr.f32.mxu0 %v2477
      %2582 = vmatmul.mubr.f32.gmra.mrb[0].mxu0 %v2476
      %v2583 = vpop.f32.mrb[0].mxu0
      %v2584 = vadd.f32 %v2515, %v2583
      %v2585 = vpop.f32.mrb[0].mxu0
      %2586 = vdwg.mxu0
      %v2587 = vadd.f32 %v2373, %v2584
      %v2588 = vsel %vm560, %v2587, 0.0
      %2589 = vadd.xlane.f32.xlu0 %v2588
      %v2590 = vpop.xlane.xlu0 %2589
      %v2591 = vmul.f32 %v2590, %v2347
      %v2592 = vsub.f32 %v2587, %v2591
      %v2593 = vmul.f32 %v2592, %v2592
      %v2594 = vsel %vm560, %v2593, 0.0
      %2595 = vadd.xlane.f32.xlu0 %v2594
      %v2596 = vpop.xlane.xlu0 %2595
      %v2597 = vmul.f32 %v2596, %v2347
      %v2598 = vadd.f32 %v2597, 1e-05
      %v2599 = vrsqrt.pop %v2598
      %v2600 = vmul.f32 %v2592, %v2599
      %v2601 = vld [vmem:[%s15] sm:$0x1]
      %v2603 = vlaneseq
      %v2604 = vshrl.u32 %v2603, 7
      %v2605 = vsub.s32 0, %v2604
      %v2606 = vrot.slane %v2601, %v2605
      %v2608 = vmul.f32 %v2600, %v2606
      %v2609 = vld [vmem:[%s16] sm:$0x1]
      %v2611 = vlaneseq
      %v2612 = vshrl.u32 %v2611, 7
      %v2613 = vsub.s32 0, %v2612
      %v2614 = vrot.slane %v2609, %v2613
      %v2616 = vadd.f32 %v2608, %v2614
      %2617 = vst.msk [vmem:[%s543] sm:$0xff] %vm560, %v2616
      %p2618 = scmp.lt.s32.totalorder %s28, 1
      %s2619 = scalar_select %p2618, %s28, 1
      %s2620 = smul.addr %s2619, 8
      %s2621 = scalar_lea.vmem %s17, %s2620
      // Predicated region
      $region89: #{gpt_forward.5} parent=87 // pred_check
        %p2622 = pneg %p408
      $region90: #{gpt_forward.5} parent=87 // pred_check_branch
        %2624 = sbr.rel (%p2622) target = $region92
      $region91: #{gpt_forward.5} parent=87 // pred_region
        _
      $region92: #{gpt_forward.5} parent=87 // pred_fallthru
        _
    $region88: #{gpt_forward.5} parent=5 // pred_fallthru
      _
    %p2625 = scmp.le.s32.totalorder 2, %s23
    // Predicated region
    $region93: #{gpt_forward.5} parent=5 // pred_check
      %p2626 = pneg %p2625
    $region94: #{gpt_forward.5} parent=5 // pred_check_branch
      %2628 = sbr.rel (%p2626) target = $region96
    $region95: #{gpt_forward.5} parent=5 // pred_region
      %s2629 = ssub.s32 %s23, 2
      // Predicated region
      $region97: #{gpt_forward.5} parent=95 // pred_check
        %p2630 = pneg %p414
      $region98: #{gpt_forward.5} parent=95 // pred_check_branch
        %2632 = sbr.rel (%p2630) target = $region100
      $region99: #{gpt_forward.5} parent=95 // pred_region
        %p2633 = scmp.lt.s32.totalorder %s29, 1
        %s2634 = scalar_select %p2633, %s29, 1
        %s2635 = smul.addr %s2634, 8
        %s2636 = scalar_lea.vmem %s17, %s2635
      $region100: #{gpt_forward.5} parent=95 // pred_fallthru
        _
    $region96: #{gpt_forward.5} parent=5 // pred_fallthru
      _
  $region6: #{gpt_forward.5} parent=0 // loop_footer
    %s27 = sadd.s32 1, %s23
  $region7: #{gpt_forward.5} parent=0 // loop_footer_branch
    %22 = sbr.rel target = $region3
  $region8: #{gpt_forward.5} parent=0 // loop_exit
    _

</llo_original>
